<compile_context>
chip_gen: v7x
topology: tpu7x:2x2x1
jax: 0.10.0
libtpu: 0.0.40
codegen_flags: <defaults>
</compile_context>

<pallas_src>
import jax
import jax.numpy as jnp
from jax import lax
from jax.experimental import pallas as pl
from jax.experimental.pallas import tpu as pltpu

_LANE = 128
_SUB = 8


def _round_up(n, m):
    return ((n + m - 1) // m) * m


# --------------------------- fused whole-network kernel -------------------- #

def _make_han_network(node_types, edge_types, offsets, pads, counts,
                      n_tot_pad, feat_pad, h_pad, a_cols, num_layers):
    E = len(edge_types)
    T = len(node_types)
    L = num_layers
    dp_max = max(pads[nt] for nt in node_types)
    dst_edges = {nt: [e for e, et in enumerate(edge_types) if et[2] == nt]
                 for nt in node_types}

    def kernel(*refs):
        x_ref, w_ref, b_ref, a_ref = refs[0:4]
        adj_refs = refs[4:4 + E]
        kw_ref, kb_ref, q_ref, o_ref = refs[4 + E:8 + E]
        act_ref, proj_ref, att_ref, att_t_ref, msg_ref = refs[8 + E:13 + E]

        l = pl.program_id(0)

        # layer 0: bring the packed input slab into the resident activation scratch
        @pl.when(l == 0)
        def _():
            act_ref[...] = x_ref[...]

        # ---- 1) per-node-type projection (bf16 MXU operands, f32 accumulate) ----
        for t, nt in enumerate(node_types):
            r0, rp = offsets[nt], pads[nt]
            pr = jnp.dot(act_ref[r0:r0 + rp, :], w_ref[t],
                         preferred_element_type=jnp.float32) + b_ref[t, 0:1, :]
            proj_ref[r0:r0 + rp, :] = pr.astype(jnp.bfloat16)

        # ---- 2) all 2E attention logits in ONE batched matmul (+ one transpose) ----
        # A columns 0..E-1 hold a_src vectors, columns E..2E-1 hold a_dst vectors.
        att = jnp.dot(proj_ref[...], a_ref[...], preferred_element_type=jnp.float32)
        att_ref[...] = att              # [n_tot_pad, a_cols]  (dst columns sliced)
        att_t_ref[...] = att.T          # [a_cols, n_tot_pad]  (src rows sliced)

        # ---- 3) per-edge-type masked-softmax aggregation -> msg scratch slab ----
        for e, (s_t, _unused, d_t) in enumerate(edge_types):
            s0, sp = offsets[s_t], pads[s_t]
            d0, dp = offsets[d_t], pads[d_t]

            a_s = att_t_ref[e:e + 1, s0:s0 + sp]              # [1, sp]  alpha_src
            a_d = att_ref[d0:d0 + dp, E + e:E + e + 1]        # [dp, 1]  alpha_dst
            scores = a_d + a_s                                # [dp, sp] f32
            scores = jnp.maximum(scores, 0.2 * scores)        # LeakyReLU(0.2)

            maskf = adj_refs[e][...].astype(jnp.float32)      # int8 -> f32 once
            masked = scores + (maskf - 1.0) * 1e30            # mask math stays f32
            m = jnp.max(masked, axis=1, keepdims=True)
            p = jnp.exp(masked - m) * maskf                   # no-edge rows -> 0
            denom = jnp.sum(p, axis=1, keepdims=True)
            attn = p / jnp.maximum(denom, 1e-30)              # exact divide (parity)

            msg = jnp.dot(attn.astype(jnp.bfloat16), proj_ref[s0:s0 + sp, :],
                          preferred_element_type=jnp.float32)
            msg_ref[e, 0:dp, :] = jnp.maximum(msg, 0.0)       # ReLU inside HANConv

        # ---- 4) semantic attention per dst node type + outer HAN_Convs ReLU ----
        kw = kw_ref[...]                                      # bf16 weight-stationary
        kb = kb_ref[0:1, :]
        qv = q_ref[0:1, :]
        for nt in node_types:
            d0, dp, dn = offsets[nt], pads[nt], counts[nt]
            es = dst_edges[nt]
            if not es:
                # node type received no messages: HANConv -> None, HAN_Convs -> zeros
                out_slab = jnp.zeros((dp, h_pad), jnp.float32)
            else:
                ridx = lax.broadcasted_iota(jnp.int32, (dp, 1), 0)
                rmask = (ridx < dn).astype(jnp.float32)       # exclude padded rows
                inv_n = 1.0 / float(dn)
                sc = []
                for e in es:
                    tj = jnp.tanh(
                        jnp.dot(msg_ref[e, 0:dp, :].astype(jnp.bfloat16), kw,
                                preferred_element_type=jnp.float32) + kb)
                    mean_j = jnp.sum(rmask * tj, axis=0, keepdims=True) * inv_n
                    sc.append(jnp.sum(qv * mean_j, axis=1, keepdims=True))  # [1,1]
                mx = sc[0]
                for s in sc[1:]:
                    mx = jnp.maximum(mx, s)
                exps = [jnp.exp(s - mx) for s in sc]
                den = exps[0]
                for ex in exps[1:]:
                    den = den + ex
                acc = (exps[0] / den) * msg_ref[es[0], 0:dp, :]
                for j in range(1, len(es)):
                    acc = acc + (exps[j] / den) * msg_ref[es[j], 0:dp, :]
                out_slab = jnp.maximum(acc, 0.0)              # fused outer ReLU

            @pl.when(l < L - 1)
            def _(out_slab=out_slab, d0=d0, dp=dp):           # feed next layer (VMEM)
                act_ref[d0:d0 + dp, 0:h_pad] = out_slab.astype(jnp.bfloat16)

            @pl.when(l == L - 1)
            def _(out_slab=out_slab, d0=d0, dp=dp):           # final f32 writeback
                o_ref[d0:d0 + dp, :] = out_slab

    def call(x_all, w_all, b_all, a_all, adjs, kw_all, kb_all, q_all, vmem_limit):
        grid_spec = pltpu.PrefetchScalarGridSpec(
            num_scalar_prefetch=0,
            grid=(L,),
            in_specs=[
                # resident across layers (constant block index -> DMA'd once)
                pl.BlockSpec((n_tot_pad, feat_pad), lambda l: (0, 0)),
                # per-layer weights: pipelined / double-buffered by the grid
                pl.BlockSpec((None, T, feat_pad, h_pad), lambda l: (l, 0, 0, 0)),
                pl.BlockSpec((None, T, _SUB, h_pad), lambda l: (l, 0, 0, 0)),
                pl.BlockSpec((None, h_pad, a_cols), lambda l: (l, 0, 0)),
            ] + [
                pl.BlockSpec((pads[d], pads[s]), lambda l: (0, 0))
                for (s, _unused, d) in edge_types
            ] + [
                pl.BlockSpec((None, h_pad, h_pad), lambda l: (l, 0, 0)),
                pl.BlockSpec((None, _SUB, h_pad), lambda l: (l, 0, 0)),
                pl.BlockSpec((None, _SUB, h_pad), lambda l: (l, 0, 0)),
            ],
            out_specs=pl.BlockSpec((n_tot_pad, h_pad), lambda l: (0, 0)),
            scratch_shapes=[
                pltpu.VMEM((n_tot_pad, feat_pad), jnp.bfloat16),  # resident activations
                pltpu.VMEM((n_tot_pad, h_pad), jnp.bfloat16),     # projections
                pltpu.VMEM((n_tot_pad, a_cols), jnp.float32),     # attention logits
                pltpu.VMEM((a_cols, n_tot_pad), jnp.float32),     # transposed logits
                pltpu.VMEM((E, dp_max, h_pad), jnp.float32),      # per-edge messages
            ],
        )
        return pl.pallas_call(
            kernel,
            out_shape=jax.ShapeDtypeStruct((n_tot_pad, h_pad), jnp.float32),
            grid_spec=grid_spec,
            compiler_params=pltpu.CompilerParams(
                dimension_semantics=("arbitrary",),
                vmem_limit_bytes=vmem_limit,
            ),
        )(x_all, w_all, b_all, a_all, *adjs, kw_all, kb_all, q_all)

    return call


# ------------------------------ parameters --------------------------------- #

def init_params(key, in_dim, h_dim, num_layers, node_types, edge_types):
    """Deterministic synthetic parameters mirroring HANConv's shapes (heads=1)."""
    params = []
    d_in = in_dim
    for _ in range(num_layers):
        layer = {"proj": {}, "lin_src": {}, "lin_dst": {}}
        for nt in node_types:
            key, k1, k2 = jax.random.split(key, 3)
            layer["proj"][nt] = {
                "w": 0.2 * jax.random.normal(k1, (d_in, h_dim), jnp.float32),
                "b": 0.1 * jax.random.normal(k2, (1, h_dim), jnp.float32),
            }
        for et in edge_types:
            name = "__".join(et)
            key, k1, k2 = jax.random.split(key, 3)
            layer["lin_src"][name] = 0.2 * jax.random.normal(k1, (1, h_dim), jnp.float32)
            layer["lin_dst"][name] = 0.2 * jax.random.normal(k2, (1, h_dim), jnp.float32)
        key, k1, k2, k3 = jax.random.split(key, 4)
        layer["k_w"] = 0.2 * jax.random.normal(k1, (h_dim, h_dim), jnp.float32)
        layer["k_b"] = 0.1 * jax.random.normal(k2, (1, h_dim), jnp.float32)
        layer["q"] = 0.2 * jax.random.normal(k3, (1, h_dim), jnp.float32)
        params.append(layer)
        d_in = h_dim
    return params


def _pack_params(params, node_types, edge_types, feat_pad, h_pad, a_cols):
    L, T, E = len(params), len(node_types), len(edge_types)
    w_all = jnp.zeros((L, T, feat_pad, h_pad), jnp.float32)
    b_all = jnp.zeros((L, T, _SUB, h_pad), jnp.float32)
    a_all = jnp.zeros((L, h_pad, a_cols), jnp.float32)
    kw_all = jnp.zeros((L, h_pad, h_pad), jnp.float32)
    kb_all = jnp.zeros((L, _SUB, h_pad), jnp.float32)
    q_all = jnp.zeros((L, _SUB, h_pad), jnp.float32)
    for li, layer in enumerate(params):
        for t, nt in enumerate(node_types):
            w = layer["proj"][nt]["w"]
            b = layer["proj"][nt]["b"]
            w_all = w_all.at[li, t, :w.shape[0], :w.shape[1]].set(w)
            b_all = b_all.at[li, t, 0:1, :b.shape[1]].set(b)
        for e, et in enumerate(edge_types):
            name = "__".join(et)
            a_src = layer["lin_src"][name][0]
            a_dst = layer["lin_dst"][name][0]
            a_all = a_all.at[li, :a_src.shape[0], e].set(a_src)
            a_all = a_all.at[li, :a_dst.shape[0], E + e].set(a_dst)
        kw, kb, q = layer["k_w"], layer["k_b"], layer["q"]
        kw_all = kw_all.at[li, :kw.shape[0], :kw.shape[1]].set(kw)
        kb_all = kb_all.at[li, 0:1, :kb.shape[1]].set(kb)
        q_all = q_all.at[li, 0:1, :q.shape[1]].set(q)
    return (w_all.astype(jnp.bfloat16), b_all, a_all.astype(jnp.bfloat16),
            kw_all.astype(jnp.bfloat16), kb_all, q_all)


# ------------------------------ model wrapper ------------------------------ #

def han_convs_forward(x_dict, edge_index_dict, params, in_dim, h_dim,
                      node_types, edge_types):
    L, E, T = len(params), len(edge_types), len(node_types)
    counts = {nt: int(x_dict[nt].shape[0]) for nt in node_types}
    # Lane-dense padding: per-type node slabs rounded to 128 so score tiles,
    # int8 masks and all stores are full (8/32,128) tiles with no masked lanes.
    pads = {nt: _round_up(max(counts[nt], 1), _LANE) for nt in node_types}
    offsets, off = {}, 0
    for nt in node_types:
        offsets[nt] = off
        off += pads[nt]
    n_tot_pad = off
    in_pad = _round_up(in_dim, _LANE)
    h_pad = _round_up(h_dim, _LANE)
    feat_pad = max(in_pad, h_pad)
    a_cols = _round_up(2 * E, _LANE)

    # Dense int8 adjacency masks (demo scale); built once, resident across layers.
    # TODO(synk): CSR + scalar-prefetch gather with a ("parallel","arbitrary")
    # dst-block grid for production graph sizes / v7x dual-TC sharding.
    adjs = []
    for et in edge_types:
        s_t, _unused, d_t = et
        ei = edge_index_dict[et]
        adjs.append(jnp.zeros((pads[d_t], pads[s_t]), jnp.int8)
                    .at[ei[1], ei[0]].set(1))

    # Pack node features into one lane-dense bf16 slab.
    x_all = jnp.zeros((n_tot_pad, feat_pad), jnp.float32)
    for nt in node_types:
        x = x_dict[nt]
        x_all = x_all.at[offsets[nt]:offsets[nt] + counts[nt], :x.shape[1]].set(
            x.astype(jnp.float32))
    x_all = x_all.astype(jnp.bfloat16)

    w_all, b_all, a_all, kw_all, kb_all, q_all = _pack_params(
        params, node_types, edge_types, feat_pad, h_pad, a_cols)

    dp_max = max(pads[nt] for nt in node_types)
    # VMEM budget: resident slabs + double-buffered per-layer weights + scratch.
    foot = (n_tot_pad * feat_pad * 2                      # x slab (bf16)
            + n_tot_pad * h_pad * 4                       # output slab (f32)
            + sum(pads[d] * pads[s] for (s, _u, d) in edge_types)  # int8 masks
            + 2 * (T * feat_pad * h_pad * 2 + T * _SUB * h_pad * 4
                   + h_pad * a_cols * 2 + h_pad * h_pad * 2
                   + 2 * _SUB * h_pad * 4)                # dbl-buffered weights
            + n_tot_pad * feat_pad * 2 + n_tot_pad * h_pad * 2     # act/proj scratch
            + 2 * n_tot_pad * a_cols * 4                  # att + att^T scratch
            + E * dp_max * h_pad * 4)                     # msg scratch
    vmem_limit = int(min(112 * 1024 * 1024, max(2 * foot + (8 << 20), 32 << 20)))

    call = _make_han_network(node_types, edge_types, offsets, pads, counts,
                             n_tot_pad, feat_pad, h_pad, a_cols, L)
    out_all = call(x_all, w_all, b_all, a_all, adjs, kw_all, kb_all, q_all,
                   vmem_limit)
    return {nt: out_all[offsets[nt]:offsets[nt] + counts[nt], :h_dim]
            for nt in node_types}


# ---------------------------------- main ----------------------------------- #

if __name__ == "__main__":
    IN_DIM = 8
    H_DIM = 16
    NUM_LAYERS = 2
    N_AUTHOR = 12
    N_PAPER = 16

    node_types = ["author", "paper"]
    edge_types = [("author", "writes", "paper"),
                  ("paper", "rev_writes", "author"),
                  ("paper", "cites", "paper")]

    key = jax.random.PRNGKey(0)
    key, ka, kp, kparam = jax.random.split(key, 4)
    x_dict = {
        "author": jax.random.normal(ka, (N_AUTHOR, IN_DIM), jnp.float32),
        "paper": jax.random.normal(kp, (N_PAPER, IN_DIM), jnp.float32),
    }

    # deterministic, duplicate-free edge lists ([2, E] int32, row0=src row1=dst)
    writes_src = [a for a in range(N_AUTHOR) for _ in range(2)]
    writes_dst = [(3 * a + j) % N_PAPER for a in range(N_AUTHOR) for j in range(2)]
    cites_src = [p for p in range(N_PAPER) for _ in range(2)]
    cites_dst = [(p + o) % N_PAPER for p in range(N_PAPER) for o in (1, 5)]
    edge_index_dict = {
        ("author", "writes", "paper"):
            jnp.array([writes_src, writes_dst], dtype=jnp.int32),
        ("paper", "rev_writes", "author"):
            jnp.array([writes_dst, writes_src], dtype=jnp.int32),
        ("paper", "cites", "paper"):
            jnp.array([cites_src, cites_dst], dtype=jnp.int32),
    }

    params = init_params(kparam, IN_DIM, H_DIM, NUM_LAYERS, node_types, edge_types)

    out_dict = han_convs_forward(x_dict, edge_index_dict, params,
                                 IN_DIM, H_DIM, node_types, edge_types)
    for k in out_dict:
        jax.block_until_ready(out_dict[k])
        assert out_dict[k].shape == (x_dict[k].shape[0], H_DIM)
        assert bool(jnp.all(jnp.isfinite(out_dict[k])))

    print("KERNEL_OK")
</pallas_src>

<mosaic_0001>
module attributes {stable_mosaic.version = 11 : i64} {
  func.func @kernel(%arg0: i32, %arg1: memref<256x128xbf16, #tpu.memory_space<vmem>>, %arg2: memref<1x2x128x128xbf16, #tpu.memory_space<vmem>>, %arg3: memref<1x2x8x128xf32, #tpu.memory_space<vmem>>, %arg4: memref<1x128x128xbf16, #tpu.memory_space<vmem>>, %arg5: memref<128x128xi8, #tpu.memory_space<vmem>>, %arg6: memref<128x128xi8, #tpu.memory_space<vmem>>, %arg7: memref<128x128xi8, #tpu.memory_space<vmem>>, %arg8: memref<1x128x128xbf16, #tpu.memory_space<vmem>>, %arg9: memref<1x8x128xf32, #tpu.memory_space<vmem>>, %arg10: memref<1x8x128xf32, #tpu.memory_space<vmem>>, %arg11: memref<256x128xf32, #tpu.memory_space<vmem>>, %arg12: memref<256x128xbf16, #tpu.memory_space<vmem>>, %arg13: memref<256x128xbf16, #tpu.memory_space<vmem>>, %arg14: memref<256x128xf32, #tpu.memory_space<vmem>>, %arg15: memref<128x256xf32, #tpu.memory_space<vmem>>, %arg16: memref<3x128x128xf32, #tpu.memory_space<vmem>>) attributes {dimension_semantics = [#tpu.dimension_semantics<arbitrary>], iteration_bounds = array<i64: 2>, scalar_prefetch = 0 : i64, scratch_operands = 5 : i64, tpu.core_type = #tpu.core_type<tc>, window_params = [{pipeline_mode = #tpu.pipeline_mode<synchronous>, transform_indices = @transform_0, window_bounds = array<i64: 256, 128>}, {transform_indices = @transform_1, window_bounds = array<i64: 1, 2, 128, 128>}, {transform_indices = @transform_2, window_bounds = array<i64: 1, 2, 8, 128>}, {transform_indices = @transform_3, window_bounds = array<i64: 1, 128, 128>}, {pipeline_mode = #tpu.pipeline_mode<synchronous>, transform_indices = @transform_4, window_bounds = array<i64: 128, 128>}, {pipeline_mode = #tpu.pipeline_mode<synchronous>, transform_indices = @transform_5, window_bounds = array<i64: 128, 128>}, {pipeline_mode = #tpu.pipeline_mode<synchronous>, transform_indices = @transform_6, window_bounds = array<i64: 128, 128>}, {transform_indices = @transform_7, window_bounds = array<i64: 1, 128, 128>}, {transform_indices = @transform_8, window_bounds = array<i64: 1, 8, 128>}, {transform_indices = @transform_9, window_bounds = array<i64: 1, 8, 128>}, {pipeline_mode = #tpu.pipeline_mode<synchronous>, transform_indices = @transform_10, window_bounds = array<i64: 256, 128>}]} {
    %c0_i32 = arith.constant 0 : i32
    %0 = arith.cmpi eq, %arg0, %c0_i32 : i32
    %1 = arith.extui %0 : i1 to i32
    %c0_i32_0 = arith.constant 0 : i32
    %2 = arith.cmpi ne, %1, %c0_i32_0 : i32
    scf.if %2 {
      %c0_134 = arith.constant 0 : index
      %c0_135 = arith.constant 0 : index
      %239 = vector.load %arg1[%c0_134, %c0_135] : memref<256x128xbf16, #tpu.memory_space<vmem>>, vector<256x128xbf16>
      %c0_136 = arith.constant 0 : index
      %c0_137 = arith.constant 0 : index
      %240 = vector.load %arg12[%c0_136, %c0_137] : memref<256x128xbf16, #tpu.memory_space<vmem>>, vector<256x128xbf16>
      tpu.vector_store %arg12[%c0_136, %c0_137], %239 {strides = array<i32>} : memref<256x128xbf16, #tpu.memory_space<vmem>>, vector<256x128xbf16>,
    } else {
    }
    %c0 = arith.constant 0 : index
    %c0_1 = arith.constant 0 : index
    %3 = vector.load %arg12[%c0, %c0_1] : memref<256x128xbf16, #tpu.memory_space<vmem>>, vector<128x128xbf16>
    %c0_2 = arith.constant 0 : index
    %c0_3 = arith.constant 0 : index
    %c0_4 = arith.constant 0 : index
    %c0_5 = arith.constant 0 : index
    %4 = vector.load %arg2[%c0_2, %c0_3, %c0_4, %c0_5] : memref<1x2x128x128xbf16, #tpu.memory_space<vmem>>, vector<1x1x128x128xbf16>
    %5 = vector.shape_cast %4 : vector<1x1x128x128xbf16> to vector<128x128xbf16>
    %cst = arith.constant dense<0.000000e+00> : vector<128x128xf32>
    %6 = tpu.matmul %3, %5, %cst {dimension_numbers = #tpu.dot_dimension_numbers<[1], [0], [0], [1], [0, 0, 1, 1], [], []>} : vector<128x128xbf16>, vector<128x128xbf16>, vector<128x128xf32> -> vector<128x128xf32>
    %c0_6 = arith.constant 0 : index
    %c0_7 = arith.constant 0 : index
    %c0_8 = arith.constant 0 : index
    %c0_9 = arith.constant 0 : index
    %7 = vector.load %arg3[%c0_6, %c0_7, %c0_8, %c0_9] : memref<1x2x8x128xf32, #tpu.memory_space<vmem>>, vector<1x1x1x128xf32>
    %8 = vector.shape_cast %7 : vector<1x1x1x128xf32> to vector<1x128xf32>
    %9 = vector.broadcast %8 : vector<1x128xf32> to vector<128x128xf32>
    %10 = arith.addf %6, %9 : vector<128x128xf32>
    %11 = arith.truncf %10 : vector<128x128xf32> to vector<128x128xbf16>
    %c0_10 = arith.constant 0 : index
    %c0_11 = arith.constant 0 : index
    %12 = vector.load %arg13[%c0_10, %c0_11] : memref<256x128xbf16, #tpu.memory_space<vmem>>, vector<128x128xbf16>
    tpu.vector_store %arg13[%c0_10, %c0_11], %11 {strides = array<i32>} : memref<256x128xbf16, #tpu.memory_space<vmem>>, vector<128x128xbf16>,
    %c128 = arith.constant 128 : index
    %c0_12 = arith.constant 0 : index
    %13 = vector.load %arg12[%c128, %c0_12] : memref<256x128xbf16, #tpu.memory_space<vmem>>, vector<128x128xbf16>
    %c0_13 = arith.constant 0 : index
    %c1 = arith.constant 1 : index
    %c0_14 = arith.constant 0 : index
    %c0_15 = arith.constant 0 : index
    %14 = vector.load %arg2[%c0_13, %c1, %c0_14, %c0_15] : memref<1x2x128x128xbf16, #tpu.memory_space<vmem>>, vector<1x1x128x128xbf16>
    %15 = vector.shape_cast %14 : vector<1x1x128x128xbf16> to vector<128x128xbf16>
    %cst_16 = arith.constant dense<0.000000e+00> : vector<128x128xf32>
    %16 = tpu.matmul %13, %15, %cst_16 {dimension_numbers = #tpu.dot_dimension_numbers<[1], [0], [0], [1], [0, 0, 1, 1], [], []>} : vector<128x128xbf16>, vector<128x128xbf16>, vector<128x128xf32> -> vector<128x128xf32>
    %c0_17 = arith.constant 0 : index
    %c1_18 = arith.constant 1 : index
    %c0_19 = arith.constant 0 : index
    %c0_20 = arith.constant 0 : index
    %17 = vector.load %arg3[%c0_17, %c1_18, %c0_19, %c0_20] : memref<1x2x8x128xf32, #tpu.memory_space<vmem>>, vector<1x1x1x128xf32>
    %18 = vector.shape_cast %17 : vector<1x1x1x128xf32> to vector<1x128xf32>
    %19 = vector.broadcast %18 : vector<1x128xf32> to vector<128x128xf32>
    %20 = arith.addf %16, %19 : vector<128x128xf32>
    %21 = arith.truncf %20 : vector<128x128xf32> to vector<128x128xbf16>
    %c128_21 = arith.constant 128 : index
    %c0_22 = arith.constant 0 : index
    %22 = vector.load %arg13[%c128_21, %c0_22] : memref<256x128xbf16, #tpu.memory_space<vmem>>, vector<128x128xbf16>
    tpu.vector_store %arg13[%c128_21, %c0_22], %21 {strides = array<i32>} : memref<256x128xbf16, #tpu.memory_space<vmem>>, vector<128x128xbf16>,
    %c0_23 = arith.constant 0 : index
    %c0_24 = arith.constant 0 : index
    %23 = vector.load %arg13[%c0_23, %c0_24] : memref<256x128xbf16, #tpu.memory_space<vmem>>, vector<256x128xbf16>
    %c0_25 = arith.constant 0 : index
    %c0_26 = arith.constant 0 : index
    %c0_27 = arith.constant 0 : index
    %24 = vector.load %arg4[%c0_25, %c0_26, %c0_27] : memref<1x128x128xbf16, #tpu.memory_space<vmem>>, vector<1x128x128xbf16>
    %25 = vector.shape_cast %24 : vector<1x128x128xbf16> to vector<128x128xbf16>
    %cst_28 = arith.constant dense<0.000000e+00> : vector<256x128xf32>
    %26 = tpu.matmul %23, %25, %cst_28 {dimension_numbers = #tpu.dot_dimension_numbers<[1], [0], [0], [1], [0, 0, 1, 1], [], []>} : vector<256x128xbf16>, vector<128x128xbf16>, vector<256x128xf32> -> vector<256x128xf32>
    %c0_29 = arith.constant 0 : index
    %c0_30 = arith.constant 0 : index
    %27 = vector.load %arg14[%c0_29, %c0_30] : memref<256x128xf32, #tpu.memory_space<vmem>>, vector<256x128xf32>
    tpu.vector_store %arg14[%c0_29, %c0_30], %26 {strides = array<i32>} : memref<256x128xf32, #tpu.memory_space<vmem>>, vector<256x128xf32>,
    %28 = tpu.transpose %26, [1, 0] : vector<256x128xf32> -> vector<128x256xf32>
    %c0_31 = arith.constant 0 : index
    %c0_32 = arith.constant 0 : index
    %29 = vector.load %arg15[%c0_31, %c0_32] : memref<128x256xf32, #tpu.memory_space<vmem>>, vector<128x256xf32>
    tpu.vector_store %arg15[%c0_31, %c0_32], %28 {strides = array<i32>} : memref<128x256xf32, #tpu.memory_space<vmem>>, vector<128x256xf32>,
    %c0_33 = arith.constant 0 : index
    %c0_34 = arith.constant 0 : index
    %30 = vector.load %arg15[%c0_33, %c0_34] : memref<128x256xf32, #tpu.memory_space<vmem>>, vector<1x128xf32>
    %c128_35 = arith.constant 128 : index
    %c3 = arith.constant 3 : index
    %31 = vector.load %arg14[%c128_35, %c3] : memref<256x128xf32, #tpu.memory_space<vmem>>, vector<128x1xf32>
    %32 = vector.broadcast %31 : vector<128x1xf32> to vector<128x128xf32>
    %33 = vector.broadcast %30 : vector<1x128xf32> to vector<128x128xf32>
    %34 = arith.addf %32, %33 : vector<128x128xf32>
    %cst_36 = arith.constant 2.000000e-01 : f32
    %35 = vector.broadcast %cst_36 : f32 to vector<128x128xf32>
    %36 = arith.mulf %35, %34 : vector<128x128xf32>
    %37 = arith.maximumf %34, %36 : vector<128x128xf32>
    %c0_37 = arith.constant 0 : index
    %c0_38 = arith.constant 0 : index
    %38 = vector.load %arg5[%c0_37, %c0_38] : memref<128x128xi8, #tpu.memory_space<vmem>>, vector<128x128xi8>
    %39 = arith.sitofp %38 : vector<128x128xi8> to vector<128x128xf32>
    %cst_39 = arith.constant 1.000000e+00 : f32
    %40 = vector.broadcast %cst_39 : f32 to vector<128x128xf32>
    %41 = arith.subf %39, %40 : vector<128x128xf32>
    %cst_40 = arith.constant 1.000000e+30 : f32
    %42 = vector.broadcast %cst_40 : f32 to vector<128x128xf32>
    %43 = arith.mulf %41, %42 : vector<128x128xf32>
    %44 = arith.addf %37, %43 : vector<128x128xf32>
    %cst_41 = arith.constant dense<0xFF800000> : vector<128xf32>
    %45 = vector.multi_reduction <maximumf>, %44, %cst_41 [1] : vector<128x128xf32> to vector<128xf32>
    %46 = vector.shape_cast %45 : vector<128xf32> to vector<128x1xf32>
    %47 = vector.broadcast %46 : vector<128x1xf32> to vector<128x128xf32>
    %48 = arith.subf %44, %47 : vector<128x128xf32>
    %49 = math.exp %48 : vector<128x128xf32>
    %50 = arith.mulf %49, %39 : vector<128x128xf32>
    %cst_42 = arith.constant dense<0.000000e+00> : vector<128xf32>
    %51 = vector.multi_reduction <add>, %50, %cst_42 [1] : vector<128x128xf32> to vector<128xf32>
    %52 = vector.shape_cast %51 : vector<128xf32> to vector<128x1xf32>
    %cst_43 = arith.constant 1.000000e-30 : f32
    %53 = vector.broadcast %cst_43 : f32 to vector<128x1xf32>
    %54 = arith.maximumf %52, %53 : vector<128x1xf32>
    %55 = vector.broadcast %54 : vector<128x1xf32> to vector<128x128xf32>
    %56 = arith.divf %50, %55 : vector<128x128xf32>
    %57 = arith.truncf %56 : vector<128x128xf32> to vector<128x128xbf16>
    %c0_44 = arith.constant 0 : index
    %c0_45 = arith.constant 0 : index
    %58 = vector.load %arg13[%c0_44, %c0_45] : memref<256x128xbf16, #tpu.memory_space<vmem>>, vector<128x128xbf16>
    %cst_46 = arith.constant dense<0.000000e+00> : vector<128x128xf32>
    %59 = tpu.matmul %57, %58, %cst_46 {dimension_numbers = #tpu.dot_dimension_numbers<[1], [0], [0], [1], [0, 0, 1, 1], [], []>} : vector<128x128xbf16>, vector<128x128xbf16>, vector<128x128xf32> -> vector<128x128xf32>
    %cst_47 = arith.constant 0.000000e+00 : f32
    %60 = vector.broadcast %cst_47 : f32 to vector<128x128xf32>
    %61 = arith.maximumf %59, %60 : vector<128x128xf32>
    %c0_48 = arith.constant 0 : index
    %c0_49 = arith.constant 0 : index
    %c0_50 = arith.constant 0 : index
    %62 = vector.load %arg16[%c0_48, %c0_49, %c0_50] : memref<3x128x128xf32, #tpu.memory_space<vmem>>, vector<1x128x128xf32>
    %63 = vector.shape_cast %62 : vector<1x128x128xf32> to vector<128x128xf32>
    %64 = vector.shape_cast %61 : vector<128x128xf32> to vector<1x128x128xf32>
    tpu.vector_store %arg16[%c0_48, %c0_49, %c0_50], %64 {strides = array<i32>} : memref<3x128x128xf32, #tpu.memory_space<vmem>>, vector<1x128x128xf32>,
    %c1_51 = arith.constant 1 : index
    %c128_52 = arith.constant 128 : index
    %65 = vector.load %arg15[%c1_51, %c128_52] : memref<128x256xf32, #tpu.memory_space<vmem>>, vector<1x128xf32>
    %c0_53 = arith.constant 0 : index
    %c4 = arith.constant 4 : index
    %66 = vector.load %arg14[%c0_53, %c4] : memref<256x128xf32, #tpu.memory_space<vmem>>, vector<128x1xf32>
    %67 = vector.broadcast %66 : vector<128x1xf32> to vector<128x128xf32>
    %68 = vector.broadcast %65 : vector<1x128xf32> to vector<128x128xf32>
    %69 = arith.addf %67, %68 : vector<128x128xf32>
    %cst_54 = arith.constant 2.000000e-01 : f32
    %70 = vector.broadcast %cst_54 : f32 to vector<128x128xf32>
    %71 = arith.mulf %70, %69 : vector<128x128xf32>
    %72 = arith.maximumf %69, %71 : vector<128x128xf32>
    %c0_55 = arith.constant 0 : index
    %c0_56 = arith.constant 0 : index
    %73 = vector.load %arg6[%c0_55, %c0_56] : memref<128x128xi8, #tpu.memory_space<vmem>>, vector<128x128xi8>
    %74 = arith.sitofp %73 : vector<128x128xi8> to vector<128x128xf32>
    %cst_57 = arith.constant 1.000000e+00 : f32
    %75 = vector.broadcast %cst_57 : f32 to vector<128x128xf32>
    %76 = arith.subf %74, %75 : vector<128x128xf32>
    %cst_58 = arith.constant 1.000000e+30 : f32
    %77 = vector.broadcast %cst_58 : f32 to vector<128x128xf32>
    %78 = arith.mulf %76, %77 : vector<128x128xf32>
    %79 = arith.addf %72, %78 : vector<128x128xf32>
    %cst_59 = arith.constant dense<0xFF800000> : vector<128xf32>
    %80 = vector.multi_reduction <maximumf>, %79, %cst_59 [1] : vector<128x128xf32> to vector<128xf32>
    %81 = vector.shape_cast %80 : vector<128xf32> to vector<128x1xf32>
    %82 = vector.broadcast %81 : vector<128x1xf32> to vector<128x128xf32>
    %83 = arith.subf %79, %82 : vector<128x128xf32>
    %84 = math.exp %83 : vector<128x128xf32>
    %85 = arith.mulf %84, %74 : vector<128x128xf32>
    %cst_60 = arith.constant dense<0.000000e+00> : vector<128xf32>
    %86 = vector.multi_reduction <add>, %85, %cst_60 [1] : vector<128x128xf32> to vector<128xf32>
    %87 = vector.shape_cast %86 : vector<128xf32> to vector<128x1xf32>
    %cst_61 = arith.constant 1.000000e-30 : f32
    %88 = vector.broadcast %cst_61 : f32 to vector<128x1xf32>
    %89 = arith.maximumf %87, %88 : vector<128x1xf32>
    %90 = vector.broadcast %89 : vector<128x1xf32> to vector<128x128xf32>
    %91 = arith.divf %85, %90 : vector<128x128xf32>
    %92 = arith.truncf %91 : vector<128x128xf32> to vector<128x128xbf16>
    %c128_62 = arith.constant 128 : index
    %c0_63 = arith.constant 0 : index
    %93 = vector.load %arg13[%c128_62, %c0_63] : memref<256x128xbf16, #tpu.memory_space<vmem>>, vector<128x128xbf16>
    %cst_64 = arith.constant dense<0.000000e+00> : vector<128x128xf32>
    %94 = tpu.matmul %92, %93, %cst_64 {dimension_numbers = #tpu.dot_dimension_numbers<[1], [0], [0], [1], [0, 0, 1, 1], [], []>} : vector<128x128xbf16>, vector<128x128xbf16>, vector<128x128xf32> -> vector<128x128xf32>
    %cst_65 = arith.constant 0.000000e+00 : f32
    %95 = vector.broadcast %cst_65 : f32 to vector<128x128xf32>
    %96 = arith.maximumf %94, %95 : vector<128x128xf32>
    %c1_66 = arith.constant 1 : index
    %c0_67 = arith.constant 0 : index
    %c0_68 = arith.constant 0 : index
    %97 = vector.load %arg16[%c1_66, %c0_67, %c0_68] : memref<3x128x128xf32, #tpu.memory_space<vmem>>, vector<1x128x128xf32>
    %98 = vector.shape_cast %97 : vector<1x128x128xf32> to vector<128x128xf32>
    %99 = vector.shape_cast %96 : vector<128x128xf32> to vector<1x128x128xf32>
    tpu.vector_store %arg16[%c1_66, %c0_67, %c0_68], %99 {strides = array<i32>} : memref<3x128x128xf32, #tpu.memory_space<vmem>>, vector<1x128x128xf32>,
    %c2 = arith.constant 2 : index
    %c128_69 = arith.constant 128 : index
    %100 = vector.load %arg15[%c2, %c128_69] : memref<128x256xf32, #tpu.memory_space<vmem>>, vector<1x128xf32>
    %c128_70 = arith.constant 128 : index
    %c5 = arith.constant 5 : index
    %101 = vector.load %arg14[%c128_70, %c5] : memref<256x128xf32, #tpu.memory_space<vmem>>, vector<128x1xf32>
    %102 = vector.broadcast %101 : vector<128x1xf32> to vector<128x128xf32>
    %103 = vector.broadcast %100 : vector<1x128xf32> to vector<128x128xf32>
    %104 = arith.addf %102, %103 : vector<128x128xf32>
    %cst_71 = arith.constant 2.000000e-01 : f32
    %105 = vector.broadcast %cst_71 : f32 to vector<128x128xf32>
    %106 = arith.mulf %105, %104 : vector<128x128xf32>
    %107 = arith.maximumf %104, %106 : vector<128x128xf32>
    %c0_72 = arith.constant 0 : index
    %c0_73 = arith.constant 0 : index
    %108 = vector.load %arg7[%c0_72, %c0_73] : memref<128x128xi8, #tpu.memory_space<vmem>>, vector<128x128xi8>
    %109 = arith.sitofp %108 : vector<128x128xi8> to vector<128x128xf32>
    %cst_74 = arith.constant 1.000000e+00 : f32
    %110 = vector.broadcast %cst_74 : f32 to vector<128x128xf32>
    %111 = arith.subf %109, %110 : vector<128x128xf32>
    %cst_75 = arith.constant 1.000000e+30 : f32
    %112 = vector.broadcast %cst_75 : f32 to vector<128x128xf32>
    %113 = arith.mulf %111, %112 : vector<128x128xf32>
    %114 = arith.addf %107, %113 : vector<128x128xf32>
    %cst_76 = arith.constant dense<0xFF800000> : vector<128xf32>
    %115 = vector.multi_reduction <maximumf>, %114, %cst_76 [1] : vector<128x128xf32> to vector<128xf32>
    %116 = vector.shape_cast %115 : vector<128xf32> to vector<128x1xf32>
    %117 = vector.broadcast %116 : vector<128x1xf32> to vector<128x128xf32>
    %118 = arith.subf %114, %117 : vector<128x128xf32>
    %119 = math.exp %118 : vector<128x128xf32>
    %120 = arith.mulf %119, %109 : vector<128x128xf32>
    %cst_77 = arith.constant dense<0.000000e+00> : vector<128xf32>
    %121 = vector.multi_reduction <add>, %120, %cst_77 [1] : vector<128x128xf32> to vector<128xf32>
    %122 = vector.shape_cast %121 : vector<128xf32> to vector<128x1xf32>
    %cst_78 = arith.constant 1.000000e-30 : f32
    %123 = vector.broadcast %cst_78 : f32 to vector<128x1xf32>
    %124 = arith.maximumf %122, %123 : vector<128x1xf32>
    %125 = vector.broadcast %124 : vector<128x1xf32> to vector<128x128xf32>
    %126 = arith.divf %120, %125 : vector<128x128xf32>
    %127 = arith.truncf %126 : vector<128x128xf32> to vector<128x128xbf16>
    %c128_79 = arith.constant 128 : index
    %c0_80 = arith.constant 0 : index
    %128 = vector.load %arg13[%c128_79, %c0_80] : memref<256x128xbf16, #tpu.memory_space<vmem>>, vector<128x128xbf16>
    %cst_81 = arith.constant dense<0.000000e+00> : vector<128x128xf32>
    %129 = tpu.matmul %127, %128, %cst_81 {dimension_numbers = #tpu.dot_dimension_numbers<[1], [0], [0], [1], [0, 0, 1, 1], [], []>} : vector<128x128xbf16>, vector<128x128xbf16>, vector<128x128xf32> -> vector<128x128xf32>
    %cst_82 = arith.constant 0.000000e+00 : f32
    %130 = vector.broadcast %cst_82 : f32 to vector<128x128xf32>
    %131 = arith.maximumf %129, %130 : vector<128x128xf32>
    %c2_83 = arith.constant 2 : index
    %c0_84 = arith.constant 0 : index
    %c0_85 = arith.constant 0 : index
    %132 = vector.load %arg16[%c2_83, %c0_84, %c0_85] : memref<3x128x128xf32, #tpu.memory_space<vmem>>, vector<1x128x128xf32>
    %133 = vector.shape_cast %132 : vector<1x128x128xf32> to vector<128x128xf32>
    %134 = vector.shape_cast %131 : vector<128x128xf32> to vector<1x128x128xf32>
    tpu.vector_store %arg16[%c2_83, %c0_84, %c0_85], %134 {strides = array<i32>} : memref<3x128x128xf32, #tpu.memory_space<vmem>>, vector<1x128x128xf32>,
    %c0_86 = arith.constant 0 : index
    %c0_87 = arith.constant 0 : index
    %c0_88 = arith.constant 0 : index
    %135 = vector.load %arg8[%c0_86, %c0_87, %c0_88] : memref<1x128x128xbf16, #tpu.memory_space<vmem>>, vector<1x128x128xbf16>
    %136 = vector.shape_cast %135 : vector<1x128x128xbf16> to vector<128x128xbf16>
    %c0_89 = arith.constant 0 : index
    %c0_90 = arith.constant 0 : index
    %c0_91 = arith.constant 0 : index
    %137 = vector.load %arg9[%c0_89, %c0_90, %c0_91] : memref<1x8x128xf32, #tpu.memory_space<vmem>>, vector<1x1x128xf32>
    %138 = vector.shape_cast %137 : vector<1x1x128xf32> to vector<1x128xf32>
    %c0_92 = arith.constant 0 : index
    %c0_93 = arith.constant 0 : index
    %c0_94 = arith.constant 0 : index
    %139 = vector.load %arg10[%c0_92, %c0_93, %c0_94] : memref<1x8x128xf32, #tpu.memory_space<vmem>>, vector<1x1x128xf32>
    %140 = vector.shape_cast %139 : vector<1x1x128xf32> to vector<1x128xf32>
    %141 = tpu.iota {dimensions = array<i32: 0>} : vector<128x1xi32>
    %c12_i32 = arith.constant 12 : i32
    %142 = vector.broadcast %c12_i32 : i32 to vector<128x1xi32>
    %143 = arith.cmpi slt, %141, %142 : vector<128x1xi32>
    %144 = arith.extui %143 : vector<128x1xi1> to vector<128x1xi32>
    %145 = arith.sitofp %144 : vector<128x1xi32> to vector<128x1xf32>
    %c1_95 = arith.constant 1 : index
    %c0_96 = arith.constant 0 : index
    %c0_97 = arith.constant 0 : index
    %146 = vector.load %arg16[%c1_95, %c0_96, %c0_97] : memref<3x128x128xf32, #tpu.memory_space<vmem>>, vector<1x128x128xf32>
    %147 = vector.shape_cast %146 : vector<1x128x128xf32> to vector<128x128xf32>
    %148 = arith.truncf %147 : vector<128x128xf32> to vector<128x128xbf16>
    %cst_98 = arith.constant dense<0.000000e+00> : vector<128x128xf32>
    %149 = tpu.matmul %148, %136, %cst_98 {dimension_numbers = #tpu.dot_dimension_numbers<[1], [0], [0], [1], [0, 0, 1, 1], [], []>} : vector<128x128xbf16>, vector<128x128xbf16>, vector<128x128xf32> -> vector<128x128xf32>
    %150 = vector.broadcast %138 : vector<1x128xf32> to vector<128x128xf32>
    %151 = arith.addf %149, %150 : vector<128x128xf32>
    %152 = math.tanh %151 : vector<128x128xf32>
    %153 = vector.broadcast %145 : vector<128x1xf32> to vector<128x128xf32>
    %154 = arith.mulf %153, %152 : vector<128x128xf32>
    %cst_99 = arith.constant dense<0.000000e+00> : vector<128xf32>
    %155 = vector.multi_reduction <add>, %154, %cst_99 [0] : vector<128x128xf32> to vector<128xf32>
    %156 = vector.shape_cast %155 : vector<128xf32> to vector<1x128xf32>
    %cst_100 = arith.constant 0.0833333358 : f32
    %157 = vector.broadcast %cst_100 : f32 to vector<1x128xf32>
    %158 = arith.mulf %156, %157 : vector<1x128xf32>
    %159 = arith.mulf %140, %158 : vector<1x128xf32>
    %cst_101 = arith.constant dense<0.000000e+00> : vector<1xf32>
    %160 = vector.multi_reduction <add>, %159, %cst_101 [1] : vector<1x128xf32> to vector<1xf32>
    %161 = vector.shape_cast %160 : vector<1xf32> to vector<1x1xf32>
    %162 = arith.subf %161, %161 : vector<1x1xf32>
    %163 = math.exp %162 : vector<1x1xf32>
    %164 = arith.divf %163, %163 : vector<1x1xf32>
    %c1_102 = arith.constant 1 : index
    %c0_103 = arith.constant 0 : index
    %c0_104 = arith.constant 0 : index
    %165 = vector.load %arg16[%c1_102, %c0_103, %c0_104] : memref<3x128x128xf32, #tpu.memory_space<vmem>>, vector<1x128x128xf32>
    %166 = vector.shape_cast %165 : vector<1x128x128xf32> to vector<128x128xf32>
    %167 = vector.broadcast %164 : vector<1x1xf32> to vector<128x128xf32>
    %168 = arith.mulf %167, %166 : vector<128x128xf32>
    %cst_105 = arith.constant 0.000000e+00 : f32
    %169 = vector.broadcast %cst_105 : f32 to vector<128x128xf32>
    %170 = arith.maximumf %168, %169 : vector<128x128xf32>
    %c1_i32 = arith.constant 1 : i32
    %171 = arith.cmpi slt, %arg0, %c1_i32 : i32
    %172 = arith.extui %171 : i1 to i32
    %c0_i32_106 = arith.constant 0 : i32
    %173 = arith.cmpi ne, %172, %c0_i32_106 : i32
    scf.if %173 {
      %239 = arith.truncf %170 : vector<128x128xf32> to vector<128x128xbf16>
      %c0_134 = arith.constant 0 : index
      %c0_135 = arith.constant 0 : index
      %240 = vector.load %arg12[%c0_134, %c0_135] : memref<256x128xbf16, #tpu.memory_space<vmem>>, vector<128x128xbf16>
      tpu.vector_store %arg12[%c0_134, %c0_135], %239 {strides = array<i32>} : memref<256x128xbf16, #tpu.memory_space<vmem>>, vector<128x128xbf16>,
    } else {
    }
    %c1_i32_107 = arith.constant 1 : i32
    %174 = arith.cmpi eq, %arg0, %c1_i32_107 : i32
    %175 = arith.extui %174 : i1 to i32
    %c0_i32_108 = arith.constant 0 : i32
    %176 = arith.cmpi ne, %175, %c0_i32_108 : i32
    scf.if %176 {
      %c0_134 = arith.constant 0 : index
      %c0_135 = arith.constant 0 : index
      %239 = vector.load %arg11[%c0_134, %c0_135] : memref<256x128xf32, #tpu.memory_space<vmem>>, vector<128x128xf32>
      tpu.vector_store %arg11[%c0_134, %c0_135], %170 {strides = array<i32>} : memref<256x128xf32, #tpu.memory_space<vmem>>, vector<128x128xf32>,
    } else {
    }
    %177 = tpu.iota {dimensions = array<i32: 0>} : vector<128x1xi32>
    %c16_i32 = arith.constant 16 : i32
    %178 = vector.broadcast %c16_i32 : i32 to vector<128x1xi32>
    %179 = arith.cmpi slt, %177, %178 : vector<128x1xi32>
    %180 = arith.extui %179 : vector<128x1xi1> to vector<128x1xi32>
    %181 = arith.sitofp %180 : vector<128x1xi32> to vector<128x1xf32>
    %c0_109 = arith.constant 0 : index
    %c0_110 = arith.constant 0 : index
    %c0_111 = arith.constant 0 : index
    %182 = vector.load %arg16[%c0_109, %c0_110, %c0_111] : memref<3x128x128xf32, #tpu.memory_space<vmem>>, vector<1x128x128xf32>
    %183 = vector.shape_cast %182 : vector<1x128x128xf32> to vector<128x128xf32>
    %184 = arith.truncf %183 : vector<128x128xf32> to vector<128x128xbf16>
    %cst_112 = arith.constant dense<0.000000e+00> : vector<128x128xf32>
    %185 = tpu.matmul %184, %136, %cst_112 {dimension_numbers = #tpu.dot_dimension_numbers<[1], [0], [0], [1], [0, 0, 1, 1], [], []>} : vector<128x128xbf16>, vector<128x128xbf16>, vector<128x128xf32> -> vector<128x128xf32>
    %186 = vector.broadcast %138 : vector<1x128xf32> to vector<128x128xf32>
    %187 = arith.addf %185, %186 : vector<128x128xf32>
    %188 = math.tanh %187 : vector<128x128xf32>
    %189 = vector.broadcast %181 : vector<128x1xf32> to vector<128x128xf32>
    %190 = arith.mulf %189, %188 : vector<128x128xf32>
    %cst_113 = arith.constant dense<0.000000e+00> : vector<128xf32>
    %191 = vector.multi_reduction <add>, %190, %cst_113 [0] : vector<128x128xf32> to vector<128xf32>
    %192 = vector.shape_cast %191 : vector<128xf32> to vector<1x128xf32>
    %cst_114 = arith.constant 6.250000e-02 : f32
    %193 = vector.broadcast %cst_114 : f32 to vector<1x128xf32>
    %194 = arith.mulf %192, %193 : vector<1x128xf32>
    %195 = arith.mulf %140, %194 : vector<1x128xf32>
    %cst_115 = arith.constant dense<0.000000e+00> : vector<1xf32>
    %196 = vector.multi_reduction <add>, %195, %cst_115 [1] : vector<1x128xf32> to vector<1xf32>
    %197 = vector.shape_cast %196 : vector<1xf32> to vector<1x1xf32>
    %c2_116 = arith.constant 2 : index
    %c0_117 = arith.constant 0 : index
    %c0_118 = arith.constant 0 : index
    %198 = vector.load %arg16[%c2_116, %c0_117, %c0_118] : memref<3x128x128xf32, #tpu.memory_space<vmem>>, vector<1x128x128xf32>
    %199 = vector.shape_cast %198 : vector<1x128x128xf32> to vector<128x128xf32>
    %200 = arith.truncf %199 : vector<128x128xf32> to vector<128x128xbf16>
    %cst_119 = arith.constant dense<0.000000e+00> : vector<128x128xf32>
    %201 = tpu.matmul %200, %136, %cst_119 {dimension_numbers = #tpu.dot_dimension_numbers<[1], [0], [0], [1], [0, 0, 1, 1], [], []>} : vector<128x128xbf16>, vector<128x128xbf16>, vector<128x128xf32> -> vector<128x128xf32>
    %202 = vector.broadcast %138 : vector<1x128xf32> to vector<128x128xf32>
    %203 = arith.addf %201, %202 : vector<128x128xf32>
    %204 = math.tanh %203 : vector<128x128xf32>
    %205 = vector.broadcast %181 : vector<128x1xf32> to vector<128x128xf32>
    %206 = arith.mulf %205, %204 : vector<128x128xf32>
    %cst_120 = arith.constant dense<0.000000e+00> : vector<128xf32>
    %207 = vector.multi_reduction <add>, %206, %cst_120 [0] : vector<128x128xf32> to vector<128xf32>
    %208 = vector.shape_cast %207 : vector<128xf32> to vector<1x128xf32>
    %cst_121 = arith.constant 6.250000e-02 : f32
    %209 = vector.broadcast %cst_121 : f32 to vector<1x128xf32>
    %210 = arith.mulf %208, %209 : vector<1x128xf32>
    %211 = arith.mulf %140, %210 : vector<1x128xf32>
    %cst_122 = arith.constant dense<0.000000e+00> : vector<1xf32>
    %212 = vector.multi_reduction <add>, %211, %cst_122 [1] : vector<1x128xf32> to vector<1xf32>
    %213 = vector.shape_cast %212 : vector<1xf32> to vector<1x1xf32>
    %214 = arith.maximumf %197, %213 : vector<1x1xf32>
    %215 = arith.subf %197, %214 : vector<1x1xf32>
    %216 = math.exp %215 : vector<1x1xf32>
    %217 = arith.subf %213, %214 : vector<1x1xf32>
    %218 = math.exp %217 : vector<1x1xf32>
    %219 = arith.addf %216, %218 : vector<1x1xf32>
    %220 = arith.divf %216, %219 : vector<1x1xf32>
    %c0_123 = arith.constant 0 : index
    %c0_124 = arith.constant 0 : index
    %c0_125 = arith.constant 0 : index
    %221 = vector.load %arg16[%c0_123, %c0_124, %c0_125] : memref<3x128x128xf32, #tpu.memory_space<vmem>>, vector<1x128x128xf32>
    %222 = vector.shape_cast %221 : vector<1x128x128xf32> to vector<128x128xf32>
    %223 = vector.broadcast %220 : vector<1x1xf32> to vector<128x128xf32>
    %224 = arith.mulf %223, %222 : vector<128x128xf32>
    %225 = arith.divf %218, %219 : vector<1x1xf32>
    %c2_126 = arith.constant 2 : index
    %c0_127 = arith.constant 0 : index
    %c0_128 = arith.constant 0 : index
    %226 = vector.load %arg16[%c2_126, %c0_127, %c0_128] : memref<3x128x128xf32, #tpu.memory_space<vmem>>, vector<1x128x128xf32>
    %227 = vector.shape_cast %226 : vector<1x128x128xf32> to vector<128x128xf32>
    %228 = vector.broadcast %225 : vector<1x1xf32> to vector<128x128xf32>
    %229 = arith.mulf %228, %227 : vector<128x128xf32>
    %230 = arith.addf %224, %229 : vector<128x128xf32>
    %cst_129 = arith.constant 0.000000e+00 : f32
    %231 = vector.broadcast %cst_129 : f32 to vector<128x128xf32>
    %232 = arith.maximumf %230, %231 : vector<128x128xf32>
    %c1_i32_130 = arith.constant 1 : i32
    %233 = arith.cmpi slt, %arg0, %c1_i32_130 : i32
    %234 = arith.extui %233 : i1 to i32
    %c0_i32_131 = arith.constant 0 : i32
    %235 = arith.cmpi ne, %234, %c0_i32_131 : i32
    scf.if %235 {
      %239 = arith.truncf %232 : vector<128x128xf32> to vector<128x128xbf16>
      %c128_134 = arith.constant 128 : index
      %c0_135 = arith.constant 0 : index
      %240 = vector.load %arg12[%c128_134, %c0_135] : memref<256x128xbf16, #tpu.memory_space<vmem>>, vector<128x128xbf16>
      tpu.vector_store %arg12[%c128_134, %c0_135], %239 {strides = array<i32>} : memref<256x128xbf16, #tpu.memory_space<vmem>>, vector<128x128xbf16>,
    } else {
    }
    %c1_i32_132 = arith.constant 1 : i32
    %236 = arith.cmpi eq, %arg0, %c1_i32_132 : i32
    %237 = arith.extui %236 : i1 to i32
    %c0_i32_133 = arith.constant 0 : i32
    %238 = arith.cmpi ne, %237, %c0_i32_133 : i32
    scf.if %238 {
      %c128_134 = arith.constant 128 : index
      %c0_135 = arith.constant 0 : index
      %239 = vector.load %arg11[%c128_134, %c0_135] : memref<256x128xf32, #tpu.memory_space<vmem>>, vector<128x128xf32>
      tpu.vector_store %arg11[%c128_134, %c0_135], %232 {strides = array<i32>} : memref<256x128xf32, #tpu.memory_space<vmem>>, vector<128x128xf32>,
    } else {
    }
    return
  }
  func.func @transform_0(%arg0: i32) -> (i32, i32) {
    %c0_i32 = arith.constant 0 : i32
    %c0_i32_0 = arith.constant 0 : i32
    %c0_i32_1 = arith.constant 0 : i32
    return %c0_i32, %c0_i32_0 : i32, i32
  }
  func.func @transform_1(%arg0: i32) -> (i32, i32, i32, i32) {
    %c0_i32 = arith.constant 0 : i32
    %c0_i32_0 = arith.constant 0 : i32
    %c0_i32_1 = arith.constant 0 : i32
    %c0_i32_2 = arith.constant 0 : i32
    return %arg0, %c0_i32, %c0_i32_0, %c0_i32_1 : i32, i32, i32, i32
  }
  func.func @transform_2(%arg0: i32) -> (i32, i32, i32, i32) {
    %c0_i32 = arith.constant 0 : i32
    %c0_i32_0 = arith.constant 0 : i32
    %c0_i32_1 = arith.constant 0 : i32
    %c0_i32_2 = arith.constant 0 : i32
    return %arg0, %c0_i32, %c0_i32_0, %c0_i32_1 : i32, i32, i32, i32
  }
  func.func @transform_3(%arg0: i32) -> (i32, i32, i32) {
    %c0_i32 = arith.constant 0 : i32
    %c0_i32_0 = arith.constant 0 : i32
    %c0_i32_1 = arith.constant 0 : i32
    return %arg0, %c0_i32, %c0_i32_0 : i32, i32, i32
  }
  func.func @transform_4(%arg0: i32) -> (i32, i32) {
    %c0_i32 = arith.constant 0 : i32
    %c0_i32_0 = arith.constant 0 : i32
    %c0_i32_1 = arith.constant 0 : i32
    return %c0_i32, %c0_i32_0 : i32, i32
  }
  func.func @transform_5(%arg0: i32) -> (i32, i32) {
    %c0_i32 = arith.constant 0 : i32
    %c0_i32_0 = arith.constant 0 : i32
    %c0_i32_1 = arith.constant 0 : i32
    return %c0_i32, %c0_i32_0 : i32, i32
  }
  func.func @transform_6(%arg0: i32) -> (i32, i32) {
    %c0_i32 = arith.constant 0 : i32
    %c0_i32_0 = arith.constant 0 : i32
    %c0_i32_1 = arith.constant 0 : i32
    return %c0_i32, %c0_i32_0 : i32, i32
  }
  func.func @transform_7(%arg0: i32) -> (i32, i32, i32) {
    %c0_i32 = arith.constant 0 : i32
    %c0_i32_0 = arith.constant 0 : i32
    %c0_i32_1 = arith.constant 0 : i32
    return %arg0, %c0_i32, %c0_i32_0 : i32, i32, i32
  }
  func.func @transform_8(%arg0: i32) -> (i32, i32, i32) {
    %c0_i32 = arith.constant 0 : i32
    %c0_i32_0 = arith.constant 0 : i32
    %c0_i32_1 = arith.constant 0 : i32
    return %arg0, %c0_i32, %c0_i32_0 : i32, i32, i32
  }
  func.func @transform_9(%arg0: i32) -> (i32, i32, i32) {
    %c0_i32 = arith.constant 0 : i32
    %c0_i32_0 = arith.constant 0 : i32
    %c0_i32_1 = arith.constant 0 : i32
    return %arg0, %c0_i32, %c0_i32_0 : i32, i32, i32
  }
  func.func @transform_10(%arg0: i32) -> (i32, i32) {
    %c0_i32 = arith.constant 0 : i32
    %c0_i32_0 = arith.constant 0 : i32
    %c0_i32_1 = arith.constant 0 : i32
    return %c0_i32, %c0_i32_0 : i32, i32
  }
}

</mosaic_0001>

<llo_original>
// kernel: tpu_custom_call.1
$region0: #{tpu_custom_call.1}
  #allocation0 [shape = 'u32[]', space=smem, size = 0x4, offset = 0x4, fixed_abs, tag = 'smem constant byte address 0x4 - core index']
  #allocation1 [shape = 'u32[144,128]{1,0:T(1,128)}', space=vmem, size = 0x12000, scoped, tag = 'internal scratch']
  #allocation2 [shape = 'bf16[256,128]{1,0:T(16,128)(2,1)}', space=vmem, size = 0x10000, scoped, tag = 'scratch operand']
  #allocation3 [shape = 'bf16[256,128]{1,0:T(16,128)(2,1)}', space=vmem, size = 0x10000, scoped, tag = 'scratch operand']
  #allocation4 [shape = 'f32[256,128]{1,0:T(8,128)}', space=vmem, size = 0x20000, scoped, tag = 'scratch operand']
  #allocation5 [shape = 'f32[128,256]{1,0:T(8,128)}', space=vmem, size = 0x20000, scoped, tag = 'scratch operand']
  #allocation6 [shape = 'f32[3,128,128]{2,1,0:T(8,128)}', space=vmem, size = 0x30000, scoped, tag = 'scratch operand']
  %s0 = inlined_call_operand.hbm [shape: bf16[256,128], index: 0, kind: input, shape index: {}]
  %s1 = inlined_call_operand.hbm [shape: bf16[2,2,128,128], index: 1, kind: input, shape index: {}]
  %s2 = inlined_call_operand.hbm [shape: f32[2,2,8,128], index: 2, kind: input, shape index: {}]
  %s3 = inlined_call_operand.hbm [shape: bf16[2,128,128], index: 3, kind: input, shape index: {}]
  %s4 = inlined_call_operand.hbm [shape: s8[128,128], index: 4, kind: input, shape index: {}]
  %s5 = inlined_call_operand.hbm [shape: s8[128,128], index: 5, kind: input, shape index: {}]
  %s6 = inlined_call_operand.hbm [shape: s8[128,128], index: 6, kind: input, shape index: {}]
  %s7 = inlined_call_operand.hbm [shape: bf16[2,128,128], index: 7, kind: input, shape index: {}]
  %s8 = inlined_call_operand.vmem [shape: f32[2,8,128], index: 8, kind: input, shape index: {}]
  %s9 = inlined_call_operand.vmem [shape: f32[2,8,128], index: 9, kind: input, shape index: {}]
  %s10 = inlined_call_operand.hbm [shape: f32[256,128], index: 10, kind: output, shape index: {}]
  %s11 = sld [smem:[#allocation0]]
  $region125: #{tpu_custom_call.1} parent=0
    _
  %s13 = ssub.s32 1, %s11
  %s14 = scalar_select 0, %s13, %s11
  $region1: #{tpu_custom_call.1} parent=0
    #allocation7 [shape = 'u8[65536]{0}', space=vmem, size = 0x10000, scoped, tag = 'input window, operand 0, single buffered']
    #allocation8 [shape = 's32[2]{0}', space=sflag, size = 0x8, scoped, tag = 'scoped memory for tpu_custom_call.1']
    #allocation9 [shape = 's32[2]{0}', space=sflag, size = 0x8, scoped, tag = 'scoped memory for tpu_custom_call.1']
    #allocation10 [shape = 'u8[131072]{0}', space=vmem, size = 0x20000, scoped, tag = 'input window, operand 1']
    #allocation11 [shape = 's32[2]{0}', space=sflag, size = 0x8, scoped, tag = 'scoped memory for tpu_custom_call.1']
    #allocation12 [shape = 'u8[16384]{0}', space=vmem, size = 0x4000, scoped, tag = 'input window, operand 2']
    #allocation13 [shape = 'u8[65536]{0}', space=vmem, size = 0x10000, scoped, tag = 'input window, operand 3']
    #allocation14 [shape = 's32[2]{0}', space=sflag, size = 0x8, scoped, tag = 'scoped memory for tpu_custom_call.1']
    #allocation15 [shape = 'u8[16384]{0}', space=vmem, size = 0x4000, scoped, tag = 'input window, operand 4, single buffered']
    #allocation16 [shape = 'u8[16384]{0}', space=vmem, size = 0x4000, scoped, tag = 'input window, operand 5, single buffered']
    #allocation17 [shape = 's32[1]{0}', space=sflag, size = 0x4, scoped, tag = 'scoped memory for tpu_custom_call.1']
    #allocation18 [shape = 'u8[16384]{0}', space=vmem, size = 0x4000, scoped, tag = 'input window, operand 6, single buffered']
    #allocation19 [shape = 'u8[65536]{0}', space=vmem, size = 0x10000, scoped, tag = 'input window, operand 7']
    #allocation20 [shape = 's32[2]{0}', space=sflag, size = 0x8, scoped, tag = 'scoped memory for tpu_custom_call.1']
    #allocation21 [shape = 'u8[131072]{0}', space=vmem, size = 0x20000, scoped, tag = 'output window, operand 0, single buffered']
    %15 = vsyncpa [#allocation8], 0
    %16 = vsyncpa [#allocation11], 0
    %s17 = scalar_lea.sflag [#allocation11], 1
    %18 = vsyncpa %s17, 0
    %19 = vsyncpa [#allocation14], 0
    %s20 = scalar_lea.sflag [#allocation14], 1
    %21 = vsyncpa %s20, 0
    %22 = vsyncpa [#allocation17], 0
    %23 = vsyncpa [#allocation20], 0
    %s24 = scalar_lea.sflag [#allocation20], 1
    %25 = vsyncpa %s24, 0
    %26 = vsyncpa [#allocation9], 0
    loop: start=0, step=1, limit=4
    $region2: #{tpu_custom_call.1} parent=1 // loop_pre_header
      _
    $region3: #{tpu_custom_call.1} parent=1 // loop_header
      %s28 = sphi 0, %s32
      %p29 = scmp.ge.s32.totalorder %s28, 4
      %s36 = sphi 0, %s36
      %s38 = sphi 0, %s36
      %s39 = sphi 0, %s38
      %s53 = sphi 0, %s39
      %s59 = sphi 0, %s61
      %s62 = sphi 0, %s59
      %s63 = sphi 0, %s62
      %s79 = sphi 0, %s63
      %s85 = sphi 0, %s87
      %s88 = sphi 0, %s85
      %s89 = sphi 0, %s88
      %s105 = sphi 0, %s89
      %s111 = sphi 0, %s113
      %s114 = sphi 0, %s111
      %s115 = sphi 0, %s114
      %s131 = sphi 0, %s115
      %s135 = sphi 0, %s135
      %s137 = sphi 0, %s135
      %s138 = sphi 0, %s137
      %s152 = sphi 0, %s138
      %s156 = sphi 0, %s156
      %s158 = sphi 0, %s156
      %s159 = sphi 0, %s158
      %s173 = sphi 0, %s159
      %s177 = sphi 0, %s177
      %s179 = sphi 0, %s177
      %s180 = sphi 0, %s179
      %s194 = sphi 0, %s180
      %s200 = sphi 0, %s202
      %s203 = sphi 0, %s200
      %s204 = sphi 0, %s203
      %s220 = sphi 0, %s204
      %s226 = sphi 0, %s228
      %s229 = sphi 0, %s226
      %s230 = sphi 0, %s229
      %s246 = sphi 0, %s230
      %s252 = sphi 0, %s254
      %s255 = sphi 0, %s252
      %s256 = sphi 0, %s255
      %s272 = sphi 0, %s256
      %s276 = sphi 0, %s276
      %s278 = sphi 0, %s276
      %s279 = sphi 0, %s278
      %s293 = sphi 0, %s279
    $region4: #{tpu_custom_call.1} parent=1 // loop_header_branch
      %31 = sbr.rel (%p29) target = $region8
    $region5: #{tpu_custom_call.1} parent=1 // loop_body
      %s33 = ssub.s32 %s28, 1
      %s34 = ssub.s32 %s28, 2
      %s35 = sadd.s32 %s28, 1
      %s37 = sadd.s32 %s36, 1
      %p40 = scmp.eq.s32.totalorder %s28, 1
      %p41 = scmp.ne.s32.totalorder %s36, %s38
      %p42 = scmp.eq.s32.totalorder %s28, 0
      %p43 = por %p41, %p42
      %p44 = scmp.ne.s32.totalorder %s36, %s38
      %p45 = scmp.eq.s32.totalorder %s33, 1
      %p46 = por %p44, %p45
      %p47 = scmp.ne.s32.totalorder %s38, %s39
      %p48 = scmp.eq.s32.totalorder %s33, 0
      %p49 = por %p47, %p48
      %p50 = scmp.ne.s32.totalorder %s38, %s39
      %p51 = scmp.eq.s32.totalorder %s34, 1
      %p52 = por %p50, %p51
      %p54 = scmp.ne.s32.totalorder %s39, %s53
      %p55 = scmp.eq.s32.totalorder %s34, 0
      %p56 = por %p54, %p55
      %s57 = ssub.s32 %s28, %s35
      %p58 = scmp.eq.s32.totalorder %s57, 0
      %s60 = sadd.s32 %s59, 1
      %s61 = scalar_select %p58, %s59, %s60
      %p64 = pneg %p58
      %p65 = scmp.eq.s32.totalorder %s28, 1
      %p66 = por %p64, %p65
      %p67 = scmp.ne.s32.totalorder %s59, %s62
      %p68 = scmp.eq.s32.totalorder %s28, 0
      %p69 = por %p67, %p68
      %p70 = scmp.ne.s32.totalorder %s59, %s62
      %p71 = scmp.eq.s32.totalorder %s33, 1
      %p72 = por %p70, %p71
      %p73 = scmp.ne.s32.totalorder %s62, %s63
      %p74 = scmp.eq.s32.totalorder %s33, 0
      %p75 = por %p73, %p74
      %p76 = scmp.ne.s32.totalorder %s62, %s63
      %p77 = scmp.eq.s32.totalorder %s34, 1
      %p78 = por %p76, %p77
      %p80 = scmp.ne.s32.totalorder %s63, %s79
      %p81 = scmp.eq.s32.totalorder %s34, 0
      %p82 = por %p80, %p81
      %s83 = ssub.s32 %s28, %s35
      %p84 = scmp.eq.s32.totalorder %s83, 0
      %s86 = sadd.s32 %s85, 1
      %s87 = scalar_select %p84, %s85, %s86
      %p90 = pneg %p84
      %p91 = scmp.eq.s32.totalorder %s28, 1
      %p92 = por %p90, %p91
      %p93 = scmp.ne.s32.totalorder %s85, %s88
      %p94 = scmp.eq.s32.totalorder %s28, 0
      %p95 = por %p93, %p94
      %p96 = scmp.ne.s32.totalorder %s85, %s88
      %p97 = scmp.eq.s32.totalorder %s33, 1
      %p98 = por %p96, %p97
      %p99 = scmp.ne.s32.totalorder %s88, %s89
      %p100 = scmp.eq.s32.totalorder %s33, 0
      %p101 = por %p99, %p100
      %p102 = scmp.ne.s32.totalorder %s88, %s89
      %p103 = scmp.eq.s32.totalorder %s34, 1
      %p104 = por %p102, %p103
      %p106 = scmp.ne.s32.totalorder %s89, %s105
      %p107 = scmp.eq.s32.totalorder %s34, 0
      %p108 = por %p106, %p107
      %s109 = ssub.s32 %s28, %s35
      %p110 = scmp.eq.s32.totalorder %s109, 0
      %s112 = sadd.s32 %s111, 1
      %s113 = scalar_select %p110, %s111, %s112
      %p116 = pneg %p110
      %p117 = scmp.eq.s32.totalorder %s28, 1
      %p118 = por %p116, %p117
      %p119 = scmp.ne.s32.totalorder %s111, %s114
      %p120 = scmp.eq.s32.totalorder %s28, 0
      %p121 = por %p119, %p120
      %p122 = scmp.ne.s32.totalorder %s111, %s114
      %p123 = scmp.eq.s32.totalorder %s33, 1
      %p124 = por %p122, %p123
      %p125 = scmp.ne.s32.totalorder %s114, %s115
      %p126 = scmp.eq.s32.totalorder %s33, 0
      %p127 = por %p125, %p126
      %p128 = scmp.ne.s32.totalorder %s114, %s115
      %p129 = scmp.eq.s32.totalorder %s34, 1
      %p130 = por %p128, %p129
      %p132 = scmp.ne.s32.totalorder %s115, %s131
      %p133 = scmp.eq.s32.totalorder %s34, 0
      %p134 = por %p132, %p133
      %s136 = sadd.s32 %s135, 1
      %p139 = scmp.eq.s32.totalorder %s28, 1
      %p140 = scmp.ne.s32.totalorder %s135, %s137
      %p141 = scmp.eq.s32.totalorder %s28, 0
      %p142 = por %p140, %p141
      %p143 = scmp.ne.s32.totalorder %s135, %s137
      %p144 = scmp.eq.s32.totalorder %s33, 1
      %p145 = por %p143, %p144
      %p146 = scmp.ne.s32.totalorder %s137, %s138
      %p147 = scmp.eq.s32.totalorder %s33, 0
      %p148 = por %p146, %p147
      %p149 = scmp.ne.s32.totalorder %s137, %s138
      %p150 = scmp.eq.s32.totalorder %s34, 1
      %p151 = por %p149, %p150
      %p153 = scmp.ne.s32.totalorder %s138, %s152
      %p154 = scmp.eq.s32.totalorder %s34, 0
      %p155 = por %p153, %p154
      %s157 = sadd.s32 %s156, 1
      %p160 = scmp.eq.s32.totalorder %s28, 1
      %p161 = scmp.ne.s32.totalorder %s156, %s158
      %p162 = scmp.eq.s32.totalorder %s28, 0
      %p163 = por %p161, %p162
      %p164 = scmp.ne.s32.totalorder %s156, %s158
      %p165 = scmp.eq.s32.totalorder %s33, 1
      %p166 = por %p164, %p165
      %p167 = scmp.ne.s32.totalorder %s158, %s159
      %p168 = scmp.eq.s32.totalorder %s33, 0
      %p169 = por %p167, %p168
      %p170 = scmp.ne.s32.totalorder %s158, %s159
      %p171 = scmp.eq.s32.totalorder %s34, 1
      %p172 = por %p170, %p171
      %p174 = scmp.ne.s32.totalorder %s159, %s173
      %p175 = scmp.eq.s32.totalorder %s34, 0
      %p176 = por %p174, %p175
      %s178 = sadd.s32 %s177, 1
      %p181 = scmp.eq.s32.totalorder %s28, 1
      %p182 = scmp.ne.s32.totalorder %s177, %s179
      %p183 = scmp.eq.s32.totalorder %s28, 0
      %p184 = por %p182, %p183
      %p185 = scmp.ne.s32.totalorder %s177, %s179
      %p186 = scmp.eq.s32.totalorder %s33, 1
      %p187 = por %p185, %p186
      %p188 = scmp.ne.s32.totalorder %s179, %s180
      %p189 = scmp.eq.s32.totalorder %s33, 0
      %p190 = por %p188, %p189
      %p191 = scmp.ne.s32.totalorder %s179, %s180
      %p192 = scmp.eq.s32.totalorder %s34, 1
      %p193 = por %p191, %p192
      %p195 = scmp.ne.s32.totalorder %s180, %s194
      %p196 = scmp.eq.s32.totalorder %s34, 0
      %p197 = por %p195, %p196
      %s198 = ssub.s32 %s28, %s35
      %p199 = scmp.eq.s32.totalorder %s198, 0
      %s201 = sadd.s32 %s200, 1
      %s202 = scalar_select %p199, %s200, %s201
      %p205 = pneg %p199
      %p206 = scmp.eq.s32.totalorder %s28, 1
      %p207 = por %p205, %p206
      %p208 = scmp.ne.s32.totalorder %s200, %s203
      %p209 = scmp.eq.s32.totalorder %s28, 0
      %p210 = por %p208, %p209
      %p211 = scmp.ne.s32.totalorder %s200, %s203
      %p212 = scmp.eq.s32.totalorder %s33, 1
      %p213 = por %p211, %p212
      %p214 = scmp.ne.s32.totalorder %s203, %s204
      %p215 = scmp.eq.s32.totalorder %s33, 0
      %p216 = por %p214, %p215
      %p217 = scmp.ne.s32.totalorder %s203, %s204
      %p218 = scmp.eq.s32.totalorder %s34, 1
      %p219 = por %p217, %p218
      %p221 = scmp.ne.s32.totalorder %s204, %s220
      %p222 = scmp.eq.s32.totalorder %s34, 0
      %p223 = por %p221, %p222
      %s224 = ssub.s32 %s28, %s35
      %p225 = scmp.eq.s32.totalorder %s224, 0
      %s227 = sadd.s32 %s226, 1
      %s228 = scalar_select %p225, %s226, %s227
      %p231 = pneg %p225
      %p232 = scmp.eq.s32.totalorder %s28, 1
      %p233 = por %p231, %p232
      %p234 = scmp.ne.s32.totalorder %s226, %s229
      %p235 = scmp.eq.s32.totalorder %s28, 0
      %p236 = por %p234, %p235
      %p237 = scmp.ne.s32.totalorder %s226, %s229
      %p238 = scmp.eq.s32.totalorder %s33, 1
      %p239 = por %p237, %p238
      %p240 = scmp.ne.s32.totalorder %s229, %s230
      %p241 = scmp.eq.s32.totalorder %s33, 0
      %p242 = por %p240, %p241
      %p243 = scmp.ne.s32.totalorder %s229, %s230
      %p244 = scmp.eq.s32.totalorder %s34, 1
      %p245 = por %p243, %p244
      %p247 = scmp.ne.s32.totalorder %s230, %s246
      %p248 = scmp.eq.s32.totalorder %s34, 0
      %p249 = por %p247, %p248
      %s250 = ssub.s32 %s28, %s35
      %p251 = scmp.eq.s32.totalorder %s250, 0
      %s253 = sadd.s32 %s252, 1
      %s254 = scalar_select %p251, %s252, %s253
      %p257 = pneg %p251
      %p258 = scmp.eq.s32.totalorder %s28, 1
      %p259 = por %p257, %p258
      %p260 = scmp.ne.s32.totalorder %s252, %s255
      %p261 = scmp.eq.s32.totalorder %s28, 0
      %p262 = por %p260, %p261
      %p263 = scmp.ne.s32.totalorder %s252, %s255
      %p264 = scmp.eq.s32.totalorder %s33, 1
      %p265 = por %p263, %p264
      %p266 = scmp.ne.s32.totalorder %s255, %s256
      %p267 = scmp.eq.s32.totalorder %s33, 0
      %p268 = por %p266, %p267
      %p269 = scmp.ne.s32.totalorder %s255, %s256
      %p270 = scmp.eq.s32.totalorder %s34, 1
      %p271 = por %p269, %p270
      %p273 = scmp.ne.s32.totalorder %s256, %s272
      %p274 = scmp.eq.s32.totalorder %s34, 0
      %p275 = por %p273, %p274
      %s277 = sadd.s32 %s276, 1
      %p280 = scmp.eq.s32.totalorder %s28, 1
      %p281 = scmp.ne.s32.totalorder %s276, %s278
      %p282 = scmp.eq.s32.totalorder %s28, 0
      %p283 = por %p281, %p282
      %p284 = scmp.ne.s32.totalorder %s276, %s278
      %p285 = scmp.eq.s32.totalorder %s33, 1
      %p286 = por %p284, %p285
      %p287 = scmp.ne.s32.totalorder %s278, %s279
      %p288 = scmp.eq.s32.totalorder %s33, 0
      %p289 = por %p287, %p288
      %p290 = scmp.ne.s32.totalorder %s278, %s279
      %p291 = scmp.eq.s32.totalorder %s34, 1
      %p292 = por %p290, %p291
      %p294 = scmp.ne.s32.totalorder %s279, %s293
      %p295 = scmp.eq.s32.totalorder %s34, 0
      %p296 = por %p294, %p295
      %p297 = scmp.le.s32.totalorder 1, %s28
      %p298 = scmp.lt.s32.totalorder %s28, 3
      %p299 = pnand %p297, %p298
      %p300 = pneg %p299
      // Predicated region
      $region9: #{tpu_custom_call.1} parent=5 // pred_check
        _
      $region10: #{tpu_custom_call.1} parent=5 // pred_check_branch
        %302 = sbr.rel (%p299) target = $region12
      $region11: #{tpu_custom_call.1} parent=5 // pred_region
        %s303 = ssub.s32 %s28, 1
        // Predicated region
        $region13: #{tpu_custom_call.1} parent=11 // pred_check
          %p304 = pneg %p49
        $region14: #{tpu_custom_call.1} parent=11 // pred_check_branch
          %306 = sbr.rel (%p304) target = $region16
        $region15: #{tpu_custom_call.1} parent=11 // pred_region
          %s308 = ssub.s32 2048, 2048
          %309 = vsyncadd [#allocation8], %s308
          %s310 = sshll.u32 [#allocation7], 4
          %s311 = int_to_ptr.vmem [resolvable:$true] %s310
          %316 = dma.hbm_to_vmem [thread:$0]  %s0, 2048, %s311, [#allocation8], 64, 64, 4
        $region16: #{tpu_custom_call.1} parent=11 // pred_fallthru
          _
        // Predicated region
        $region17: #{tpu_custom_call.1} parent=11 // pred_check
          %p317 = pneg %p148
        $region18: #{tpu_custom_call.1} parent=11 // pred_check_branch
          %319 = sbr.rel (%p317) target = $region20
        $region19: #{tpu_custom_call.1} parent=11 // pred_region
          %s321 = ssub.s32 512, 512
          %322 = vsyncadd [#allocation14], %s321
          %s323 = sshll.u32 [#allocation15], 4
          %s324 = int_to_ptr.vmem [resolvable:$true] %s323
          %329 = dma.hbm_to_vmem [thread:$0]  %s4, 512, %s324, [#allocation14], 128, 128, 8
        $region20: #{tpu_custom_call.1} parent=11 // pred_fallthru
          _
        // Predicated region
        $region21: #{tpu_custom_call.1} parent=11 // pred_check
          %p330 = pneg %p169
        $region22: #{tpu_custom_call.1} parent=11 // pred_check_branch
          %332 = sbr.rel (%p330) target = $region24
        $region23: #{tpu_custom_call.1} parent=11 // pred_region
          %s334 = ssub.s32 512, 512
          %335 = vsyncadd [#allocation17], %s334
          %s336 = sshll.u32 [#allocation16], 4
          %s337 = int_to_ptr.vmem [resolvable:$true] %s336
          %342 = dma.hbm_to_vmem [thread:$0]  %s5, 512, %s337, [#allocation17], 128, 128, 8
        $region24: #{tpu_custom_call.1} parent=11 // pred_fallthru
          _
        // Predicated region
        $region25: #{tpu_custom_call.1} parent=11 // pred_check
          %p343 = pneg %p190
        $region26: #{tpu_custom_call.1} parent=11 // pred_check_branch
          %345 = sbr.rel (%p343) target = $region28
        $region27: #{tpu_custom_call.1} parent=11 // pred_region
          %s347 = ssub.s32 512, 512
          %348 = vsyncadd [#allocation17], %s347
          %s349 = sshll.u32 [#allocation18], 4
          %s350 = int_to_ptr.vmem [resolvable:$true] %s349
          %355 = dma.hbm_to_vmem [thread:$0]  %s6, 512, %s350, [#allocation17], 128, 128, 8
        $region28: #{tpu_custom_call.1} parent=11 // pred_fallthru
          _
      $region12: #{tpu_custom_call.1} parent=5 // pred_fallthru
        _
      %p356 = scmp.lt.s32.totalorder %s28, 2
      // Predicated region
      $region29: #{tpu_custom_call.1} parent=5 // pred_check
        %p357 = pneg %p356
      $region30: #{tpu_custom_call.1} parent=5 // pred_check_branch
        %359 = sbr.rel (%p357) target = $region32
      $region31: #{tpu_custom_call.1} parent=5 // pred_region
        // Predicated region
        $region33: #{tpu_custom_call.1} parent=31 // pred_check
          %p360 = pneg %p69
        $region34: #{tpu_custom_call.1} parent=31 // pred_check_branch
          %362 = sbr.rel (%p360) target = $region36
        $region35: #{tpu_custom_call.1} parent=31 // pred_region
          %s363 = sand.u32 %s28, 1
          %s364 = scalar_lea.sflag [#allocation11], %s363
          %s365 = sand.u32 %s59, 1
          %s366 = smul.addr %s365, 128
          %s367 = scalar_lea.vmem [#allocation10], %s366
          %s369 = ssub.s32 2048, 2048
          %370 = vsyncadd %s364, %s369
          %s371 = smul.addr %s28, 32
          %s372 = smul.addr %s371, 64
          %s373 = scalar_lea.hbm %s1, %s372
          %s374 = sshll.u32 %s367, 4
          %s375 = int_to_ptr.vmem [resolvable:$true] %s374
          %380 = dma.hbm_to_vmem [thread:$0]  %s373, 2048, %s375, %s364, 64, 64, 4
        $region36: #{tpu_custom_call.1} parent=31 // pred_fallthru
          _
        // Predicated region
        $region37: #{tpu_custom_call.1} parent=31 // pred_check
          %p381 = pneg %p95
        $region38: #{tpu_custom_call.1} parent=31 // pred_check_branch
          %383 = sbr.rel (%p381) target = $region40
        $region39: #{tpu_custom_call.1} parent=31 // pred_region
          %s384 = sand.u32 %s28, 1
          %s385 = scalar_lea.sflag [#allocation11], %s384
          %s386 = sand.u32 %s85, 1
          %s387 = smul.addr %s386, 16
          %s388 = scalar_lea.vmem [#allocation12], %s387
          %s390 = ssub.s32 256, 256
          %391 = vsyncadd %s385, %s390
          %s392 = smul.addr %s28, 2
          %s393 = smul.addr %s392, 128
          %s394 = scalar_lea.hbm %s2, %s393
          %s395 = sshll.u32 %s388, 4
          %s396 = int_to_ptr.vmem [resolvable:$true] %s395
          %401 = dma.hbm_to_vmem [thread:$0]  %s394, 256, %s396, %s385, 128, 128, 8
        $region40: #{tpu_custom_call.1} parent=31 // pred_fallthru
          _
        // Predicated region
        $region41: #{tpu_custom_call.1} parent=31 // pred_check
          %p402 = pneg %p121
        $region42: #{tpu_custom_call.1} parent=31 // pred_check_branch
          %404 = sbr.rel (%p402) target = $region44
        $region43: #{tpu_custom_call.1} parent=31 // pred_region
          %s405 = sand.u32 %s28, 1
          %s406 = scalar_lea.sflag [#allocation14], %s405
          %s407 = sand.u32 %s111, 1
          %s408 = smul.addr %s407, 64
          %s409 = scalar_lea.vmem [#allocation13], %s408
          %s411 = ssub.s32 1024, 1024
          %412 = vsyncadd %s406, %s411
          %s413 = smul.addr %s28, 16
          %s414 = smul.addr %s413, 64
          %s415 = scalar_lea.hbm %s3, %s414
          %s416 = sshll.u32 %s409, 4
          %s417 = int_to_ptr.vmem [resolvable:$true] %s416
          %422 = dma.hbm_to_vmem [thread:$0]  %s415, 1024, %s417, %s406, 64, 64, 4
        $region44: #{tpu_custom_call.1} parent=31 // pred_fallthru
          _
        // Predicated region
        $region45: #{tpu_custom_call.1} parent=31 // pred_check
          %p423 = pneg %p210
        $region46: #{tpu_custom_call.1} parent=31 // pred_check_branch
          %425 = sbr.rel (%p423) target = $region48
        $region47: #{tpu_custom_call.1} parent=31 // pred_region
          %s426 = sand.u32 %s200, 1
          %s427 = scalar_lea.sflag [#allocation20], %s426
          %s428 = sand.u32 %s200, 1
          %s429 = smul.addr %s428, 64
          %s430 = scalar_lea.vmem [#allocation19], %s429
          %s432 = ssub.s32 1024, 1024
          %433 = vsyncadd %s427, %s432
          %s434 = smul.addr %s28, 16
          %s435 = smul.addr %s434, 64
          %s436 = scalar_lea.hbm %s7, %s435
          %s437 = sshll.u32 %s430, 4
          %s438 = int_to_ptr.vmem [resolvable:$true] %s437
          %443 = dma.hbm_to_vmem [thread:$0]  %s436, 1024, %s438, %s427, 64, 64, 4
        $region48: #{tpu_custom_call.1} parent=31 // pred_fallthru
          _
        // Predicated region
        $region49: #{tpu_custom_call.1} parent=31 // pred_check
          %p444 = pneg %p236
        $region50: #{tpu_custom_call.1} parent=31 // pred_check_branch
          %446 = sbr.rel (%p444) target = $region52
        $region51: #{tpu_custom_call.1} parent=31 // pred_region
          %p447 = scmp.lt.s32.totalorder %s28, 1
          %s448 = scalar_select %p447, %s28, 1
          %s449 = smul.addr %s448, 8
          %s450 = scalar_lea.vmem %s8, %s449
        $region52: #{tpu_custom_call.1} parent=31 // pred_fallthru
          _
        // Predicated region
        $region53: #{tpu_custom_call.1} parent=31 // pred_check
          %p451 = pneg %p262
        $region54: #{tpu_custom_call.1} parent=31 // pred_check_branch
          %453 = sbr.rel (%p451) target = $region56
        $region55: #{tpu_custom_call.1} parent=31 // pred_region
          %p454 = scmp.lt.s32.totalorder %s28, 1
          %s455 = scalar_select %p454, %s28, 1
          %s456 = smul.addr %s455, 8
          %s457 = scalar_lea.vmem %s9, %s456
        $region56: #{tpu_custom_call.1} parent=31 // pred_fallthru
          _
      $region32: #{tpu_custom_call.1} parent=5 // pred_fallthru
        _
      %p458 = scmp.le.s32.totalorder 1, %s28
      %p459 = scmp.lt.s32.totalorder %s28, 3
      %p460 = pnand %p458, %p459
      %p461 = pneg %p460
      // Predicated region
      $region57: #{tpu_custom_call.1} parent=5 // pred_check
        _
      $region58: #{tpu_custom_call.1} parent=5 // pred_check_branch
        %463 = sbr.rel (%p460) target = $region60
      $region59: #{tpu_custom_call.1} parent=5 // pred_region
        %s464 = ssub.s32 %s28, 1
        // Predicated region
        $region61: #{tpu_custom_call.1} parent=59 // pred_check
          %p465 = pneg %p49
        $region62: #{tpu_custom_call.1} parent=59 // pred_check_branch
          %467 = sbr.rel (%p465) target = $region64
        $region63: #{tpu_custom_call.1} parent=59 // pred_region
          %468 = dma.done [#allocation8], 2048
        $region64: #{tpu_custom_call.1} parent=59 // pred_fallthru
          _
        %s469 = sand.u32 %s33, 1
        %s470 = scalar_lea.sflag [#allocation11], %s469
        %s471 = sand.u32 %s62, 1
        %s472 = smul.addr %s471, 128
        %s473 = scalar_lea.vmem [#allocation10], %s472
        // Predicated region
        $region65: #{tpu_custom_call.1} parent=59 // pred_check
          %p474 = pneg %p75
        $region66: #{tpu_custom_call.1} parent=59 // pred_check_branch
          %476 = sbr.rel (%p474) target = $region68
        $region67: #{tpu_custom_call.1} parent=59 // pred_region
          %477 = dma.done %s470, 2048
        $region68: #{tpu_custom_call.1} parent=59 // pred_fallthru
          _
        %s478 = sand.u32 %s33, 1
        %s479 = scalar_lea.sflag [#allocation11], %s478
        %s480 = sand.u32 %s88, 1
        %s481 = smul.addr %s480, 16
        %s482 = scalar_lea.vmem [#allocation12], %s481
        // Predicated region
        $region69: #{tpu_custom_call.1} parent=59 // pred_check
          %p483 = pneg %p101
        $region70: #{tpu_custom_call.1} parent=59 // pred_check_branch
          %485 = sbr.rel (%p483) target = $region72
        $region71: #{tpu_custom_call.1} parent=59 // pred_region
          %486 = dma.done %s479, 256
        $region72: #{tpu_custom_call.1} parent=59 // pred_fallthru
          _
        %s487 = sand.u32 %s33, 1
        %s488 = scalar_lea.sflag [#allocation14], %s487
        %s489 = sand.u32 %s114, 1
        %s490 = smul.addr %s489, 64
        %s491 = scalar_lea.vmem [#allocation13], %s490
        // Predicated region
        $region73: #{tpu_custom_call.1} parent=59 // pred_check
          %p492 = pneg %p127
        $region74: #{tpu_custom_call.1} parent=59 // pred_check_branch
          %494 = sbr.rel (%p492) target = $region76
        $region75: #{tpu_custom_call.1} parent=59 // pred_region
          %495 = dma.done %s488, 1024
        $region76: #{tpu_custom_call.1} parent=59 // pred_fallthru
          _
        // Predicated region
        $region77: #{tpu_custom_call.1} parent=59 // pred_check
          %p496 = pneg %p148
        $region78: #{tpu_custom_call.1} parent=59 // pred_check_branch
          %498 = sbr.rel (%p496) target = $region80
        $region79: #{tpu_custom_call.1} parent=59 // pred_region
          %499 = dma.done [#allocation14], 512
        $region80: #{tpu_custom_call.1} parent=59 // pred_fallthru
          _
        // Predicated region
        $region81: #{tpu_custom_call.1} parent=59 // pred_check
          %p500 = pneg %p169
        $region82: #{tpu_custom_call.1} parent=59 // pred_check_branch
          %502 = sbr.rel (%p500) target = $region84
        $region83: #{tpu_custom_call.1} parent=59 // pred_region
          %503 = dma.done [#allocation17], 512
        $region84: #{tpu_custom_call.1} parent=59 // pred_fallthru
          _
        // Predicated region
        $region85: #{tpu_custom_call.1} parent=59 // pred_check
          %p504 = pneg %p190
        $region86: #{tpu_custom_call.1} parent=59 // pred_check_branch
          %506 = sbr.rel (%p504) target = $region88
        $region87: #{tpu_custom_call.1} parent=59 // pred_region
          %507 = dma.done [#allocation17], 512
        $region88: #{tpu_custom_call.1} parent=59 // pred_fallthru
          _
        %s508 = sand.u32 %s203, 1
        %s509 = scalar_lea.sflag [#allocation20], %s508
        %s510 = sand.u32 %s203, 1
        %s511 = smul.addr %s510, 64
        %s512 = scalar_lea.vmem [#allocation19], %s511
        // Predicated region
        $region89: #{tpu_custom_call.1} parent=59 // pred_check
          %p513 = pneg %p216
        $region90: #{tpu_custom_call.1} parent=59 // pred_check_branch
          %515 = sbr.rel (%p513) target = $region92
        $region91: #{tpu_custom_call.1} parent=59 // pred_region
          %516 = dma.done %s509, 1024
        $region92: #{tpu_custom_call.1} parent=59 // pred_fallthru
          _
        %p517 = pneg %p49
        %p518 = pneg %p46
        %s519 = sand.u32 %s33, 1
        %s520 = scalar_lea.sflag [#allocation11], %s519
        %s521 = sand.u32 %s62, 1
        %s522 = smul.addr %s521, 128
        %s523 = scalar_lea.vmem [#allocation10], %s522
        %p524 = pneg %p75
        %p525 = pneg %p72
        %s526 = sand.u32 %s33, 1
        %s527 = scalar_lea.sflag [#allocation11], %s526
        %s528 = sand.u32 %s88, 1
        %s529 = smul.addr %s528, 16
        %s530 = scalar_lea.vmem [#allocation12], %s529
        %p531 = pneg %p101
        %p532 = pneg %p98
        %s533 = sand.u32 %s33, 1
        %s534 = scalar_lea.sflag [#allocation14], %s533
        %s535 = sand.u32 %s114, 1
        %s536 = smul.addr %s535, 64
        %s537 = scalar_lea.vmem [#allocation13], %s536
        %p538 = pneg %p127
        %p539 = pneg %p124
        %p540 = pneg %p148
        %p541 = pneg %p145
        %p542 = pneg %p169
        %p543 = pneg %p166
        %p544 = pneg %p190
        %p545 = pneg %p187
        %s546 = sand.u32 %s203, 1
        %s547 = scalar_lea.sflag [#allocation20], %s546
        %s548 = sand.u32 %s203, 1
        %s549 = smul.addr %s548, 64
        %s550 = scalar_lea.vmem [#allocation19], %s549
        %p551 = pneg %p216
        %p552 = pneg %p213
        %p553 = scmp.lt.s32.totalorder %s33, 1
        %s554 = scalar_select %p553, %s33, 1
        %s555 = smul.addr %s554, 8
        %s556 = scalar_lea.vmem %s8, %s555
        %p557 = pneg %p242
        %p558 = pneg %p239
        %p559 = scmp.lt.s32.totalorder %s33, 1
        %s560 = scalar_select %p559, %s33, 1
        %s561 = smul.addr %s560, 8
        %s562 = scalar_lea.vmem %s9, %s561
        %p563 = pneg %p268
        %p564 = pneg %p265
        %p565 = pneg %p289
        %p566 = pneg %p286
        %p567 = scmp.lt.s32.totalorder %s33, 1
        %s568 = scalar_select %p567, %s33, 1
        %s569 = smul.addr %s568, 8
        %s570 = scalar_lea.vmem %s8, %s569
        %p571 = scmp.lt.s32.totalorder %s33, 1
        %s572 = scalar_select %p571, %s33, 1
        %s573 = smul.addr %s572, 8
        %s574 = scalar_lea.vmem %s9, %s573
        %p576 = scmp.eq.s32.totalorder %s33, 0
        // Predicated region
        $region93: #{tpu_custom_call.1} parent=59 // pred_check
          %p577 = pneg %p576
        $region94: #{tpu_custom_call.1} parent=59 // pred_check_branch
          %579 = sbr.rel (%p577) target = $region96
        $region95: #{tpu_custom_call.1} parent=59 // pred_region
          %v580 = vld [vmem:[#allocation7] sm:$0xf]
          %v581 = vld [vmem:[#allocation7 + $0x4] sm:$0xf]
          %v582 = vld [vmem:[#allocation7 + $0x8] sm:$0xf]
          %v583 = vld [vmem:[#allocation7 + $0xc] sm:$0xf]
          %v584 = vld [vmem:[#allocation7 + $0x10] sm:$0xf]
          %v585 = vld [vmem:[#allocation7 + $0x14] sm:$0xf]
          %v586 = vld [vmem:[#allocation7 + $0x18] sm:$0xf]
          %v587 = vld [vmem:[#allocation7 + $0x1c] sm:$0xf]
          %v588 = vld [vmem:[#allocation7 + $0x20] sm:$0xf]
          %v589 = vld [vmem:[#allocation7 + $0x24] sm:$0xf]
          %v590 = vld [vmem:[#allocation7 + $0x28] sm:$0xf]
          %v591 = vld [vmem:[#allocation7 + $0x2c] sm:$0xf]
          %v592 = vld [vmem:[#allocation7 + $0x30] sm:$0xf]
          %v593 = vld [vmem:[#allocation7 + $0x34] sm:$0xf]
          %v594 = vld [vmem:[#allocation7 + $0x38] sm:$0xf]
          %v595 = vld [vmem:[#allocation7 + $0x3c] sm:$0xf]
          %v596 = vld [vmem:[#allocation7 + $0x40] sm:$0xf]
          %v597 = vld [vmem:[#allocation7 + $0x44] sm:$0xf]
          %v598 = vld [vmem:[#allocation7 + $0x48] sm:$0xf]
          %v599 = vld [vmem:[#allocation7 + $0x4c] sm:$0xf]
          %v600 = vld [vmem:[#allocation7 + $0x50] sm:$0xf]
          %v601 = vld [vmem:[#allocation7 + $0x54] sm:$0xf]
          %v602 = vld [vmem:[#allocation7 + $0x58] sm:$0xf]
          %v603 = vld [vmem:[#allocation7 + $0x5c] sm:$0xf]
          %v604 = vld [vmem:[#allocation7 + $0x60] sm:$0xf]
          %v605 = vld [vmem:[#allocation7 + $0x64] sm:$0xf]
          %v606 = vld [vmem:[#allocation7 + $0x68] sm:$0xf]
          %v607 = vld [vmem:[#allocation7 + $0x6c] sm:$0xf]
          %v608 = vld [vmem:[#allocation7 + $0x70] sm:$0xf]
          %v609 = vld [vmem:[#allocation7 + $0x74] sm:$0xf]
          %v610 = vld [vmem:[#allocation7 + $0x78] sm:$0xf]
          %v611 = vld [vmem:[#allocation7 + $0x7c] sm:$0xf]
          %v644 = vunpack.c.l.b16 %v580
          %v645 = vunpack.c.l.b16 %v581
          %v646 = vunpack.c.l.b16 %v582
          %v647 = vunpack.c.l.b16 %v583
          %v648 = vunpack.c.l.b16 %v584
          %v649 = vunpack.c.l.b16 %v585
          %v650 = vunpack.c.l.b16 %v586
          %v651 = vunpack.c.l.b16 %v587
          %v652 = vunpack.c.l.b16 %v588
          %v653 = vunpack.c.l.b16 %v589
          %v654 = vunpack.c.l.b16 %v590
          %v655 = vunpack.c.l.b16 %v591
          %v656 = vunpack.c.l.b16 %v592
          %v657 = vunpack.c.l.b16 %v593
          %v658 = vunpack.c.l.b16 %v594
          %v659 = vunpack.c.l.b16 %v595
          %v660 = vunpack.c.l.b16 %v596
          %v661 = vunpack.c.l.b16 %v597
          %v662 = vunpack.c.l.b16 %v598
          %v663 = vunpack.c.l.b16 %v599
          %v664 = vunpack.c.l.b16 %v600
          %v665 = vunpack.c.l.b16 %v601
          %v666 = vunpack.c.l.b16 %v602
          %v667 = vunpack.c.l.b16 %v603
          %v668 = vunpack.c.l.b16 %v604
          %v669 = vunpack.c.l.b16 %v605
          %v670 = vunpack.c.l.b16 %v606
          %v671 = vunpack.c.l.b16 %v607
          %v672 = vunpack.c.l.b16 %v608
          %v673 = vunpack.c.l.b16 %v609
          %v674 = vunpack.c.l.b16 %v610
          %v675 = vunpack.c.l.b16 %v611
          %v676 = vpack.c.b16 %v645, %v644
          %v677 = vpack.c.b16 %v647, %v646
          %v678 = vpack.c.b16 %v649, %v648
          %v679 = vpack.c.b16 %v651, %v650
          %v680 = vpack.c.b16 %v653, %v652
          %v681 = vpack.c.b16 %v655, %v654
          %v682 = vpack.c.b16 %v657, %v656
          %v683 = vpack.c.b16 %v659, %v658
          %v684 = vpack.c.b16 %v661, %v660
          %v685 = vpack.c.b16 %v663, %v662
          %v686 = vpack.c.b16 %v665, %v664
          %v687 = vpack.c.b16 %v667, %v666
          %v688 = vpack.c.b16 %v669, %v668
          %v689 = vpack.c.b16 %v671, %v670
          %v690 = vpack.c.b16 %v673, %v672
          %v691 = vpack.c.b16 %v675, %v674
          %708 = vst [vmem:[#allocation2] sm:$0xff] %v676
          %709 = vst [vmem:[#allocation2 + $0x8] sm:$0xff] %v677
          %710 = vst [vmem:[#allocation2 + $0x10] sm:$0xff] %v678
          %711 = vst [vmem:[#allocation2 + $0x18] sm:$0xff] %v679
          %712 = vst [vmem:[#allocation2 + $0x20] sm:$0xff] %v680
          %713 = vst [vmem:[#allocation2 + $0x28] sm:$0xff] %v681
          %714 = vst [vmem:[#allocation2 + $0x30] sm:$0xff] %v682
          %715 = vst [vmem:[#allocation2 + $0x38] sm:$0xff] %v683
          %716 = vst [vmem:[#allocation2 + $0x40] sm:$0xff] %v684
          %717 = vst [vmem:[#allocation2 + $0x48] sm:$0xff] %v685
          %718 = vst [vmem:[#allocation2 + $0x50] sm:$0xff] %v686
          %719 = vst [vmem:[#allocation2 + $0x58] sm:$0xff] %v687
          %720 = vst [vmem:[#allocation2 + $0x60] sm:$0xff] %v688
          %721 = vst [vmem:[#allocation2 + $0x68] sm:$0xff] %v689
          %722 = vst [vmem:[#allocation2 + $0x70] sm:$0xff] %v690
          %723 = vst [vmem:[#allocation2 + $0x78] sm:$0xff] %v691
        $region96: #{tpu_custom_call.1} parent=59 // pred_fallthru
          _
        %v724 = vld [vmem:[#allocation2] sm:$0xff]
        %v725 = vld [vmem:[#allocation2 + $0x8] sm:$0xff]
        %v726 = vld [vmem:[#allocation2 + $0x10] sm:$0xff]
        %v727 = vld [vmem:[#allocation2 + $0x18] sm:$0xff]
        %v728 = vld [vmem:[#allocation2 + $0x20] sm:$0xff]
        %v729 = vld [vmem:[#allocation2 + $0x28] sm:$0xff]
        %v730 = vld [vmem:[#allocation2 + $0x30] sm:$0xff]
        %v731 = vld [vmem:[#allocation2 + $0x38] sm:$0xff]
        %v732 = vld [vmem:[%s473] sm:$0xf]
        %v733 = vld [vmem:[%s473 + $0x4] sm:$0xf]
        %v734 = vld [vmem:[%s473 + $0x8] sm:$0xf]
        %v735 = vld [vmem:[%s473 + $0xc] sm:$0xf]
        %v736 = vld [vmem:[%s473 + $0x10] sm:$0xf]
        %v737 = vld [vmem:[%s473 + $0x14] sm:$0xf]
        %v738 = vld [vmem:[%s473 + $0x18] sm:$0xf]
        %v739 = vld [vmem:[%s473 + $0x1c] sm:$0xf]
        %v740 = vld [vmem:[%s473 + $0x20] sm:$0xf]
        %v741 = vld [vmem:[%s473 + $0x24] sm:$0xf]
        %v742 = vld [vmem:[%s473 + $0x28] sm:$0xf]
        %v743 = vld [vmem:[%s473 + $0x2c] sm:$0xf]
        %v744 = vld [vmem:[%s473 + $0x30] sm:$0xf]
        %v745 = vld [vmem:[%s473 + $0x34] sm:$0xf]
        %v746 = vld [vmem:[%s473 + $0x38] sm:$0xf]
        %v747 = vld [vmem:[%s473 + $0x3c] sm:$0xf]
        %v748 = vld [vmem:[%s482] sm:$0x1]
        %v749 = vlaneseq
        %v750 = vshrl.u32 %v749, 7
        %v751 = vsub.s32 0, %v750
        %v752 = vrot.slane %v748, %v751
        %v769 = vunpack.c.l.b16 %v732
        %v770 = vunpack.c.l.b16 %v733
        %v771 = vunpack.c.l.b16 %v734
        %v772 = vunpack.c.l.b16 %v735
        %v773 = vunpack.c.l.b16 %v736
        %v774 = vunpack.c.l.b16 %v737
        %v775 = vunpack.c.l.b16 %v738
        %v776 = vunpack.c.l.b16 %v739
        %v777 = vunpack.c.l.b16 %v740
        %v778 = vunpack.c.l.b16 %v741
        %v779 = vunpack.c.l.b16 %v742
        %v780 = vunpack.c.l.b16 %v743
        %v781 = vunpack.c.l.b16 %v744
        %v782 = vunpack.c.l.b16 %v745
        %v783 = vunpack.c.l.b16 %v746
        %v784 = vunpack.c.l.b16 %v747
        %v785 = vpack.c.b16 %v770, %v769
        %v786 = vpack.c.b16 %v772, %v771
        %v787 = vpack.c.b16 %v774, %v773
        %v788 = vpack.c.b16 %v776, %v775
        %v789 = vpack.c.b16 %v778, %v777
        %v790 = vpack.c.b16 %v780, %v779
        %v791 = vpack.c.b16 %v782, %v781
        %v792 = vpack.c.b16 %v784, %v783
        %801 = vmatprep.subr.bf16.mxu0 0
        %802 = vmatpush1.bf16.msra.mxu0 %v785
        %803 = vmatprep.subr.bf16.mxu0 0
        %804 = vmatpush1.bf16.msra.mxu0 %v786
        %805 = vmatprep.subr.bf16.mxu0 0
        %806 = vmatpush1.bf16.msra.mxu0 %v787
        %807 = vmatprep.subr.bf16.mxu0 0
        %808 = vmatpush1.bf16.msra.mxu0 %v788
        %809 = vmatprep.subr.bf16.mxu0 0
        %810 = vmatpush1.bf16.msra.mxu0 %v789
        %811 = vmatprep.subr.bf16.mxu0 0
        %812 = vmatpush1.bf16.msra.mxu0 %v790
        %813 = vmatprep.subr.bf16.mxu0 0
        %814 = vmatpush1.bf16.msra.mxu0 %v791
        %815 = vmatprep.subr.bf16.mxu0 0
        %816 = vmatpush1.bf16.msra.mxu0 %v792
        %817 = vmatprep.subr.bf16.mxu0 0
        %818 = vmatpush1.bf16.msra.mxu0 0
        %819 = vmatprep.subr.bf16.mxu0 0
        %820 = vmatpush1.bf16.msra.mxu0 0
        %821 = vmatprep.subr.bf16.mxu0 0
        %822 = vmatpush1.bf16.msra.mxu0 0
        %823 = vmatprep.subr.bf16.mxu0 0
        %824 = vmatpush1.bf16.msra.mxu0 0
        %825 = vmatprep.subr.bf16.mxu0 0
        %826 = vmatpush1.bf16.msra.mxu0 0
        %827 = vmatprep.subr.bf16.mxu0 0
        %828 = vmatpush1.bf16.msra.mxu0 0
        %829 = vmatprep.subr.bf16.mxu0 0
        %830 = vmatpush1.bf16.msra.mxu0 0
        %831 = vmatprep.subr.bf16.mxu0 0
        %832 = vmatpush1.bf16.msra.mxu0 0
        %833 = vmatprep.mubr.bf16.mxu0 0
        %834 = vmatmul.mubr.bf16.gmra.mrb[0].mxu0 %v724
        %v835 = vpop.f32.mrb[0].mxu0
        %v836 = vadd.f32 %v752, %v835
        %v837 = vpop.f32.mrb[0].mxu0
        %v838 = vpop.f32.mrb[0].mxu0
        %v839 = vadd.f32 %v752, %v838
        %v840 = vpop.f32.mrb[0].mxu0
        %841 = vmatprep.mubr.bf16.mxu0 0
        %842 = vmatmul.mubr.bf16.gmra.mrb[0].mxu0 %v725
        %v843 = vpop.f32.mrb[0].mxu0
        %v844 = vadd.f32 %v752, %v843
        %v845 = vpop.f32.mrb[0].mxu0
        %v846 = vpop.f32.mrb[0].mxu0
        %v847 = vadd.f32 %v752, %v846
        %v848 = vpop.f32.mrb[0].mxu0
        %849 = vmatprep.mubr.bf16.mxu0 0
        %850 = vmatmul.mubr.bf16.gmra.mrb[0].mxu0 %v726
        %v851 = vpop.f32.mrb[0].mxu0
        %v852 = vadd.f32 %v752, %v851
        %v853 = vpop.f32.mrb[0].mxu0
        %v854 = vpop.f32.mrb[0].mxu0
        %v855 = vadd.f32 %v752, %v854
        %v856 = vpop.f32.mrb[0].mxu0
        %857 = vmatprep.mubr.bf16.mxu0 0
        %858 = vmatmul.mubr.bf16.gmra.mrb[0].mxu0 %v727
        %v859 = vpop.f32.mrb[0].mxu0
        %v860 = vadd.f32 %v752, %v859
        %v861 = vpop.f32.mrb[0].mxu0
        %v862 = vpop.f32.mrb[0].mxu0
        %v863 = vadd.f32 %v752, %v862
        %v864 = vpop.f32.mrb[0].mxu0
        %865 = vmatprep.mubr.bf16.mxu0 0
        %866 = vmatmul.mubr.bf16.gmra.mrb[0].mxu0 %v728
        %v867 = vpop.f32.mrb[0].mxu0
        %v868 = vadd.f32 %v752, %v867
        %v869 = vpop.f32.mrb[0].mxu0
        %v870 = vpop.f32.mrb[0].mxu0
        %v871 = vadd.f32 %v752, %v870
        %v872 = vpop.f32.mrb[0].mxu0
        %873 = vmatprep.mubr.bf16.mxu0 0
        %874 = vmatmul.mubr.bf16.gmra.mrb[0].mxu0 %v729
        %v875 = vpop.f32.mrb[0].mxu0
        %v876 = vadd.f32 %v752, %v875
        %v877 = vpop.f32.mrb[0].mxu0
        %v878 = vpop.f32.mrb[0].mxu0
        %v879 = vadd.f32 %v752, %v878
        %v880 = vpop.f32.mrb[0].mxu0
        %881 = vmatprep.mubr.bf16.mxu0 0
        %882 = vmatmul.mubr.bf16.gmra.mrb[0].mxu0 %v730
        %v883 = vpop.f32.mrb[0].mxu0
        %v884 = vadd.f32 %v752, %v883
        %v885 = vpop.f32.mrb[0].mxu0
        %v886 = vpop.f32.mrb[0].mxu0
        %v887 = vadd.f32 %v752, %v886
        %v888 = vpop.f32.mrb[0].mxu0
        %889 = vmatprep.mubr.bf16.mxu0 0
        %890 = vmatmul.mubr.bf16.gmra.mrb[0].mxu0 %v731
        %v891 = vpop.f32.mrb[0].mxu0
        %v892 = vadd.f32 %v752, %v891
        %v893 = vpop.f32.mrb[0].mxu0
        %v894 = vpop.f32.mrb[0].mxu0
        %v895 = vadd.f32 %v752, %v894
        %v896 = vpop.f32.mrb[0].mxu0
        %897 = vdwg.mxu0
        %v898 = vpack.c.bf16 %v839, %v836
        %v899 = vpack.c.bf16 %v847, %v844
        %v900 = vpack.c.bf16 %v855, %v852
        %v901 = vpack.c.bf16 %v863, %v860
        %v902 = vpack.c.bf16 %v871, %v868
        %v903 = vpack.c.bf16 %v879, %v876
        %v904 = vpack.c.bf16 %v887, %v884
        %v905 = vpack.c.bf16 %v895, %v892
        %906 = vst [vmem:[#allocation3] sm:$0xff] %v898
        %907 = vst [vmem:[#allocation3 + $0x8] sm:$0xff] %v899
        %908 = vst [vmem:[#allocation3 + $0x10] sm:$0xff] %v900
        %909 = vst [vmem:[#allocation3 + $0x18] sm:$0xff] %v901
        %910 = vst [vmem:[#allocation3 + $0x20] sm:$0xff] %v902
        %911 = vst [vmem:[#allocation3 + $0x28] sm:$0xff] %v903
        %912 = vst [vmem:[#allocation3 + $0x30] sm:$0xff] %v904
        %913 = vst [vmem:[#allocation3 + $0x38] sm:$0xff] %v905
        %v914 = vld [vmem:[#allocation2 + $0x40] sm:$0xff]
        %v915 = vld [vmem:[#allocation2 + $0x48] sm:$0xff]
        %v916 = vld [vmem:[#allocation2 + $0x50] sm:$0xff]
        %v917 = vld [vmem:[#allocation2 + $0x58] sm:$0xff]
        %v918 = vld [vmem:[#allocation2 + $0x60] sm:$0xff]
        %v919 = vld [vmem:[#allocation2 + $0x68] sm:$0xff]
        %v920 = vld [vmem:[#allocation2 + $0x70] sm:$0xff]
        %v921 = vld [vmem:[#allocation2 + $0x78] sm:$0xff]
        %s922 = scalar_lea.vmem %s473, 64 [#allocation10]
        %v923 = vld [vmem:[%s922] sm:$0xf]
        %v924 = vld [vmem:[%s922 + $0x4] sm:$0xf]
        %v925 = vld [vmem:[%s922 + $0x8] sm:$0xf]
        %v926 = vld [vmem:[%s922 + $0xc] sm:$0xf]
        %v927 = vld [vmem:[%s922 + $0x10] sm:$0xf]
        %v928 = vld [vmem:[%s922 + $0x14] sm:$0xf]
        %v929 = vld [vmem:[%s922 + $0x18] sm:$0xf]
        %v930 = vld [vmem:[%s922 + $0x1c] sm:$0xf]
        %v931 = vld [vmem:[%s922 + $0x20] sm:$0xf]
        %v932 = vld [vmem:[%s922 + $0x24] sm:$0xf]
        %v933 = vld [vmem:[%s922 + $0x28] sm:$0xf]
        %v934 = vld [vmem:[%s922 + $0x2c] sm:$0xf]
        %v935 = vld [vmem:[%s922 + $0x30] sm:$0xf]
        %v936 = vld [vmem:[%s922 + $0x34] sm:$0xf]
        %v937 = vld [vmem:[%s922 + $0x38] sm:$0xf]
        %v938 = vld [vmem:[%s922 + $0x3c] sm:$0xf]
        %s939 = scalar_lea.vmem %s482, 8 [#allocation12]
        %v940 = vld [vmem:[%s939] sm:$0x1]
        %v941 = vlaneseq
        %v942 = vshrl.u32 %v941, 7
        %v943 = vsub.s32 0, %v942
        %v944 = vrot.slane %v940, %v943
        %v961 = vunpack.c.l.b16 %v923
        %v962 = vunpack.c.l.b16 %v924
        %v963 = vunpack.c.l.b16 %v925
        %v964 = vunpack.c.l.b16 %v926
        %v965 = vunpack.c.l.b16 %v927
        %v966 = vunpack.c.l.b16 %v928
        %v967 = vunpack.c.l.b16 %v929
        %v968 = vunpack.c.l.b16 %v930
        %v969 = vunpack.c.l.b16 %v931
        %v970 = vunpack.c.l.b16 %v932
        %v971 = vunpack.c.l.b16 %v933
        %v972 = vunpack.c.l.b16 %v934
        %v973 = vunpack.c.l.b16 %v935
        %v974 = vunpack.c.l.b16 %v936
        %v975 = vunpack.c.l.b16 %v937
        %v976 = vunpack.c.l.b16 %v938
        %v977 = vpack.c.b16 %v962, %v961
        %v978 = vpack.c.b16 %v964, %v963
        %v979 = vpack.c.b16 %v966, %v965
        %v980 = vpack.c.b16 %v968, %v967
        %v981 = vpack.c.b16 %v970, %v969
        %v982 = vpack.c.b16 %v972, %v971
        %v983 = vpack.c.b16 %v974, %v973
        %v984 = vpack.c.b16 %v976, %v975
        %993 = vmatprep.subr.bf16.mxu0 0
        %994 = vmatpush1.bf16.msra.mxu0 %v977
        %995 = vmatprep.subr.bf16.mxu0 0
        %996 = vmatpush1.bf16.msra.mxu0 %v978
        %997 = vmatprep.subr.bf16.mxu0 0
        %998 = vmatpush1.bf16.msra.mxu0 %v979
        %999 = vmatprep.subr.bf16.mxu0 0
        %1000 = vmatpush1.bf16.msra.mxu0 %v980
        %1001 = vmatprep.subr.bf16.mxu0 0
        %1002 = vmatpush1.bf16.msra.mxu0 %v981
        %1003 = vmatprep.subr.bf16.mxu0 0
        %1004 = vmatpush1.bf16.msra.mxu0 %v982
        %1005 = vmatprep.subr.bf16.mxu0 0
        %1006 = vmatpush1.bf16.msra.mxu0 %v983
        %1007 = vmatprep.subr.bf16.mxu0 0
        %1008 = vmatpush1.bf16.msra.mxu0 %v984
        %1009 = vmatprep.subr.bf16.mxu0 0
        %1010 = vmatpush1.bf16.msra.mxu0 0
        %1011 = vmatprep.subr.bf16.mxu0 0
        %1012 = vmatpush1.bf16.msra.mxu0 0
        %1013 = vmatprep.subr.bf16.mxu0 0
        %1014 = vmatpush1.bf16.msra.mxu0 0
        %1015 = vmatprep.subr.bf16.mxu0 0
        %1016 = vmatpush1.bf16.msra.mxu0 0
        %1017 = vmatprep.subr.bf16.mxu0 0
        %1018 = vmatpush1.bf16.msra.mxu0 0
        %1019 = vmatprep.subr.bf16.mxu0 0
        %1020 = vmatpush1.bf16.msra.mxu0 0
        %1021 = vmatprep.subr.bf16.mxu0 0
        %1022 = vmatpush1.bf16.msra.mxu0 0
        %1023 = vmatprep.subr.bf16.mxu0 0
        %1024 = vmatpush1.bf16.msra.mxu0 0
        %1025 = vmatprep.mubr.bf16.mxu0 0
        %1026 = vmatmul.mubr.bf16.gmra.mrb[0].mxu0 %v914
        %v1027 = vpop.f32.mrb[0].mxu0
        %v1028 = vadd.f32 %v944, %v1027
        %v1029 = vpop.f32.mrb[0].mxu0
        %v1030 = vpop.f32.mrb[0].mxu0
        %v1031 = vadd.f32 %v944, %v1030
        %v1032 = vpop.f32.mrb[0].mxu0
        %1033 = vmatprep.mubr.bf16.mxu0 0
        %1034 = vmatmul.mubr.bf16.gmra.mrb[0].mxu0 %v915
        %v1035 = vpop.f32.mrb[0].mxu0
        %v1036 = vadd.f32 %v944, %v1035
        %v1037 = vpop.f32.mrb[0].mxu0
        %v1038 = vpop.f32.mrb[0].mxu0
        %v1039 = vadd.f32 %v944, %v1038
        %v1040 = vpop.f32.mrb[0].mxu0
        %1041 = vmatprep.mubr.bf16.mxu0 0
        %1042 = vmatmul.mubr.bf16.gmra.mrb[0].mxu0 %v916
        %v1043 = vpop.f32.mrb[0].mxu0
        %v1044 = vadd.f32 %v944, %v1043
        %v1045 = vpop.f32.mrb[0].mxu0
        %v1046 = vpop.f32.mrb[0].mxu0
        %v1047 = vadd.f32 %v944, %v1046
        %v1048 = vpop.f32.mrb[0].mxu0
        %1049 = vmatprep.mubr.bf16.mxu0 0
        %1050 = vmatmul.mubr.bf16.gmra.mrb[0].mxu0 %v917
        %v1051 = vpop.f32.mrb[0].mxu0
        %v1052 = vadd.f32 %v944, %v1051
        %v1053 = vpop.f32.mrb[0].mxu0
        %v1054 = vpop.f32.mrb[0].mxu0
        %v1055 = vadd.f32 %v944, %v1054
        %v1056 = vpop.f32.mrb[0].mxu0
        %1057 = vmatprep.mubr.bf16.mxu0 0
        %1058 = vmatmul.mubr.bf16.gmra.mrb[0].mxu0 %v918
        %v1059 = vpop.f32.mrb[0].mxu0
        %v1060 = vadd.f32 %v944, %v1059
        %v1061 = vpop.f32.mrb[0].mxu0
        %v1062 = vpop.f32.mrb[0].mxu0
        %v1063 = vadd.f32 %v944, %v1062
        %v1064 = vpop.f32.mrb[0].mxu0
        %1065 = vmatprep.mubr.bf16.mxu0 0
        %1066 = vmatmul.mubr.bf16.gmra.mrb[0].mxu0 %v919
        %v1067 = vpop.f32.mrb[0].mxu0
        %v1068 = vadd.f32 %v944, %v1067
        %v1069 = vpop.f32.mrb[0].mxu0
        %v1070 = vpop.f32.mrb[0].mxu0
        %v1071 = vadd.f32 %v944, %v1070
        %v1072 = vpop.f32.mrb[0].mxu0
        %1073 = vmatprep.mubr.bf16.mxu0 0
        %1074 = vmatmul.mubr.bf16.gmra.mrb[0].mxu0 %v920
        %v1075 = vpop.f32.mrb[0].mxu0
        %v1076 = vadd.f32 %v944, %v1075
        %v1077 = vpop.f32.mrb[0].mxu0
        %v1078 = vpop.f32.mrb[0].mxu0
        %v1079 = vadd.f32 %v944, %v1078
        %v1080 = vpop.f32.mrb[0].mxu0
        %1081 = vmatprep.mubr.bf16.mxu0 0
        %1082 = vmatmul.mubr.bf16.gmra.mrb[0].mxu0 %v921
        %v1083 = vpop.f32.mrb[0].mxu0
        %v1084 = vadd.f32 %v944, %v1083
        %v1085 = vpop.f32.mrb[0].mxu0
        %v1086 = vpop.f32.mrb[0].mxu0
        %v1087 = vadd.f32 %v944, %v1086
        %v1088 = vpop.f32.mrb[0].mxu0
        %1089 = vdwg.mxu0
        %v1090 = vpack.c.bf16 %v1031, %v1028
        %v1091 = vpack.c.bf16 %v1039, %v1036
        %v1092 = vpack.c.bf16 %v1047, %v1044
        %v1093 = vpack.c.bf16 %v1055, %v1052
        %v1094 = vpack.c.bf16 %v1063, %v1060
        %v1095 = vpack.c.bf16 %v1071, %v1068
        %v1096 = vpack.c.bf16 %v1079, %v1076
        %v1097 = vpack.c.bf16 %v1087, %v1084
        %1098 = vst [vmem:[#allocation3 + $0x40] sm:$0xff] %v1090
        %1099 = vst [vmem:[#allocation3 + $0x48] sm:$0xff] %v1091
        %1100 = vst [vmem:[#allocation3 + $0x50] sm:$0xff] %v1092
        %1101 = vst [vmem:[#allocation3 + $0x58] sm:$0xff] %v1093
        %1102 = vst [vmem:[#allocation3 + $0x60] sm:$0xff] %v1094
        %1103 = vst [vmem:[#allocation3 + $0x68] sm:$0xff] %v1095
        %1104 = vst [vmem:[#allocation3 + $0x70] sm:$0xff] %v1096
        %1105 = vst [vmem:[#allocation3 + $0x78] sm:$0xff] %v1097
        %v1106 = vld [vmem:[#allocation3] sm:$0xff]
        %v1107 = vld [vmem:[#allocation3 + $0x8] sm:$0xff]
        %v1108 = vld [vmem:[#allocation3 + $0x10] sm:$0xff]
        %v1109 = vld [vmem:[#allocation3 + $0x18] sm:$0xff]
        %v1110 = vld [vmem:[#allocation3 + $0x20] sm:$0xff]
        %v1111 = vld [vmem:[#allocation3 + $0x28] sm:$0xff]
        %v1112 = vld [vmem:[#allocation3 + $0x30] sm:$0xff]
        %v1113 = vld [vmem:[#allocation3 + $0x38] sm:$0xff]
        %v1114 = vld [vmem:[#allocation3 + $0x40] sm:$0xff]
        %v1115 = vld [vmem:[#allocation3 + $0x48] sm:$0xff]
        %v1116 = vld [vmem:[#allocation3 + $0x50] sm:$0xff]
        %v1117 = vld [vmem:[#allocation3 + $0x58] sm:$0xff]
        %v1118 = vld [vmem:[#allocation3 + $0x60] sm:$0xff]
        %v1119 = vld [vmem:[#allocation3 + $0x68] sm:$0xff]
        %v1120 = vld [vmem:[#allocation3 + $0x70] sm:$0xff]
        %v1121 = vld [vmem:[#allocation3 + $0x78] sm:$0xff]
        %v1122 = vld [vmem:[%s491] sm:$0xf]
        %v1123 = vld [vmem:[%s491 + $0x4] sm:$0xf]
        %v1124 = vld [vmem:[%s491 + $0x8] sm:$0xf]
        %v1125 = vld [vmem:[%s491 + $0xc] sm:$0xf]
        %v1126 = vld [vmem:[%s491 + $0x10] sm:$0xf]
        %v1127 = vld [vmem:[%s491 + $0x14] sm:$0xf]
        %v1128 = vld [vmem:[%s491 + $0x18] sm:$0xf]
        %v1129 = vld [vmem:[%s491 + $0x1c] sm:$0xf]
        %v1130 = vld [vmem:[%s491 + $0x20] sm:$0xf]
        %v1131 = vld [vmem:[%s491 + $0x24] sm:$0xf]
        %v1132 = vld [vmem:[%s491 + $0x28] sm:$0xf]
        %v1133 = vld [vmem:[%s491 + $0x2c] sm:$0xf]
        %v1134 = vld [vmem:[%s491 + $0x30] sm:$0xf]
        %v1135 = vld [vmem:[%s491 + $0x34] sm:$0xf]
        %v1136 = vld [vmem:[%s491 + $0x38] sm:$0xf]
        %v1137 = vld [vmem:[%s491 + $0x3c] sm:$0xf]
        %v1154 = vunpack.c.l.b16 %v1122
        %v1155 = vunpack.c.l.b16 %v1123
        %v1156 = vunpack.c.l.b16 %v1124
        %v1157 = vunpack.c.l.b16 %v1125
        %v1158 = vunpack.c.l.b16 %v1126
        %v1159 = vunpack.c.l.b16 %v1127
        %v1160 = vunpack.c.l.b16 %v1128
        %v1161 = vunpack.c.l.b16 %v1129
        %v1162 = vunpack.c.l.b16 %v1130
        %v1163 = vunpack.c.l.b16 %v1131
        %v1164 = vunpack.c.l.b16 %v1132
        %v1165 = vunpack.c.l.b16 %v1133
        %v1166 = vunpack.c.l.b16 %v1134
        %v1167 = vunpack.c.l.b16 %v1135
        %v1168 = vunpack.c.l.b16 %v1136
        %v1169 = vunpack.c.l.b16 %v1137
        %v1170 = vpack.c.b16 %v1155, %v1154
        %v1171 = vpack.c.b16 %v1157, %v1156
        %v1172 = vpack.c.b16 %v1159, %v1158
        %v1173 = vpack.c.b16 %v1161, %v1160
        %v1174 = vpack.c.b16 %v1163, %v1162
        %v1175 = vpack.c.b16 %v1165, %v1164
        %v1176 = vpack.c.b16 %v1167, %v1166
        %v1177 = vpack.c.b16 %v1169, %v1168
        %1186 = vmatprep.subr.bf16.mxu0 0
        %1187 = vmatpush1.bf16.msra.mxu0 %v1170
        %1188 = vmatprep.subr.bf16.mxu0 0
        %1189 = vmatpush1.bf16.msra.mxu0 %v1171
        %1190 = vmatprep.subr.bf16.mxu0 0
        %1191 = vmatpush1.bf16.msra.mxu0 %v1172
        %1192 = vmatprep.subr.bf16.mxu0 0
        %1193 = vmatpush1.bf16.msra.mxu0 %v1173
        %1194 = vmatprep.subr.bf16.mxu0 0
        %1195 = vmatpush1.bf16.msra.mxu0 %v1174
        %1196 = vmatprep.subr.bf16.mxu0 0
        %1197 = vmatpush1.bf16.msra.mxu0 %v1175
        %1198 = vmatprep.subr.bf16.mxu0 0
        %1199 = vmatpush1.bf16.msra.mxu0 %v1176
        %1200 = vmatprep.subr.bf16.mxu0 0
        %1201 = vmatpush1.bf16.msra.mxu0 %v1177
        %1202 = vmatprep.subr.bf16.mxu0 0
        %1203 = vmatpush1.bf16.msra.mxu0 0
        %1204 = vmatprep.subr.bf16.mxu0 0
        %1205 = vmatpush1.bf16.msra.mxu0 0
        %1206 = vmatprep.subr.bf16.mxu0 0
        %1207 = vmatpush1.bf16.msra.mxu0 0
        %1208 = vmatprep.subr.bf16.mxu0 0
        %1209 = vmatpush1.bf16.msra.mxu0 0
        %1210 = vmatprep.subr.bf16.mxu0 0
        %1211 = vmatpush1.bf16.msra.mxu0 0
        %1212 = vmatprep.subr.bf16.mxu0 0
        %1213 = vmatpush1.bf16.msra.mxu0 0
        %1214 = vmatprep.subr.bf16.mxu0 0
        %1215 = vmatpush1.bf16.msra.mxu0 0
        %1216 = vmatprep.subr.bf16.mxu0 0
        %1217 = vmatpush1.bf16.msra.mxu0 0
        %1218 = vmatprep.mubr.bf16.mxu0 0
        %1219 = vmatmul.mubr.bf16.gmra.mrb[0].mxu0 %v1106
        %v1220 = vpop.f32.mrb[0].mxu0
        %v1221 = vadd.f32 0.0, %v1220
        %v1222 = vpop.f32.mrb[0].mxu0
        %v1223 = vpop.f32.mrb[0].mxu0
        %v1224 = vadd.f32 0.0, %v1223
        %v1225 = vpop.f32.mrb[0].mxu0
        %1226 = vmatprep.mubr.bf16.mxu0 0
        %1227 = vmatmul.mubr.bf16.gmra.mrb[0].mxu0 %v1107
        %v1228 = vpop.f32.mrb[0].mxu0
        %v1229 = vadd.f32 0.0, %v1228
        %v1230 = vpop.f32.mrb[0].mxu0
        %v1231 = vpop.f32.mrb[0].mxu0
        %v1232 = vadd.f32 0.0, %v1231
        %v1233 = vpop.f32.mrb[0].mxu0
        %1234 = vmatprep.mubr.bf16.mxu0 0
        %1235 = vmatmul.mubr.bf16.gmra.mrb[0].mxu0 %v1108
        %v1236 = vpop.f32.mrb[0].mxu0
        %v1237 = vadd.f32 0.0, %v1236
        %v1238 = vpop.f32.mrb[0].mxu0
        %v1239 = vpop.f32.mrb[0].mxu0
        %v1240 = vadd.f32 0.0, %v1239
        %v1241 = vpop.f32.mrb[0].mxu0
        %1242 = vmatprep.mubr.bf16.mxu0 0
        %1243 = vmatmul.mubr.bf16.gmra.mrb[0].mxu0 %v1109
        %v1244 = vpop.f32.mrb[0].mxu0
        %v1245 = vadd.f32 0.0, %v1244
        %v1246 = vpop.f32.mrb[0].mxu0
        %v1247 = vpop.f32.mrb[0].mxu0
        %v1248 = vadd.f32 0.0, %v1247
        %v1249 = vpop.f32.mrb[0].mxu0
        %1250 = vmatprep.mubr.bf16.mxu0 0
        %1251 = vmatmul.mubr.bf16.gmra.mrb[0].mxu0 %v1110
        %v1252 = vpop.f32.mrb[0].mxu0
        %v1253 = vadd.f32 0.0, %v1252
        %v1254 = vpop.f32.mrb[0].mxu0
        %v1255 = vpop.f32.mrb[0].mxu0
        %v1256 = vadd.f32 0.0, %v1255
        %v1257 = vpop.f32.mrb[0].mxu0
        %1258 = vmatprep.mubr.bf16.mxu0 0
        %1259 = vmatmul.mubr.bf16.gmra.mrb[0].mxu0 %v1111
        %v1260 = vpop.f32.mrb[0].mxu0
        %v1261 = vadd.f32 0.0, %v1260
        %v1262 = vpop.f32.mrb[0].mxu0
        %v1263 = vpop.f32.mrb[0].mxu0
        %v1264 = vadd.f32 0.0, %v1263
        %v1265 = vpop.f32.mrb[0].mxu0
        %1266 = vmatprep.mubr.bf16.mxu0 0
        %1267 = vmatmul.mubr.bf16.gmra.mrb[0].mxu0 %v1112
        %v1268 = vpop.f32.mrb[0].mxu0
        %v1269 = vadd.f32 0.0, %v1268
        %v1270 = vpop.f32.mrb[0].mxu0
        %v1271 = vpop.f32.mrb[0].mxu0
        %v1272 = vadd.f32 0.0, %v1271
        %v1273 = vpop.f32.mrb[0].mxu0
        %1274 = vmatprep.mubr.bf16.mxu0 0
        %1275 = vmatmul.mubr.bf16.gmra.mrb[0].mxu0 %v1113
        %v1276 = vpop.f32.mrb[0].mxu0
        %v1277 = vadd.f32 0.0, %v1276
        %v1278 = vpop.f32.mrb[0].mxu0
        %v1279 = vpop.f32.mrb[0].mxu0
        %v1280 = vadd.f32 0.0, %v1279
        %v1281 = vpop.f32.mrb[0].mxu0
        %1282 = vmatprep.mubr.bf16.mxu0 0
        %1283 = vmatmul.mubr.bf16.gmra.mrb[0].mxu0 %v1114
        %v1284 = vpop.f32.mrb[0].mxu0
        %v1285 = vadd.f32 0.0, %v1284
        %v1286 = vpop.f32.mrb[0].mxu0
        %v1287 = vpop.f32.mrb[0].mxu0
        %v1288 = vadd.f32 0.0, %v1287
        %v1289 = vpop.f32.mrb[0].mxu0
        %1290 = vmatprep.mubr.bf16.mxu0 0
        %1291 = vmatmul.mubr.bf16.gmra.mrb[0].mxu0 %v1115
        %v1292 = vpop.f32.mrb[0].mxu0
        %v1293 = vadd.f32 0.0, %v1292
        %v1294 = vpop.f32.mrb[0].mxu0
        %v1295 = vpop.f32.mrb[0].mxu0
        %v1296 = vadd.f32 0.0, %v1295
        %v1297 = vpop.f32.mrb[0].mxu0
        %1298 = vmatprep.mubr.bf16.mxu0 0
        %1299 = vmatmul.mubr.bf16.gmra.mrb[0].mxu0 %v1116
        %v1300 = vpop.f32.mrb[0].mxu0
        %v1301 = vadd.f32 0.0, %v1300
        %v1302 = vpop.f32.mrb[0].mxu0
        %v1303 = vpop.f32.mrb[0].mxu0
        %v1304 = vadd.f32 0.0, %v1303
        %v1305 = vpop.f32.mrb[0].mxu0
        %1306 = vmatprep.mubr.bf16.mxu0 0
        %1307 = vmatmul.mubr.bf16.gmra.mrb[0].mxu0 %v1117
        %v1308 = vpop.f32.mrb[0].mxu0
        %v1309 = vadd.f32 0.0, %v1308
        %v1310 = vpop.f32.mrb[0].mxu0
        %v1311 = vpop.f32.mrb[0].mxu0
        %v1312 = vadd.f32 0.0, %v1311
        %v1313 = vpop.f32.mrb[0].mxu0
        %1314 = vmatprep.mubr.bf16.mxu0 0
        %1315 = vmatmul.mubr.bf16.gmra.mrb[0].mxu0 %v1118
        %v1316 = vpop.f32.mrb[0].mxu0
        %v1317 = vadd.f32 0.0, %v1316
        %v1318 = vpop.f32.mrb[0].mxu0
        %v1319 = vpop.f32.mrb[0].mxu0
        %v1320 = vadd.f32 0.0, %v1319
        %v1321 = vpop.f32.mrb[0].mxu0
        %1322 = vmatprep.mubr.bf16.mxu0 0
        %1323 = vmatmul.mubr.bf16.gmra.mrb[0].mxu0 %v1119
        %v1324 = vpop.f32.mrb[0].mxu0
        %v1325 = vadd.f32 0.0, %v1324
        %v1326 = vpop.f32.mrb[0].mxu0
        %v1327 = vpop.f32.mrb[0].mxu0
        %v1328 = vadd.f32 0.0, %v1327
        %v1329 = vpop.f32.mrb[0].mxu0
        %1330 = vmatprep.mubr.bf16.mxu0 0
        %1331 = vmatmul.mubr.bf16.gmra.mrb[0].mxu0 %v1120
        %v1332 = vpop.f32.mrb[0].mxu0
        %v1333 = vadd.f32 0.0, %v1332
        %v1334 = vpop.f32.mrb[0].mxu0
        %v1335 = vpop.f32.mrb[0].mxu0
        %v1336 = vadd.f32 0.0, %v1335
        %v1337 = vpop.f32.mrb[0].mxu0
        %1338 = vmatprep.mubr.bf16.mxu0 0
        %1339 = vmatmul.mubr.bf16.gmra.mrb[0].mxu0 %v1121
        %v1340 = vpop.f32.mrb[0].mxu0
        %v1341 = vadd.f32 0.0, %v1340
        %v1342 = vpop.f32.mrb[0].mxu0
        %v1343 = vpop.f32.mrb[0].mxu0
        %v1344 = vadd.f32 0.0, %v1343
        %v1345 = vpop.f32.mrb[0].mxu0
        %1346 = vdwg.mxu0
        %1347 = vst [vmem:[#allocation4] sm:$0xff] %v1221
        %1348 = vst [vmem:[#allocation4 + $0x8] sm:$0xff] %v1224
        %1349 = vst [vmem:[#allocation4 + $0x10] sm:$0xff] %v1229
        %1350 = vst [vmem:[#allocation4 + $0x18] sm:$0xff] %v1232
        %1351 = vst [vmem:[#allocation4 + $0x20] sm:$0xff] %v1237
        %1352 = vst [vmem:[#allocation4 + $0x28] sm:$0xff] %v1240
        %1353 = vst [vmem:[#allocation4 + $0x30] sm:$0xff] %v1245
        %1354 = vst [vmem:[#allocation4 + $0x38] sm:$0xff] %v1248
        %1355 = vst [vmem:[#allocation4 + $0x40] sm:$0xff] %v1253
        %1356 = vst [vmem:[#allocation4 + $0x48] sm:$0xff] %v1256
        %1357 = vst [vmem:[#allocation4 + $0x50] sm:$0xff] %v1261
        %1358 = vst [vmem:[#allocation4 + $0x58] sm:$0xff] %v1264
        %1359 = vst [vmem:[#allocation4 + $0x60] sm:$0xff] %v1269
        %1360 = vst [vmem:[#allocation4 + $0x68] sm:$0xff] %v1272
        %1361 = vst [vmem:[#allocation4 + $0x70] sm:$0xff] %v1277
        %1362 = vst [vmem:[#allocation4 + $0x78] sm:$0xff] %v1280
        %1363 = vst [vmem:[#allocation4 + $0x80] sm:$0xff] %v1285
        %1364 = vst [vmem:[#allocation4 + $0x88] sm:$0xff] %v1288
        %1365 = vst [vmem:[#allocation4 + $0x90] sm:$0xff] %v1293
        %1366 = vst [vmem:[#allocation4 + $0x98] sm:$0xff] %v1296
        %1367 = vst [vmem:[#allocation4 + $0xa0] sm:$0xff] %v1301
        %1368 = vst [vmem:[#allocation4 + $0xa8] sm:$0xff] %v1304
        %1369 = vst [vmem:[#allocation4 + $0xb0] sm:$0xff] %v1309
        %1370 = vst [vmem:[#allocation4 + $0xb8] sm:$0xff] %v1312
        %1371 = vst [vmem:[#allocation4 + $0xc0] sm:$0xff] %v1317
        %1372 = vst [vmem:[#allocation4 + $0xc8] sm:$0xff] %v1320
        %1373 = vst [vmem:[#allocation4 + $0xd0] sm:$0xff] %v1325
        %1374 = vst [vmem:[#allocation4 + $0xd8] sm:$0xff] %v1328
        %1375 = vst [vmem:[#allocation4 + $0xe0] sm:$0xff] %v1333
        %1376 = vst [vmem:[#allocation4 + $0xe8] sm:$0xff] %v1336
        %1377 = vst [vmem:[#allocation4 + $0xf0] sm:$0xff] %v1341
        %1378 = vst [vmem:[#allocation4 + $0xf8] sm:$0xff] %v1344
        %1379 = vxpose.xlu0.b32.start [1/16] %v1221, 128
        %1380 = vxpose.xlu0.b32.cont [2/16] %v1224, 128
        %1381 = vxpose.xlu0.b32.cont [3/16] %v1229, 128
        %1382 = vxpose.xlu0.b32.cont [4/16] %v1232, 128
        %1383 = vxpose.xlu0.b32.cont [5/16] %v1237, 128
        %1384 = vxpose.xlu0.b32.cont [6/16] %v1240, 128
        %1385 = vxpose.xlu0.b32.cont [7/16] %v1245, 128
        %1386 = vxpose.xlu0.b32.cont [8/16] %v1248, 128
        %1387 = vxpose.xlu0.b32.cont [9/16] %v1253, 128
        %1388 = vxpose.xlu0.b32.cont [10/16] %v1256, 128
        %1389 = vxpose.xlu0.b32.cont [11/16] %v1261, 128
        %1390 = vxpose.xlu0.b32.cont [12/16] %v1264, 128
        %1391 = vxpose.xlu0.b32.cont [13/16] %v1269, 128
        %1392 = vxpose.xlu0.b32.cont [14/16] %v1272, 128
        %1393 = vxpose.xlu0.b32.cont [15/16] %v1277, 128
        %1394 = vxpose.xlu0.b32.end [16/16] %v1280, 128
        %v1395 = vpop.trf.xlu0
        %v1396 = vpop.trf.xlu0
        %v1397 = vpop.trf.xlu0
        %v1398 = vpop.trf.xlu0
        %v1399 = vpop.trf.xlu0
        %v1400 = vpop.trf.xlu0
        %v1401 = vpop.trf.xlu0
        %v1402 = vpop.trf.xlu0
        %v1403 = vpop.trf.xlu0
        %v1404 = vpop.trf.xlu0
        %v1405 = vpop.trf.xlu0
        %v1406 = vpop.trf.xlu0
        %v1407 = vpop.trf.xlu0
        %v1408 = vpop.trf.xlu0
        %v1409 = vpop.trf.xlu0
        %v1410 = vpop.trf.xlu0
        %1411 = vxpose.xlu0.b32.start [1/16] %v1285, 128
        %1412 = vxpose.xlu0.b32.cont [2/16] %v1288, 128
        %1413 = vxpose.xlu0.b32.cont [3/16] %v1293, 128
        %1414 = vxpose.xlu0.b32.cont [4/16] %v1296, 128
        %1415 = vxpose.xlu0.b32.cont [5/16] %v1301, 128
        %1416 = vxpose.xlu0.b32.cont [6/16] %v1304, 128
        %1417 = vxpose.xlu0.b32.cont [7/16] %v1309, 128
        %1418 = vxpose.xlu0.b32.cont [8/16] %v1312, 128
        %1419 = vxpose.xlu0.b32.cont [9/16] %v1317, 128
        %1420 = vxpose.xlu0.b32.cont [10/16] %v1320, 128
        %1421 = vxpose.xlu0.b32.cont [11/16] %v1325, 128
        %1422 = vxpose.xlu0.b32.cont [12/16] %v1328, 128
        %1423 = vxpose.xlu0.b32.cont [13/16] %v1333, 128
        %1424 = vxpose.xlu0.b32.cont [14/16] %v1336, 128
        %1425 = vxpose.xlu0.b32.cont [15/16] %v1341, 128
        %1426 = vxpose.xlu0.b32.end [16/16] %v1344, 128
        %v1427 = vpop.trf.xlu0
        %v1428 = vpop.trf.xlu0
        %v1429 = vpop.trf.xlu0
        %v1430 = vpop.trf.xlu0
        %v1431 = vpop.trf.xlu0
        %v1432 = vpop.trf.xlu0
        %v1433 = vpop.trf.xlu0
        %v1434 = vpop.trf.xlu0
        %v1435 = vpop.trf.xlu0
        %v1436 = vpop.trf.xlu0
        %v1437 = vpop.trf.xlu0
        %v1438 = vpop.trf.xlu0
        %v1439 = vpop.trf.xlu0
        %v1440 = vpop.trf.xlu0
        %v1441 = vpop.trf.xlu0
        %v1442 = vpop.trf.xlu0
        %1443 = vst [vmem:[#allocation5] sm:$0xff] %v1395
        %1444 = vst [vmem:[#allocation5 + $0x8] sm:$0xff] %v1427
        %1445 = vst [vmem:[#allocation5 + $0x10] sm:$0xff] %v1396
        %1446 = vst [vmem:[#allocation5 + $0x18] sm:$0xff] %v1428
        %1447 = vst [vmem:[#allocation5 + $0x20] sm:$0xff] %v1397
        %1448 = vst [vmem:[#allocation5 + $0x28] sm:$0xff] %v1429
        %1449 = vst [vmem:[#allocation5 + $0x30] sm:$0xff] %v1398
        %1450 = vst [vmem:[#allocation5 + $0x38] sm:$0xff] %v1430
        %1451 = vst [vmem:[#allocation5 + $0x40] sm:$0xff] %v1399
        %1452 = vst [vmem:[#allocation5 + $0x48] sm:$0xff] %v1431
        %1453 = vst [vmem:[#allocation5 + $0x50] sm:$0xff] %v1400
        %1454 = vst [vmem:[#allocation5 + $0x58] sm:$0xff] %v1432
        %1455 = vst [vmem:[#allocation5 + $0x60] sm:$0xff] %v1401
        %1456 = vst [vmem:[#allocation5 + $0x68] sm:$0xff] %v1433
        %1457 = vst [vmem:[#allocation5 + $0x70] sm:$0xff] %v1402
        %1458 = vst [vmem:[#allocation5 + $0x78] sm:$0xff] %v1434
        %1459 = vst [vmem:[#allocation5 + $0x80] sm:$0xff] %v1403
        %1460 = vst [vmem:[#allocation5 + $0x88] sm:$0xff] %v1435
        %1461 = vst [vmem:[#allocation5 + $0x90] sm:$0xff] %v1404
        %1462 = vst [vmem:[#allocation5 + $0x98] sm:$0xff] %v1436
        %1463 = vst [vmem:[#allocation5 + $0xa0] sm:$0xff] %v1405
        %1464 = vst [vmem:[#allocation5 + $0xa8] sm:$0xff] %v1437
        %1465 = vst [vmem:[#allocation5 + $0xb0] sm:$0xff] %v1406
        %1466 = vst [vmem:[#allocation5 + $0xb8] sm:$0xff] %v1438
        %1467 = vst [vmem:[#allocation5 + $0xc0] sm:$0xff] %v1407
        %1468 = vst [vmem:[#allocation5 + $0xc8] sm:$0xff] %v1439
        %1469 = vst [vmem:[#allocation5 + $0xd0] sm:$0xff] %v1408
        %1470 = vst [vmem:[#allocation5 + $0xd8] sm:$0xff] %v1440
        %1471 = vst [vmem:[#allocation5 + $0xe0] sm:$0xff] %v1409
        %1472 = vst [vmem:[#allocation5 + $0xe8] sm:$0xff] %v1441
        %1473 = vst [vmem:[#allocation5 + $0xf0] sm:$0xff] %v1410
        %1474 = vst [vmem:[#allocation5 + $0xf8] sm:$0xff] %v1442
        %v1475 = vld [vmem:[#allocation5] ss:$0 sm:$0xff]
        %v1476 = vld [vmem:[#allocation4 + $0x80] sm:$0xff]
        %v1477 = vld [vmem:[#allocation4 + $0x88] sm:$0xff]
        %v1478 = vld [vmem:[#allocation4 + $0x90] sm:$0xff]
        %v1479 = vld [vmem:[#allocation4 + $0x98] sm:$0xff]
        %v1480 = vld [vmem:[#allocation4 + $0xa0] sm:$0xff]
        %v1481 = vld [vmem:[#allocation4 + $0xa8] sm:$0xff]
        %v1482 = vld [vmem:[#allocation4 + $0xb0] sm:$0xff]
        %v1483 = vld [vmem:[#allocation4 + $0xb8] sm:$0xff]
        %v1484 = vld [vmem:[#allocation4 + $0xc0] sm:$0xff]
        %v1485 = vld [vmem:[#allocation4 + $0xc8] sm:$0xff]
        %v1486 = vld [vmem:[#allocation4 + $0xd0] sm:$0xff]
        %v1487 = vld [vmem:[#allocation4 + $0xd8] sm:$0xff]
        %v1488 = vld [vmem:[#allocation4 + $0xe0] sm:$0xff]
        %v1489 = vld [vmem:[#allocation4 + $0xe8] sm:$0xff]
        %v1490 = vld [vmem:[#allocation4 + $0xf0] sm:$0xff]
        %v1491 = vld [vmem:[#allocation4 + $0xf8] sm:$0xff]
        %1493 = vset.pattern.permute.xlu0 3
        %1494 = vperm.xlu0 %1493, %v1476
        %v1495 = vpop.permute.xlu0 %1494
        %1498 = vset.pattern.permute.xlu0 3
        %1499 = vperm.xlu0 %1498, %v1477
        %v1500 = vpop.permute.xlu0 %1499
        %1503 = vset.pattern.permute.xlu0 3
        %1504 = vperm.xlu0 %1503, %v1478
        %v1505 = vpop.permute.xlu0 %1504
        %1508 = vset.pattern.permute.xlu0 3
        %1509 = vperm.xlu0 %1508, %v1479
        %v1510 = vpop.permute.xlu0 %1509
        %1513 = vset.pattern.permute.xlu0 3
        %1514 = vperm.xlu0 %1513, %v1480
        %v1515 = vpop.permute.xlu0 %1514
        %1518 = vset.pattern.permute.xlu0 3
        %1519 = vperm.xlu0 %1518, %v1481
        %v1520 = vpop.permute.xlu0 %1519
        %1523 = vset.pattern.permute.xlu0 3
        %1524 = vperm.xlu0 %1523, %v1482
        %v1525 = vpop.permute.xlu0 %1524
        %1528 = vset.pattern.permute.xlu0 3
        %1529 = vperm.xlu0 %1528, %v1483
        %v1530 = vpop.permute.xlu0 %1529
        %1533 = vset.pattern.permute.xlu0 3
        %1534 = vperm.xlu0 %1533, %v1484
        %v1535 = vpop.permute.xlu0 %1534
        %1538 = vset.pattern.permute.xlu0 3
        %1539 = vperm.xlu0 %1538, %v1485
        %v1540 = vpop.permute.xlu0 %1539
        %1543 = vset.pattern.permute.xlu0 3
        %1544 = vperm.xlu0 %1543, %v1486
        %v1545 = vpop.permute.xlu0 %1544
        %1548 = vset.pattern.permute.xlu0 3
        %1549 = vperm.xlu0 %1548, %v1487
        %v1550 = vpop.permute.xlu0 %1549
        %1553 = vset.pattern.permute.xlu0 3
        %1554 = vperm.xlu0 %1553, %v1488
        %v1555 = vpop.permute.xlu0 %1554
        %1558 = vset.pattern.permute.xlu0 3
        %1559 = vperm.xlu0 %1558, %v1489
        %v1560 = vpop.permute.xlu0 %1559
        %1563 = vset.pattern.permute.xlu0 3
        %1564 = vperm.xlu0 %1563, %v1490
        %v1565 = vpop.permute.xlu0 %1564
        %1568 = vset.pattern.permute.xlu0 3
        %1569 = vperm.xlu0 %1568, %v1491
        %v1570 = vpop.permute.xlu0 %1569
        %v1572 = vadd.f32 %v1495, %v1475
        %v1573 = vadd.f32 %v1500, %v1475
        %v1574 = vadd.f32 %v1505, %v1475
        %v1575 = vadd.f32 %v1510, %v1475
        %v1576 = vadd.f32 %v1515, %v1475
        %v1577 = vadd.f32 %v1520, %v1475
        %v1578 = vadd.f32 %v1525, %v1475
        %v1579 = vadd.f32 %v1530, %v1475
        %v1580 = vadd.f32 %v1535, %v1475
        %v1581 = vadd.f32 %v1540, %v1475
        %v1582 = vadd.f32 %v1545, %v1475
        %v1583 = vadd.f32 %v1550, %v1475
        %v1584 = vadd.f32 %v1555, %v1475
        %v1585 = vadd.f32 %v1560, %v1475
        %v1586 = vadd.f32 %v1565, %v1475
        %v1587 = vadd.f32 %v1570, %v1475
        %v1588 = vmul.f32 %v1572, 0.2
        %v1589 = vmul.f32 %v1573, 0.2
        %v1590 = vmul.f32 %v1574, 0.2
        %v1591 = vmul.f32 %v1575, 0.2
        %v1592 = vmul.f32 %v1576, 0.2
        %v1593 = vmul.f32 %v1577, 0.2
        %v1594 = vmul.f32 %v1578, 0.2
        %v1595 = vmul.f32 %v1579, 0.2
        %v1596 = vmul.f32 %v1580, 0.2
        %v1597 = vmul.f32 %v1581, 0.2
        %v1598 = vmul.f32 %v1582, 0.2
        %v1599 = vmul.f32 %v1583, 0.2
        %v1600 = vmul.f32 %v1584, 0.2
        %v1601 = vmul.f32 %v1585, 0.2
        %v1602 = vmul.f32 %v1586, 0.2
        %v1603 = vmul.f32 %v1587, 0.2
        %v1604 = vmax.f32 %v1572, %v1588
        %v1605 = vmax.f32 %v1573, %v1589
        %v1606 = vmax.f32 %v1574, %v1590
        %v1607 = vmax.f32 %v1575, %v1591
        %v1608 = vmax.f32 %v1576, %v1592
        %v1609 = vmax.f32 %v1577, %v1593
        %v1610 = vmax.f32 %v1578, %v1594
        %v1611 = vmax.f32 %v1579, %v1595
        %v1612 = vmax.f32 %v1580, %v1596
        %v1613 = vmax.f32 %v1581, %v1597
        %v1614 = vmax.f32 %v1582, %v1598
        %v1615 = vmax.f32 %v1583, %v1599
        %v1616 = vmax.f32 %v1584, %v1600
        %v1617 = vmax.f32 %v1585, %v1601
        %v1618 = vmax.f32 %v1586, %v1602
        %v1619 = vmax.f32 %v1587, %v1603
        %v1620 = vld [vmem:[#allocation15] sm:$0xff]
        %v1621 = vld [vmem:[#allocation15 + $0x8] sm:$0xff]
        %v1622 = vld [vmem:[#allocation15 + $0x10] sm:$0xff]
        %v1623 = vld [vmem:[#allocation15 + $0x18] sm:$0xff]
        %v1624 = vunpack.c.0.s8 %v1620
        %v1625 = vunpack.c.1.s8 %v1620
        %v1626 = vunpack.c.2.s8 %v1620
        %v1627 = vunpack.c.3.s8 %v1620
        %v1628 = vunpack.c.0.s8 %v1621
        %v1629 = vunpack.c.1.s8 %v1621
        %v1630 = vunpack.c.2.s8 %v1621
        %v1631 = vunpack.c.3.s8 %v1621
        %v1632 = vunpack.c.0.s8 %v1622
        %v1633 = vunpack.c.1.s8 %v1622
        %v1634 = vunpack.c.2.s8 %v1622
        %v1635 = vunpack.c.3.s8 %v1622
        %v1636 = vunpack.c.0.s8 %v1623
        %v1637 = vunpack.c.1.s8 %v1623
        %v1638 = vunpack.c.2.s8 %v1623
        %v1639 = vunpack.c.3.s8 %v1623
        %v1640 = vcvt.s32.f32 %v1624
        %v1641 = vcvt.s32.f32 %v1625
        %v1642 = vcvt.s32.f32 %v1626
        %v1643 = vcvt.s32.f32 %v1627
        %v1644 = vcvt.s32.f32 %v1628
        %v1645 = vcvt.s32.f32 %v1629
        %v1646 = vcvt.s32.f32 %v1630
        %v1647 = vcvt.s32.f32 %v1631
        %v1648 = vcvt.s32.f32 %v1632
        %v1649 = vcvt.s32.f32 %v1633
        %v1650 = vcvt.s32.f32 %v1634
        %v1651 = vcvt.s32.f32 %v1635
        %v1652 = vcvt.s32.f32 %v1636
        %v1653 = vcvt.s32.f32 %v1637
        %v1654 = vcvt.s32.f32 %v1638
        %v1655 = vcvt.s32.f32 %v1639
        %v1656 = vsub.f32 %v1640, 1.0
        %v1657 = vsub.f32 %v1641, 1.0
        %v1658 = vsub.f32 %v1642, 1.0
        %v1659 = vsub.f32 %v1643, 1.0
        %v1660 = vsub.f32 %v1644, 1.0
        %v1661 = vsub.f32 %v1645, 1.0
        %v1662 = vsub.f32 %v1646, 1.0
        %v1663 = vsub.f32 %v1647, 1.0
        %v1664 = vsub.f32 %v1648, 1.0
        %v1665 = vsub.f32 %v1649, 1.0
        %v1666 = vsub.f32 %v1650, 1.0
        %v1667 = vsub.f32 %v1651, 1.0
        %v1668 = vsub.f32 %v1652, 1.0
        %v1669 = vsub.f32 %v1653, 1.0
        %v1670 = vsub.f32 %v1654, 1.0
        %v1671 = vsub.f32 %v1655, 1.0
        %v1672 = vmul.f32 %v1656, 1e+30
        %v1673 = vmul.f32 %v1657, 1e+30
        %v1674 = vmul.f32 %v1658, 1e+30
        %v1675 = vmul.f32 %v1659, 1e+30
        %v1676 = vmul.f32 %v1660, 1e+30
        %v1677 = vmul.f32 %v1661, 1e+30
        %v1678 = vmul.f32 %v1662, 1e+30
        %v1679 = vmul.f32 %v1663, 1e+30
        %v1680 = vmul.f32 %v1664, 1e+30
        %v1681 = vmul.f32 %v1665, 1e+30
        %v1682 = vmul.f32 %v1666, 1e+30
        %v1683 = vmul.f32 %v1667, 1e+30
        %v1684 = vmul.f32 %v1668, 1e+30
        %v1685 = vmul.f32 %v1669, 1e+30
        %v1686 = vmul.f32 %v1670, 1e+30
        %v1687 = vmul.f32 %v1671, 1e+30
        %v1688 = vadd.f32 %v1604, %v1672
        %v1689 = vadd.f32 %v1605, %v1673
        %v1690 = vadd.f32 %v1606, %v1674
        %v1691 = vadd.f32 %v1607, %v1675
        %v1692 = vadd.f32 %v1608, %v1676
        %v1693 = vadd.f32 %v1609, %v1677
        %v1694 = vadd.f32 %v1610, %v1678
        %v1695 = vadd.f32 %v1611, %v1679
        %v1696 = vadd.f32 %v1612, %v1680
        %v1697 = vadd.f32 %v1613, %v1681
        %v1698 = vadd.f32 %v1614, %v1682
        %v1699 = vadd.f32 %v1615, %v1683
        %v1700 = vadd.f32 %v1616, %v1684
        %v1701 = vadd.f32 %v1617, %v1685
        %v1702 = vadd.f32 %v1618, %v1686
        %v1703 = vadd.f32 %v1619, %v1687
        %1704 = vmax.xlane.f32.xlu0 %v1688
        %v1705 = vpop.xlane.xlu0 %1704
        %1706 = vmax.xlane.f32.xlu0 %v1689
        %v1707 = vpop.xlane.xlu0 %1706
        %1708 = vmax.xlane.f32.xlu0 %v1690
        %v1709 = vpop.xlane.xlu0 %1708
        %1710 = vmax.xlane.f32.xlu0 %v1691
        %v1711 = vpop.xlane.xlu0 %1710
        %1712 = vmax.xlane.f32.xlu0 %v1692
        %v1713 = vpop.xlane.xlu0 %1712
        %1714 = vmax.xlane.f32.xlu0 %v1693
        %v1715 = vpop.xlane.xlu0 %1714
        %1716 = vmax.xlane.f32.xlu0 %v1694
        %v1717 = vpop.xlane.xlu0 %1716
        %1718 = vmax.xlane.f32.xlu0 %v1695
        %v1719 = vpop.xlane.xlu0 %1718
        %1720 = vmax.xlane.f32.xlu0 %v1696
        %v1721 = vpop.xlane.xlu0 %1720
        %1722 = vmax.xlane.f32.xlu0 %v1697
        %v1723 = vpop.xlane.xlu0 %1722
        %1724 = vmax.xlane.f32.xlu0 %v1698
        %v1725 = vpop.xlane.xlu0 %1724
        %1726 = vmax.xlane.f32.xlu0 %v1699
        %v1727 = vpop.xlane.xlu0 %1726
        %1728 = vmax.xlane.f32.xlu0 %v1700
        %v1729 = vpop.xlane.xlu0 %1728
        %1730 = vmax.xlane.f32.xlu0 %v1701
        %v1731 = vpop.xlane.xlu0 %1730
        %1732 = vmax.xlane.f32.xlu0 %v1702
        %v1733 = vpop.xlane.xlu0 %1732
        %1734 = vmax.xlane.f32.xlu0 %v1703
        %v1735 = vpop.xlane.xlu0 %1734
        %v1736 = vsub.f32 %v1688, %v1705
        %v1737 = vsub.f32 %v1689, %v1707
        %v1738 = vsub.f32 %v1690, %v1709
        %v1739 = vsub.f32 %v1691, %v1711
        %v1740 = vsub.f32 %v1692, %v1713
        %v1741 = vsub.f32 %v1693, %v1715
        %v1742 = vsub.f32 %v1694, %v1717
        %v1743 = vsub.f32 %v1695, %v1719
        %v1744 = vsub.f32 %v1696, %v1721
        %v1745 = vsub.f32 %v1697, %v1723
        %v1746 = vsub.f32 %v1698, %v1725
        %v1747 = vsub.f32 %v1699, %v1727
        %v1748 = vsub.f32 %v1700, %v1729
        %v1749 = vsub.f32 %v1701, %v1731
        %v1750 = vsub.f32 %v1702, %v1733
        %v1751 = vsub.f32 %v1703, %v1735
        %v1752 = vmul.f32 %v1736, 1.442695
        %v1753 = vpow.pop %v1752
        %v1754 = vmul.f32 %v1737, 1.442695
        %v1755 = vpow.pop %v1754
        %v1756 = vmul.f32 %v1738, 1.442695
        %v1757 = vpow.pop %v1756
        %v1758 = vmul.f32 %v1739, 1.442695
        %v1759 = vpow.pop %v1758
        %v1760 = vmul.f32 %v1740, 1.442695
        %v1761 = vpow.pop %v1760
        %v1762 = vmul.f32 %v1741, 1.442695
        %v1763 = vpow.pop %v1762
        %v1764 = vmul.f32 %v1742, 1.442695
        %v1765 = vpow.pop %v1764
        %v1766 = vmul.f32 %v1743, 1.442695
        %v1767 = vpow.pop %v1766
        %v1768 = vmul.f32 %v1744, 1.442695
        %v1769 = vpow.pop %v1768
        %v1770 = vmul.f32 %v1745, 1.442695
        %v1771 = vpow.pop %v1770
        %v1772 = vmul.f32 %v1746, 1.442695
        %v1773 = vpow.pop %v1772
        %v1774 = vmul.f32 %v1747, 1.442695
        %v1775 = vpow.pop %v1774
        %v1776 = vmul.f32 %v1748, 1.442695
        %v1777 = vpow.pop %v1776
        %v1778 = vmul.f32 %v1749, 1.442695
        %v1779 = vpow.pop %v1778
        %v1780 = vmul.f32 %v1750, 1.442695
        %v1781 = vpow.pop %v1780
        %v1782 = vmul.f32 %v1751, 1.442695
        %v1783 = vpow.pop %v1782
        %v1784 = vmul.f32 %v1753, %v1640
        %v1785 = vmul.f32 %v1755, %v1641
        %v1786 = vmul.f32 %v1757, %v1642
        %v1787 = vmul.f32 %v1759, %v1643
        %v1788 = vmul.f32 %v1761, %v1644
        %v1789 = vmul.f32 %v1763, %v1645
        %v1790 = vmul.f32 %v1765, %v1646
        %v1791 = vmul.f32 %v1767, %v1647
        %v1792 = vmul.f32 %v1769, %v1648
        %v1793 = vmul.f32 %v1771, %v1649
        %v1794 = vmul.f32 %v1773, %v1650
        %v1795 = vmul.f32 %v1775, %v1651
        %v1796 = vmul.f32 %v1777, %v1652
        %v1797 = vmul.f32 %v1779, %v1653
        %v1798 = vmul.f32 %v1781, %v1654
        %v1799 = vmul.f32 %v1783, %v1655
        %1800 = vadd.xlane.f32.xlu0 %v1784
        %v1801 = vpop.xlane.xlu0 %1800
        %1802 = vadd.xlane.f32.xlu0 %v1785
        %v1803 = vpop.xlane.xlu0 %1802
        %1804 = vadd.xlane.f32.xlu0 %v1786
        %v1805 = vpop.xlane.xlu0 %1804
        %1806 = vadd.xlane.f32.xlu0 %v1787
        %v1807 = vpop.xlane.xlu0 %1806
        %1808 = vadd.xlane.f32.xlu0 %v1788
        %v1809 = vpop.xlane.xlu0 %1808
        %1810 = vadd.xlane.f32.xlu0 %v1789
        %v1811 = vpop.xlane.xlu0 %1810
        %1812 = vadd.xlane.f32.xlu0 %v1790
        %v1813 = vpop.xlane.xlu0 %1812
        %1814 = vadd.xlane.f32.xlu0 %v1791
        %v1815 = vpop.xlane.xlu0 %1814
        %1816 = vadd.xlane.f32.xlu0 %v1792
        %v1817 = vpop.xlane.xlu0 %1816
        %1818 = vadd.xlane.f32.xlu0 %v1793
        %v1819 = vpop.xlane.xlu0 %1818
        %1820 = vadd.xlane.f32.xlu0 %v1794
        %v1821 = vpop.xlane.xlu0 %1820
        %1822 = vadd.xlane.f32.xlu0 %v1795
        %v1823 = vpop.xlane.xlu0 %1822
        %1824 = vadd.xlane.f32.xlu0 %v1796
        %v1825 = vpop.xlane.xlu0 %1824
        %1826 = vadd.xlane.f32.xlu0 %v1797
        %v1827 = vpop.xlane.xlu0 %1826
        %1828 = vadd.xlane.f32.xlu0 %v1798
        %v1829 = vpop.xlane.xlu0 %1828
        %1830 = vadd.xlane.f32.xlu0 %v1799
        %v1831 = vpop.xlane.xlu0 %1830
        %v1832 = vmax.f32 %v1801, 1e-30
        %v1833 = vmax.f32 %v1803, 1e-30
        %v1834 = vmax.f32 %v1805, 1e-30
        %v1835 = vmax.f32 %v1807, 1e-30
        %v1836 = vmax.f32 %v1809, 1e-30
        %v1837 = vmax.f32 %v1811, 1e-30
        %v1838 = vmax.f32 %v1813, 1e-30
        %v1839 = vmax.f32 %v1815, 1e-30
        %v1840 = vmax.f32 %v1817, 1e-30
        %v1841 = vmax.f32 %v1819, 1e-30
        %v1842 = vmax.f32 %v1821, 1e-30
        %v1843 = vmax.f32 %v1823, 1e-30
        %v1844 = vmax.f32 %v1825, 1e-30
        %v1845 = vmax.f32 %v1827, 1e-30
        %v1846 = vmax.f32 %v1829, 1e-30
        %v1847 = vmax.f32 %v1831, 1e-30
        %v1848 = vrcp.pop %v1832
        %v1849 = vmul.f32 %v1784, %v1848
        %v1850 = vrcp.pop %v1833
        %v1851 = vmul.f32 %v1785, %v1850
        %v1852 = vrcp.pop %v1834
        %v1853 = vmul.f32 %v1786, %v1852
        %v1854 = vrcp.pop %v1835
        %v1855 = vmul.f32 %v1787, %v1854
        %v1856 = vrcp.pop %v1836
        %v1857 = vmul.f32 %v1788, %v1856
        %v1858 = vrcp.pop %v1837
        %v1859 = vmul.f32 %v1789, %v1858
        %v1860 = vrcp.pop %v1838
        %v1861 = vmul.f32 %v1790, %v1860
        %v1862 = vrcp.pop %v1839
        %v1863 = vmul.f32 %v1791, %v1862
        %v1864 = vrcp.pop %v1840
        %v1865 = vmul.f32 %v1792, %v1864
        %v1866 = vrcp.pop %v1841
        %v1867 = vmul.f32 %v1793, %v1866
        %v1868 = vrcp.pop %v1842
        %v1869 = vmul.f32 %v1794, %v1868
        %v1870 = vrcp.pop %v1843
        %v1871 = vmul.f32 %v1795, %v1870
        %v1872 = vrcp.pop %v1844
        %v1873 = vmul.f32 %v1796, %v1872
        %v1874 = vrcp.pop %v1845
        %v1875 = vmul.f32 %v1797, %v1874
        %v1876 = vrcp.pop %v1846
        %v1877 = vmul.f32 %v1798, %v1876
        %v1878 = vrcp.pop %v1847
        %v1879 = vmul.f32 %v1799, %v1878
        %v1880 = vpack.c.bf16 %v1851, %v1849
        %v1881 = vpack.c.bf16 %v1855, %v1853
        %v1882 = vpack.c.bf16 %v1859, %v1857
        %v1883 = vpack.c.bf16 %v1863, %v1861
        %v1884 = vpack.c.bf16 %v1867, %v1865
        %v1885 = vpack.c.bf16 %v1871, %v1869
        %v1886 = vpack.c.bf16 %v1875, %v1873
        %v1887 = vpack.c.bf16 %v1879, %v1877
        %v1888 = vld [vmem:[#allocation3] sm:$0xff]
        %v1889 = vld [vmem:[#allocation3 + $0x8] sm:$0xff]
        %v1890 = vld [vmem:[#allocation3 + $0x10] sm:$0xff]
        %v1891 = vld [vmem:[#allocation3 + $0x18] sm:$0xff]
        %v1892 = vld [vmem:[#allocation3 + $0x20] sm:$0xff]
        %v1893 = vld [vmem:[#allocation3 + $0x28] sm:$0xff]
        %v1894 = vld [vmem:[#allocation3 + $0x30] sm:$0xff]
        %v1895 = vld [vmem:[#allocation3 + $0x38] sm:$0xff]
        %1896 = vmatprep.subr.bf16.mxu0 0
        %1897 = vmatpush1.bf16.msra.mxu0 %v1888
        %1898 = vmatprep.subr.bf16.mxu0 0
        %1899 = vmatpush1.bf16.msra.mxu0 %v1889
        %1900 = vmatprep.subr.bf16.mxu0 0
        %1901 = vmatpush1.bf16.msra.mxu0 %v1890
        %1902 = vmatprep.subr.bf16.mxu0 0
        %1903 = vmatpush1.bf16.msra.mxu0 %v1891
        %1904 = vmatprep.subr.bf16.mxu0 0
        %1905 = vmatpush1.bf16.msra.mxu0 %v1892
        %1906 = vmatprep.subr.bf16.mxu0 0
        %1907 = vmatpush1.bf16.msra.mxu0 %v1893
        %1908 = vmatprep.subr.bf16.mxu0 0
        %1909 = vmatpush1.bf16.msra.mxu0 %v1894
        %1910 = vmatprep.subr.bf16.mxu0 0
        %1911 = vmatpush1.bf16.msra.mxu0 %v1895
        %1912 = vmatprep.subr.bf16.mxu0 0
        %1913 = vmatpush1.bf16.msra.mxu0 0
        %1914 = vmatprep.subr.bf16.mxu0 0
        %1915 = vmatpush1.bf16.msra.mxu0 0
        %1916 = vmatprep.subr.bf16.mxu0 0
        %1917 = vmatpush1.bf16.msra.mxu0 0
        %1918 = vmatprep.subr.bf16.mxu0 0
        %1919 = vmatpush1.bf16.msra.mxu0 0
        %1920 = vmatprep.subr.bf16.mxu0 0
        %1921 = vmatpush1.bf16.msra.mxu0 0
        %1922 = vmatprep.subr.bf16.mxu0 0
        %1923 = vmatpush1.bf16.msra.mxu0 0
        %1924 = vmatprep.subr.bf16.mxu0 0
        %1925 = vmatpush1.bf16.msra.mxu0 0
        %1926 = vmatprep.subr.bf16.mxu0 0
        %1927 = vmatpush1.bf16.msra.mxu0 0
        %1928 = vmatprep.mubr.bf16.mxu0 0
        %1929 = vmatmul.mubr.bf16.gmra.mrb[0].mxu0 %v1880
        %v1930 = vpop.f32.mrb[0].mxu0
        %v1931 = vadd.f32 0.0, %v1930
        %v1932 = vpop.f32.mrb[0].mxu0
        %v1933 = vpop.f32.mrb[0].mxu0
        %v1934 = vadd.f32 0.0, %v1933
        %v1935 = vpop.f32.mrb[0].mxu0
        %1936 = vmatprep.mubr.bf16.mxu0 0
        %1937 = vmatmul.mubr.bf16.gmra.mrb[0].mxu0 %v1881
        %v1938 = vpop.f32.mrb[0].mxu0
        %v1939 = vadd.f32 0.0, %v1938
        %v1940 = vpop.f32.mrb[0].mxu0
        %v1941 = vpop.f32.mrb[0].mxu0
        %v1942 = vadd.f32 0.0, %v1941
        %v1943 = vpop.f32.mrb[0].mxu0
        %1944 = vmatprep.mubr.bf16.mxu0 0
        %1945 = vmatmul.mubr.bf16.gmra.mrb[0].mxu0 %v1882
        %v1946 = vpop.f32.mrb[0].mxu0
        %v1947 = vadd.f32 0.0, %v1946
        %v1948 = vpop.f32.mrb[0].mxu0
        %v1949 = vpop.f32.mrb[0].mxu0
        %v1950 = vadd.f32 0.0, %v1949
        %v1951 = vpop.f32.mrb[0].mxu0
        %1952 = vmatprep.mubr.bf16.mxu0 0
        %1953 = vmatmul.mubr.bf16.gmra.mrb[0].mxu0 %v1883
        %v1954 = vpop.f32.mrb[0].mxu0
        %v1955 = vadd.f32 0.0, %v1954
        %v1956 = vpop.f32.mrb[0].mxu0
        %v1957 = vpop.f32.mrb[0].mxu0
        %v1958 = vadd.f32 0.0, %v1957
        %v1959 = vpop.f32.mrb[0].mxu0
        %1960 = vmatprep.mubr.bf16.mxu0 0
        %1961 = vmatmul.mubr.bf16.gmra.mrb[0].mxu0 %v1884
        %v1962 = vpop.f32.mrb[0].mxu0
        %v1963 = vadd.f32 0.0, %v1962
        %v1964 = vpop.f32.mrb[0].mxu0
        %v1965 = vpop.f32.mrb[0].mxu0
        %v1966 = vadd.f32 0.0, %v1965
        %v1967 = vpop.f32.mrb[0].mxu0
        %1968 = vmatprep.mubr.bf16.mxu0 0
        %1969 = vmatmul.mubr.bf16.gmra.mrb[0].mxu0 %v1885
        %v1970 = vpop.f32.mrb[0].mxu0
        %v1971 = vadd.f32 0.0, %v1970
        %v1972 = vpop.f32.mrb[0].mxu0
        %v1973 = vpop.f32.mrb[0].mxu0
        %v1974 = vadd.f32 0.0, %v1973
        %v1975 = vpop.f32.mrb[0].mxu0
        %1976 = vmatprep.mubr.bf16.mxu0 0
        %1977 = vmatmul.mubr.bf16.gmra.mrb[0].mxu0 %v1886
        %v1978 = vpop.f32.mrb[0].mxu0
        %v1979 = vadd.f32 0.0, %v1978
        %v1980 = vpop.f32.mrb[0].mxu0
        %v1981 = vpop.f32.mrb[0].mxu0
        %v1982 = vadd.f32 0.0, %v1981
        %v1983 = vpop.f32.mrb[0].mxu0
        %1984 = vmatprep.mubr.bf16.mxu0 0
        %1985 = vmatmul.mubr.bf16.gmra.mrb[0].mxu0 %v1887
        %v1986 = vpop.f32.mrb[0].mxu0
        %v1987 = vadd.f32 0.0, %v1986
        %v1988 = vpop.f32.mrb[0].mxu0
        %v1989 = vpop.f32.mrb[0].mxu0
        %v1990 = vadd.f32 0.0, %v1989
        %v1991 = vpop.f32.mrb[0].mxu0
        %1992 = vdwg.mxu0
        %v1993 = vmax.f32 %v1931, 0.0
        %v1994 = vmax.f32 %v1934, 0.0
        %v1995 = vmax.f32 %v1939, 0.0
        %v1996 = vmax.f32 %v1942, 0.0
        %v1997 = vmax.f32 %v1947, 0.0
        %v1998 = vmax.f32 %v1950, 0.0
        %v1999 = vmax.f32 %v1955, 0.0
        %v2000 = vmax.f32 %v1958, 0.0
        %v2001 = vmax.f32 %v1963, 0.0
        %v2002 = vmax.f32 %v1966, 0.0
        %v2003 = vmax.f32 %v1971, 0.0
        %v2004 = vmax.f32 %v1974, 0.0
        %v2005 = vmax.f32 %v1979, 0.0
        %v2006 = vmax.f32 %v1982, 0.0
        %v2007 = vmax.f32 %v1987, 0.0
        %v2008 = vmax.f32 %v1990, 0.0
        %2009 = vst [vmem:[#allocation6] sm:$0xff] %v1993
        %2010 = vst [vmem:[#allocation6 + $0x8] sm:$0xff] %v1994
        %2011 = vst [vmem:[#allocation6 + $0x10] sm:$0xff] %v1995
        %2012 = vst [vmem:[#allocation6 + $0x18] sm:$0xff] %v1996
        %2013 = vst [vmem:[#allocation6 + $0x20] sm:$0xff] %v1997
        %2014 = vst [vmem:[#allocation6 + $0x28] sm:$0xff] %v1998
        %2015 = vst [vmem:[#allocation6 + $0x30] sm:$0xff] %v1999
        %2016 = vst [vmem:[#allocation6 + $0x38] sm:$0xff] %v2000
        %2017 = vst [vmem:[#allocation6 + $0x40] sm:$0xff] %v2001
        %2018 = vst [vmem:[#allocation6 + $0x48] sm:$0xff] %v2002
        %2019 = vst [vmem:[#allocation6 + $0x50] sm:$0xff] %v2003
        %2020 = vst [vmem:[#allocation6 + $0x58] sm:$0xff] %v2004
        %2021 = vst [vmem:[#allocation6 + $0x60] sm:$0xff] %v2005
        %2022 = vst [vmem:[#allocation6 + $0x68] sm:$0xff] %v2006
        %2023 = vst [vmem:[#allocation6 + $0x70] sm:$0xff] %v2007
        %2024 = vst [vmem:[#allocation6 + $0x78] sm:$0xff] %v2008
        %v2025 = vld [vmem:[#allocation5 + $0x9] ss:$0 sm:$0xff]
        %v2026 = vld [vmem:[#allocation4] sm:$0xff]
        %v2027 = vld [vmem:[#allocation4 + $0x8] sm:$0xff]
        %v2028 = vld [vmem:[#allocation4 + $0x10] sm:$0xff]
        %v2029 = vld [vmem:[#allocation4 + $0x18] sm:$0xff]
        %v2030 = vld [vmem:[#allocation4 + $0x20] sm:$0xff]
        %v2031 = vld [vmem:[#allocation4 + $0x28] sm:$0xff]
        %v2032 = vld [vmem:[#allocation4 + $0x30] sm:$0xff]
        %v2033 = vld [vmem:[#allocation4 + $0x38] sm:$0xff]
        %v2034 = vld [vmem:[#allocation4 + $0x40] sm:$0xff]
        %v2035 = vld [vmem:[#allocation4 + $0x48] sm:$0xff]
        %v2036 = vld [vmem:[#allocation4 + $0x50] sm:$0xff]
        %v2037 = vld [vmem:[#allocation4 + $0x58] sm:$0xff]
        %v2038 = vld [vmem:[#allocation4 + $0x60] sm:$0xff]
        %v2039 = vld [vmem:[#allocation4 + $0x68] sm:$0xff]
        %v2040 = vld [vmem:[#allocation4 + $0x70] sm:$0xff]
        %v2041 = vld [vmem:[#allocation4 + $0x78] sm:$0xff]
        %2043 = vset.pattern.permute.xlu0 4
        %2044 = vperm.xlu0 %2043, %v2026
        %v2045 = vpop.permute.xlu0 %2044
        %2048 = vset.pattern.permute.xlu0 4
        %2049 = vperm.xlu0 %2048, %v2027
        %v2050 = vpop.permute.xlu0 %2049
        %2053 = vset.pattern.permute.xlu0 4
        %2054 = vperm.xlu0 %2053, %v2028
        %v2055 = vpop.permute.xlu0 %2054
        %2058 = vset.pattern.permute.xlu0 4
        %2059 = vperm.xlu0 %2058, %v2029
        %v2060 = vpop.permute.xlu0 %2059
        %2063 = vset.pattern.permute.xlu0 4
        %2064 = vperm.xlu0 %2063, %v2030
        %v2065 = vpop.permute.xlu0 %2064
        %2068 = vset.pattern.permute.xlu0 4
        %2069 = vperm.xlu0 %2068, %v2031
        %v2070 = vpop.permute.xlu0 %2069
        %2073 = vset.pattern.permute.xlu0 4
        %2074 = vperm.xlu0 %2073, %v2032
        %v2075 = vpop.permute.xlu0 %2074
        %2078 = vset.pattern.permute.xlu0 4
        %2079 = vperm.xlu0 %2078, %v2033
        %v2080 = vpop.permute.xlu0 %2079
        %2083 = vset.pattern.permute.xlu0 4
        %2084 = vperm.xlu0 %2083, %v2034
        %v2085 = vpop.permute.xlu0 %2084
        %2088 = vset.pattern.permute.xlu0 4
        %2089 = vperm.xlu0 %2088, %v2035
        %v2090 = vpop.permute.xlu0 %2089
        %2093 = vset.pattern.permute.xlu0 4
        %2094 = vperm.xlu0 %2093, %v2036
        %v2095 = vpop.permute.xlu0 %2094
        %2098 = vset.pattern.permute.xlu0 4
        %2099 = vperm.xlu0 %2098, %v2037
        %v2100 = vpop.permute.xlu0 %2099
        %2103 = vset.pattern.permute.xlu0 4
        %2104 = vperm.xlu0 %2103, %v2038
        %v2105 = vpop.permute.xlu0 %2104
        %2108 = vset.pattern.permute.xlu0 4
        %2109 = vperm.xlu0 %2108, %v2039
        %v2110 = vpop.permute.xlu0 %2109
        %2113 = vset.pattern.permute.xlu0 4
        %2114 = vperm.xlu0 %2113, %v2040
        %v2115 = vpop.permute.xlu0 %2114
        %2118 = vset.pattern.permute.xlu0 4
        %2119 = vperm.xlu0 %2118, %v2041
        %v2120 = vpop.permute.xlu0 %2119
        %v2122 = vadd.f32 %v2045, %v2025
        %v2123 = vadd.f32 %v2050, %v2025
        %v2124 = vadd.f32 %v2055, %v2025
        %v2125 = vadd.f32 %v2060, %v2025
        %v2126 = vadd.f32 %v2065, %v2025
        %v2127 = vadd.f32 %v2070, %v2025
        %v2128 = vadd.f32 %v2075, %v2025
        %v2129 = vadd.f32 %v2080, %v2025
        %v2130 = vadd.f32 %v2085, %v2025
        %v2131 = vadd.f32 %v2090, %v2025
        %v2132 = vadd.f32 %v2095, %v2025
        %v2133 = vadd.f32 %v2100, %v2025
        %v2134 = vadd.f32 %v2105, %v2025
        %v2135 = vadd.f32 %v2110, %v2025
        %v2136 = vadd.f32 %v2115, %v2025
        %v2137 = vadd.f32 %v2120, %v2025
        %v2138 = vmul.f32 %v2122, 0.2
        %v2139 = vmul.f32 %v2123, 0.2
        %v2140 = vmul.f32 %v2124, 0.2
        %v2141 = vmul.f32 %v2125, 0.2
        %v2142 = vmul.f32 %v2126, 0.2
        %v2143 = vmul.f32 %v2127, 0.2
        %v2144 = vmul.f32 %v2128, 0.2
        %v2145 = vmul.f32 %v2129, 0.2
        %v2146 = vmul.f32 %v2130, 0.2
        %v2147 = vmul.f32 %v2131, 0.2
        %v2148 = vmul.f32 %v2132, 0.2
        %v2149 = vmul.f32 %v2133, 0.2
        %v2150 = vmul.f32 %v2134, 0.2
        %v2151 = vmul.f32 %v2135, 0.2
        %v2152 = vmul.f32 %v2136, 0.2
        %v2153 = vmul.f32 %v2137, 0.2
        %v2154 = vmax.f32 %v2122, %v2138
        %v2155 = vmax.f32 %v2123, %v2139
        %v2156 = vmax.f32 %v2124, %v2140
        %v2157 = vmax.f32 %v2125, %v2141
        %v2158 = vmax.f32 %v2126, %v2142
        %v2159 = vmax.f32 %v2127, %v2143
        %v2160 = vmax.f32 %v2128, %v2144
        %v2161 = vmax.f32 %v2129, %v2145
        %v2162 = vmax.f32 %v2130, %v2146
        %v2163 = vmax.f32 %v2131, %v2147
        %v2164 = vmax.f32 %v2132, %v2148
        %v2165 = vmax.f32 %v2133, %v2149
        %v2166 = vmax.f32 %v2134, %v2150
        %v2167 = vmax.f32 %v2135, %v2151
        %v2168 = vmax.f32 %v2136, %v2152
        %v2169 = vmax.f32 %v2137, %v2153
        %v2170 = vld [vmem:[#allocation16] sm:$0xff]
        %v2171 = vld [vmem:[#allocation16 + $0x8] sm:$0xff]
        %v2172 = vld [vmem:[#allocation16 + $0x10] sm:$0xff]
        %v2173 = vld [vmem:[#allocation16 + $0x18] sm:$0xff]
        %v2174 = vunpack.c.0.s8 %v2170
        %v2175 = vunpack.c.1.s8 %v2170
        %v2176 = vunpack.c.2.s8 %v2170
        %v2177 = vunpack.c.3.s8 %v2170
        %v2178 = vunpack.c.0.s8 %v2171
        %v2179 = vunpack.c.1.s8 %v2171
        %v2180 = vunpack.c.2.s8 %v2171
        %v2181 = vunpack.c.3.s8 %v2171
        %v2182 = vunpack.c.0.s8 %v2172
        %v2183 = vunpack.c.1.s8 %v2172
        %v2184 = vunpack.c.2.s8 %v2172
        %v2185 = vunpack.c.3.s8 %v2172
        %v2186 = vunpack.c.0.s8 %v2173
        %v2187 = vunpack.c.1.s8 %v2173
        %v2188 = vunpack.c.2.s8 %v2173
        %v2189 = vunpack.c.3.s8 %v2173
        %v2190 = vcvt.s32.f32 %v2174
        %v2191 = vcvt.s32.f32 %v2175
        %v2192 = vcvt.s32.f32 %v2176
        %v2193 = vcvt.s32.f32 %v2177
        %v2194 = vcvt.s32.f32 %v2178
        %v2195 = vcvt.s32.f32 %v2179
        %v2196 = vcvt.s32.f32 %v2180
        %v2197 = vcvt.s32.f32 %v2181
        %v2198 = vcvt.s32.f32 %v2182
        %v2199 = vcvt.s32.f32 %v2183
        %v2200 = vcvt.s32.f32 %v2184
        %v2201 = vcvt.s32.f32 %v2185
        %v2202 = vcvt.s32.f32 %v2186
        %v2203 = vcvt.s32.f32 %v2187
        %v2204 = vcvt.s32.f32 %v2188
        %v2205 = vcvt.s32.f32 %v2189
        %v2206 = vsub.f32 %v2190, 1.0
        %v2207 = vsub.f32 %v2191, 1.0
        %v2208 = vsub.f32 %v2192, 1.0
        %v2209 = vsub.f32 %v2193, 1.0
        %v2210 = vsub.f32 %v2194, 1.0
        %v2211 = vsub.f32 %v2195, 1.0
        %v2212 = vsub.f32 %v2196, 1.0
        %v2213 = vsub.f32 %v2197, 1.0
        %v2214 = vsub.f32 %v2198, 1.0
        %v2215 = vsub.f32 %v2199, 1.0
        %v2216 = vsub.f32 %v2200, 1.0
        %v2217 = vsub.f32 %v2201, 1.0
        %v2218 = vsub.f32 %v2202, 1.0
        %v2219 = vsub.f32 %v2203, 1.0
        %v2220 = vsub.f32 %v2204, 1.0
        %v2221 = vsub.f32 %v2205, 1.0
        %v2222 = vmul.f32 %v2206, 1e+30
        %v2223 = vmul.f32 %v2207, 1e+30
        %v2224 = vmul.f32 %v2208, 1e+30
        %v2225 = vmul.f32 %v2209, 1e+30
        %v2226 = vmul.f32 %v2210, 1e+30
        %v2227 = vmul.f32 %v2211, 1e+30
        %v2228 = vmul.f32 %v2212, 1e+30
        %v2229 = vmul.f32 %v2213, 1e+30
        %v2230 = vmul.f32 %v2214, 1e+30
        %v2231 = vmul.f32 %v2215, 1e+30
        %v2232 = vmul.f32 %v2216, 1e+30
        %v2233 = vmul.f32 %v2217, 1e+30
        %v2234 = vmul.f32 %v2218, 1e+30
        %v2235 = vmul.f32 %v2219, 1e+30
        %v2236 = vmul.f32 %v2220, 1e+30
        %v2237 = vmul.f32 %v2221, 1e+30
        %v2238 = vadd.f32 %v2154, %v2222
        %v2239 = vadd.f32 %v2155, %v2223
        %v2240 = vadd.f32 %v2156, %v2224
        %v2241 = vadd.f32 %v2157, %v2225
        %v2242 = vadd.f32 %v2158, %v2226
        %v2243 = vadd.f32 %v2159, %v2227
        %v2244 = vadd.f32 %v2160, %v2228
        %v2245 = vadd.f32 %v2161, %v2229
        %v2246 = vadd.f32 %v2162, %v2230
        %v2247 = vadd.f32 %v2163, %v2231
        %v2248 = vadd.f32 %v2164, %v2232
        %v2249 = vadd.f32 %v2165, %v2233
        %v2250 = vadd.f32 %v2166, %v2234
        %v2251 = vadd.f32 %v2167, %v2235
        %v2252 = vadd.f32 %v2168, %v2236
        %v2253 = vadd.f32 %v2169, %v2237
        %2254 = vmax.xlane.f32.xlu0 %v2238
        %v2255 = vpop.xlane.xlu0 %2254
        %2256 = vmax.xlane.f32.xlu0 %v2239
        %v2257 = vpop.xlane.xlu0 %2256
        %2258 = vmax.xlane.f32.xlu0 %v2240
        %v2259 = vpop.xlane.xlu0 %2258
        %2260 = vmax.xlane.f32.xlu0 %v2241
        %v2261 = vpop.xlane.xlu0 %2260
        %2262 = vmax.xlane.f32.xlu0 %v2242
        %v2263 = vpop.xlane.xlu0 %2262
        %2264 = vmax.xlane.f32.xlu0 %v2243
        %v2265 = vpop.xlane.xlu0 %2264
        %2266 = vmax.xlane.f32.xlu0 %v2244
        %v2267 = vpop.xlane.xlu0 %2266
        %2268 = vmax.xlane.f32.xlu0 %v2245
        %v2269 = vpop.xlane.xlu0 %2268
        %2270 = vmax.xlane.f32.xlu0 %v2246
        %v2271 = vpop.xlane.xlu0 %2270
        %2272 = vmax.xlane.f32.xlu0 %v2247
        %v2273 = vpop.xlane.xlu0 %2272
        %2274 = vmax.xlane.f32.xlu0 %v2248
        %v2275 = vpop.xlane.xlu0 %2274
        %2276 = vmax.xlane.f32.xlu0 %v2249
        %v2277 = vpop.xlane.xlu0 %2276
        %2278 = vmax.xlane.f32.xlu0 %v2250
        %v2279 = vpop.xlane.xlu0 %2278
        %2280 = vmax.xlane.f32.xlu0 %v2251
        %v2281 = vpop.xlane.xlu0 %2280
        %2282 = vmax.xlane.f32.xlu0 %v2252
        %v2283 = vpop.xlane.xlu0 %2282
        %2284 = vmax.xlane.f32.xlu0 %v2253
        %v2285 = vpop.xlane.xlu0 %2284
        %v2286 = vsub.f32 %v2238, %v2255
        %v2287 = vsub.f32 %v2239, %v2257
        %v2288 = vsub.f32 %v2240, %v2259
        %v2289 = vsub.f32 %v2241, %v2261
        %v2290 = vsub.f32 %v2242, %v2263
        %v2291 = vsub.f32 %v2243, %v2265
        %v2292 = vsub.f32 %v2244, %v2267
        %v2293 = vsub.f32 %v2245, %v2269
        %v2294 = vsub.f32 %v2246, %v2271
        %v2295 = vsub.f32 %v2247, %v2273
        %v2296 = vsub.f32 %v2248, %v2275
        %v2297 = vsub.f32 %v2249, %v2277
        %v2298 = vsub.f32 %v2250, %v2279
        %v2299 = vsub.f32 %v2251, %v2281
        %v2300 = vsub.f32 %v2252, %v2283
        %v2301 = vsub.f32 %v2253, %v2285
        %v2302 = vmul.f32 %v2286, 1.442695
        %v2303 = vpow.pop %v2302
        %v2304 = vmul.f32 %v2287, 1.442695
        %v2305 = vpow.pop %v2304
        %v2306 = vmul.f32 %v2288, 1.442695
        %v2307 = vpow.pop %v2306
        %v2308 = vmul.f32 %v2289, 1.442695
        %v2309 = vpow.pop %v2308
        %v2310 = vmul.f32 %v2290, 1.442695
        %v2311 = vpow.pop %v2310
        %v2312 = vmul.f32 %v2291, 1.442695
        %v2313 = vpow.pop %v2312
        %v2314 = vmul.f32 %v2292, 1.442695
        %v2315 = vpow.pop %v2314
        %v2316 = vmul.f32 %v2293, 1.442695
        %v2317 = vpow.pop %v2316
        %v2318 = vmul.f32 %v2294, 1.442695
        %v2319 = vpow.pop %v2318
        %v2320 = vmul.f32 %v2295, 1.442695
        %v2321 = vpow.pop %v2320
        %v2322 = vmul.f32 %v2296, 1.442695
        %v2323 = vpow.pop %v2322
        %v2324 = vmul.f32 %v2297, 1.442695
        %v2325 = vpow.pop %v2324
        %v2326 = vmul.f32 %v2298, 1.442695
        %v2327 = vpow.pop %v2326
        %v2328 = vmul.f32 %v2299, 1.442695
        %v2329 = vpow.pop %v2328
        %v2330 = vmul.f32 %v2300, 1.442695
        %v2331 = vpow.pop %v2330
        %v2332 = vmul.f32 %v2301, 1.442695
        %v2333 = vpow.pop %v2332
        %v2334 = vmul.f32 %v2303, %v2190
        %v2335 = vmul.f32 %v2305, %v2191
        %v2336 = vmul.f32 %v2307, %v2192
        %v2337 = vmul.f32 %v2309, %v2193
        %v2338 = vmul.f32 %v2311, %v2194
        %v2339 = vmul.f32 %v2313, %v2195
        %v2340 = vmul.f32 %v2315, %v2196
        %v2341 = vmul.f32 %v2317, %v2197
        %v2342 = vmul.f32 %v2319, %v2198
        %v2343 = vmul.f32 %v2321, %v2199
        %v2344 = vmul.f32 %v2323, %v2200
        %v2345 = vmul.f32 %v2325, %v2201
        %v2346 = vmul.f32 %v2327, %v2202
        %v2347 = vmul.f32 %v2329, %v2203
        %v2348 = vmul.f32 %v2331, %v2204
        %v2349 = vmul.f32 %v2333, %v2205
        %2350 = vadd.xlane.f32.xlu0 %v2334
        %v2351 = vpop.xlane.xlu0 %2350
        %2352 = vadd.xlane.f32.xlu0 %v2335
        %v2353 = vpop.xlane.xlu0 %2352
        %2354 = vadd.xlane.f32.xlu0 %v2336
        %v2355 = vpop.xlane.xlu0 %2354
        %2356 = vadd.xlane.f32.xlu0 %v2337
        %v2357 = vpop.xlane.xlu0 %2356
        %2358 = vadd.xlane.f32.xlu0 %v2338
        %v2359 = vpop.xlane.xlu0 %2358
        %2360 = vadd.xlane.f32.xlu0 %v2339
        %v2361 = vpop.xlane.xlu0 %2360
        %2362 = vadd.xlane.f32.xlu0 %v2340
        %v2363 = vpop.xlane.xlu0 %2362
        %2364 = vadd.xlane.f32.xlu0 %v2341
        %v2365 = vpop.xlane.xlu0 %2364
        %2366 = vadd.xlane.f32.xlu0 %v2342
        %v2367 = vpop.xlane.xlu0 %2366
        %2368 = vadd.xlane.f32.xlu0 %v2343
        %v2369 = vpop.xlane.xlu0 %2368
        %2370 = vadd.xlane.f32.xlu0 %v2344
        %v2371 = vpop.xlane.xlu0 %2370
        %2372 = vadd.xlane.f32.xlu0 %v2345
        %v2373 = vpop.xlane.xlu0 %2372
        %2374 = vadd.xlane.f32.xlu0 %v2346
        %v2375 = vpop.xlane.xlu0 %2374
        %2376 = vadd.xlane.f32.xlu0 %v2347
        %v2377 = vpop.xlane.xlu0 %2376
        %2378 = vadd.xlane.f32.xlu0 %v2348
        %v2379 = vpop.xlane.xlu0 %2378
        %2380 = vadd.xlane.f32.xlu0 %v2349
        %v2381 = vpop.xlane.xlu0 %2380
        %v2382 = vmax.f32 %v2351, 1e-30
        %v2383 = vmax.f32 %v2353, 1e-30
        %v2384 = vmax.f32 %v2355, 1e-30
        %v2385 = vmax.f32 %v2357, 1e-30
        %v2386 = vmax.f32 %v2359, 1e-30
        %v2387 = vmax.f32 %v2361, 1e-30
        %v2388 = vmax.f32 %v2363, 1e-30
        %v2389 = vmax.f32 %v2365, 1e-30
        %v2390 = vmax.f32 %v2367, 1e-30
        %v2391 = vmax.f32 %v2369, 1e-30
        %v2392 = vmax.f32 %v2371, 1e-30
        %v2393 = vmax.f32 %v2373, 1e-30
        %v2394 = vmax.f32 %v2375, 1e-30
        %v2395 = vmax.f32 %v2377, 1e-30
        %v2396 = vmax.f32 %v2379, 1e-30
        %v2397 = vmax.f32 %v2381, 1e-30
        %v2398 = vrcp.pop %v2382
        %v2399 = vmul.f32 %v2334, %v2398
        %v2400 = vrcp.pop %v2383
        %v2401 = vmul.f32 %v2335, %v2400
        %v2402 = vrcp.pop %v2384
        %v2403 = vmul.f32 %v2336, %v2402
        %v2404 = vrcp.pop %v2385
        %v2405 = vmul.f32 %v2337, %v2404
        %v2406 = vrcp.pop %v2386
        %v2407 = vmul.f32 %v2338, %v2406
        %v2408 = vrcp.pop %v2387
        %v2409 = vmul.f32 %v2339, %v2408
        %v2410 = vrcp.pop %v2388
        %v2411 = vmul.f32 %v2340, %v2410
        %v2412 = vrcp.pop %v2389
        %v2413 = vmul.f32 %v2341, %v2412
        %v2414 = vrcp.pop %v2390
        %v2415 = vmul.f32 %v2342, %v2414
        %v2416 = vrcp.pop %v2391
        %v2417 = vmul.f32 %v2343, %v2416
        %v2418 = vrcp.pop %v2392
        %v2419 = vmul.f32 %v2344, %v2418
        %v2420 = vrcp.pop %v2393
        %v2421 = vmul.f32 %v2345, %v2420
        %v2422 = vrcp.pop %v2394
        %v2423 = vmul.f32 %v2346, %v2422
        %v2424 = vrcp.pop %v2395
        %v2425 = vmul.f32 %v2347, %v2424
        %v2426 = vrcp.pop %v2396
        %v2427 = vmul.f32 %v2348, %v2426
        %v2428 = vrcp.pop %v2397
        %v2429 = vmul.f32 %v2349, %v2428
        %v2430 = vpack.c.bf16 %v2401, %v2399
        %v2431 = vpack.c.bf16 %v2405, %v2403
        %v2432 = vpack.c.bf16 %v2409, %v2407
        %v2433 = vpack.c.bf16 %v2413, %v2411
        %v2434 = vpack.c.bf16 %v2417, %v2415
        %v2435 = vpack.c.bf16 %v2421, %v2419
        %v2436 = vpack.c.bf16 %v2425, %v2423
        %v2437 = vpack.c.bf16 %v2429, %v2427
        %v2438 = vld [vmem:[#allocation3 + $0x40] sm:$0xff]
        %v2439 = vld [vmem:[#allocation3 + $0x48] sm:$0xff]
        %v2440 = vld [vmem:[#allocation3 + $0x50] sm:$0xff]
        %v2441 = vld [vmem:[#allocation3 + $0x58] sm:$0xff]
        %v2442 = vld [vmem:[#allocation3 + $0x60] sm:$0xff]
        %v2443 = vld [vmem:[#allocation3 + $0x68] sm:$0xff]
        %v2444 = vld [vmem:[#allocation3 + $0x70] sm:$0xff]
        %v2445 = vld [vmem:[#allocation3 + $0x78] sm:$0xff]
        %2446 = vmatprep.subr.bf16.mxu0 0
        %2447 = vmatpush1.bf16.msra.mxu0 %v2438
        %2448 = vmatprep.subr.bf16.mxu0 0
        %2449 = vmatpush1.bf16.msra.mxu0 %v2439
        %2450 = vmatprep.subr.bf16.mxu0 0
        %2451 = vmatpush1.bf16.msra.mxu0 %v2440
        %2452 = vmatprep.subr.bf16.mxu0 0
        %2453 = vmatpush1.bf16.msra.mxu0 %v2441
        %2454 = vmatprep.subr.bf16.mxu0 0
        %2455 = vmatpush1.bf16.msra.mxu0 %v2442
        %2456 = vmatprep.subr.bf16.mxu0 0
        %2457 = vmatpush1.bf16.msra.mxu0 %v2443
        %2458 = vmatprep.subr.bf16.mxu0 0
        %2459 = vmatpush1.bf16.msra.mxu0 %v2444
        %2460 = vmatprep.subr.bf16.mxu0 0
        %2461 = vmatpush1.bf16.msra.mxu0 %v2445
        %2462 = vmatprep.subr.bf16.mxu0 0
        %2463 = vmatpush1.bf16.msra.mxu0 0
        %2464 = vmatprep.subr.bf16.mxu0 0
        %2465 = vmatpush1.bf16.msra.mxu0 0
        %2466 = vmatprep.subr.bf16.mxu0 0
        %2467 = vmatpush1.bf16.msra.mxu0 0
        %2468 = vmatprep.subr.bf16.mxu0 0
        %2469 = vmatpush1.bf16.msra.mxu0 0
        %2470 = vmatprep.subr.bf16.mxu0 0
        %2471 = vmatpush1.bf16.msra.mxu0 0
        %2472 = vmatprep.subr.bf16.mxu0 0
        %2473 = vmatpush1.bf16.msra.mxu0 0
        %2474 = vmatprep.subr.bf16.mxu0 0
        %2475 = vmatpush1.bf16.msra.mxu0 0
        %2476 = vmatprep.subr.bf16.mxu0 0
        %2477 = vmatpush1.bf16.msra.mxu0 0
        %2478 = vmatprep.mubr.bf16.mxu0 0
        %2479 = vmatmul.mubr.bf16.gmra.mrb[0].mxu0 %v2430
        %v2480 = vpop.f32.mrb[0].mxu0
        %v2481 = vadd.f32 0.0, %v2480
        %v2482 = vpop.f32.mrb[0].mxu0
        %v2483 = vpop.f32.mrb[0].mxu0
        %v2484 = vadd.f32 0.0, %v2483
        %v2485 = vpop.f32.mrb[0].mxu0
        %2486 = vmatprep.mubr.bf16.mxu0 0
        %2487 = vmatmul.mubr.bf16.gmra.mrb[0].mxu0 %v2431
        %v2488 = vpop.f32.mrb[0].mxu0
        %v2489 = vadd.f32 0.0, %v2488
        %v2490 = vpop.f32.mrb[0].mxu0
        %v2491 = vpop.f32.mrb[0].mxu0
        %v2492 = vadd.f32 0.0, %v2491
        %v2493 = vpop.f32.mrb[0].mxu0
        %2494 = vmatprep.mubr.bf16.mxu0 0
        %2495 = vmatmul.mubr.bf16.gmra.mrb[0].mxu0 %v2432
        %v2496 = vpop.f32.mrb[0].mxu0
        %v2497 = vadd.f32 0.0, %v2496
        %v2498 = vpop.f32.mrb[0].mxu0
        %v2499 = vpop.f32.mrb[0].mxu0
        %v2500 = vadd.f32 0.0, %v2499
        %v2501 = vpop.f32.mrb[0].mxu0
        %2502 = vmatprep.mubr.bf16.mxu0 0
        %2503 = vmatmul.mubr.bf16.gmra.mrb[0].mxu0 %v2433
        %v2504 = vpop.f32.mrb[0].mxu0
        %v2505 = vadd.f32 0.0, %v2504
        %v2506 = vpop.f32.mrb[0].mxu0
        %v2507 = vpop.f32.mrb[0].mxu0
        %v2508 = vadd.f32 0.0, %v2507
        %v2509 = vpop.f32.mrb[0].mxu0
        %2510 = vmatprep.mubr.bf16.mxu0 0
        %2511 = vmatmul.mubr.bf16.gmra.mrb[0].mxu0 %v2434
        %v2512 = vpop.f32.mrb[0].mxu0
        %v2513 = vadd.f32 0.0, %v2512
        %v2514 = vpop.f32.mrb[0].mxu0
        %v2515 = vpop.f32.mrb[0].mxu0
        %v2516 = vadd.f32 0.0, %v2515
        %v2517 = vpop.f32.mrb[0].mxu0
        %2518 = vmatprep.mubr.bf16.mxu0 0
        %2519 = vmatmul.mubr.bf16.gmra.mrb[0].mxu0 %v2435
        %v2520 = vpop.f32.mrb[0].mxu0
        %v2521 = vadd.f32 0.0, %v2520
        %v2522 = vpop.f32.mrb[0].mxu0
        %v2523 = vpop.f32.mrb[0].mxu0
        %v2524 = vadd.f32 0.0, %v2523
        %v2525 = vpop.f32.mrb[0].mxu0
        %2526 = vmatprep.mubr.bf16.mxu0 0
        %2527 = vmatmul.mubr.bf16.gmra.mrb[0].mxu0 %v2436
        %v2528 = vpop.f32.mrb[0].mxu0
        %v2529 = vadd.f32 0.0, %v2528
        %v2530 = vpop.f32.mrb[0].mxu0
        %v2531 = vpop.f32.mrb[0].mxu0
        %v2532 = vadd.f32 0.0, %v2531
        %v2533 = vpop.f32.mrb[0].mxu0
        %2534 = vmatprep.mubr.bf16.mxu0 0
        %2535 = vmatmul.mubr.bf16.gmra.mrb[0].mxu0 %v2437
        %v2536 = vpop.f32.mrb[0].mxu0
        %v2537 = vadd.f32 0.0, %v2536
        %v2538 = vpop.f32.mrb[0].mxu0
        %v2539 = vpop.f32.mrb[0].mxu0
        %v2540 = vadd.f32 0.0, %v2539
        %v2541 = vpop.f32.mrb[0].mxu0
        %2542 = vdwg.mxu0
        %v2543 = vmax.f32 %v2481, 0.0
        %v2544 = vmax.f32 %v2484, 0.0
        %v2545 = vmax.f32 %v2489, 0.0
        %v2546 = vmax.f32 %v2492, 0.0
        %v2547 = vmax.f32 %v2497, 0.0
        %v2548 = vmax.f32 %v2500, 0.0
        %v2549 = vmax.f32 %v2505, 0.0
        %v2550 = vmax.f32 %v2508, 0.0
        %v2551 = vmax.f32 %v2513, 0.0
        %v2552 = vmax.f32 %v2516, 0.0
        %v2553 = vmax.f32 %v2521, 0.0
        %v2554 = vmax.f32 %v2524, 0.0
        %v2555 = vmax.f32 %v2529, 0.0
        %v2556 = vmax.f32 %v2532, 0.0
        %v2557 = vmax.f32 %v2537, 0.0
        %v2558 = vmax.f32 %v2540, 0.0
        %s2559 = scalar_lea.vmem [#allocation6], 128
        %2560 = vst [vmem:[%s2559] sm:$0xff] %v2543
        %2561 = vst [vmem:[%s2559 + $0x8] sm:$0xff] %v2544
        %2562 = vst [vmem:[%s2559 + $0x10] sm:$0xff] %v2545
        %2563 = vst [vmem:[%s2559 + $0x18] sm:$0xff] %v2546
        %2564 = vst [vmem:[%s2559 + $0x20] sm:$0xff] %v2547
        %2565 = vst [vmem:[%s2559 + $0x28] sm:$0xff] %v2548
        %2566 = vst [vmem:[%s2559 + $0x30] sm:$0xff] %v2549
        %2567 = vst [vmem:[%s2559 + $0x38] sm:$0xff] %v2550
        %2568 = vst [vmem:[%s2559 + $0x40] sm:$0xff] %v2551
        %2569 = vst [vmem:[%s2559 + $0x48] sm:$0xff] %v2552
        %2570 = vst [vmem:[%s2559 + $0x50] sm:$0xff] %v2553
        %2571 = vst [vmem:[%s2559 + $0x58] sm:$0xff] %v2554
        %2572 = vst [vmem:[%s2559 + $0x60] sm:$0xff] %v2555
        %2573 = vst [vmem:[%s2559 + $0x68] sm:$0xff] %v2556
        %2574 = vst [vmem:[%s2559 + $0x70] sm:$0xff] %v2557
        %2575 = vst [vmem:[%s2559 + $0x78] sm:$0xff] %v2558
        %v2576 = vld [vmem:[#allocation5 + $0xa] ss:$0 sm:$0xff]
        %v2577 = vld [vmem:[#allocation4 + $0x80] sm:$0xff]
        %v2578 = vld [vmem:[#allocation4 + $0x88] sm:$0xff]
        %v2579 = vld [vmem:[#allocation4 + $0x90] sm:$0xff]
        %v2580 = vld [vmem:[#allocation4 + $0x98] sm:$0xff]
        %v2581 = vld [vmem:[#allocation4 + $0xa0] sm:$0xff]
        %v2582 = vld [vmem:[#allocation4 + $0xa8] sm:$0xff]
        %v2583 = vld [vmem:[#allocation4 + $0xb0] sm:$0xff]
        %v2584 = vld [vmem:[#allocation4 + $0xb8] sm:$0xff]
        %v2585 = vld [vmem:[#allocation4 + $0xc0] sm:$0xff]
        %v2586 = vld [vmem:[#allocation4 + $0xc8] sm:$0xff]
        %v2587 = vld [vmem:[#allocation4 + $0xd0] sm:$0xff]
        %v2588 = vld [vmem:[#allocation4 + $0xd8] sm:$0xff]
        %v2589 = vld [vmem:[#allocation4 + $0xe0] sm:$0xff]
        %v2590 = vld [vmem:[#allocation4 + $0xe8] sm:$0xff]
        %v2591 = vld [vmem:[#allocation4 + $0xf0] sm:$0xff]
        %v2592 = vld [vmem:[#allocation4 + $0xf8] sm:$0xff]
        %2594 = vset.pattern.permute.xlu0 5
        %2595 = vperm.xlu0 %2594, %v2577
        %v2596 = vpop.permute.xlu0 %2595
        %2599 = vset.pattern.permute.xlu0 5
        %2600 = vperm.xlu0 %2599, %v2578
        %v2601 = vpop.permute.xlu0 %2600
        %2604 = vset.pattern.permute.xlu0 5
        %2605 = vperm.xlu0 %2604, %v2579
        %v2606 = vpop.permute.xlu0 %2605
        %2609 = vset.pattern.permute.xlu0 5
        %2610 = vperm.xlu0 %2609, %v2580
        %v2611 = vpop.permute.xlu0 %2610
        %2614 = vset.pattern.permute.xlu0 5
        %2615 = vperm.xlu0 %2614, %v2581
        %v2616 = vpop.permute.xlu0 %2615
        %2619 = vset.pattern.permute.xlu0 5
        %2620 = vperm.xlu0 %2619, %v2582
        %v2621 = vpop.permute.xlu0 %2620
        %2624 = vset.pattern.permute.xlu0 5
        %2625 = vperm.xlu0 %2624, %v2583
        %v2626 = vpop.permute.xlu0 %2625
        %2629 = vset.pattern.permute.xlu0 5
        %2630 = vperm.xlu0 %2629, %v2584
        %v2631 = vpop.permute.xlu0 %2630
        %2634 = vset.pattern.permute.xlu0 5
        %2635 = vperm.xlu0 %2634, %v2585
        %v2636 = vpop.permute.xlu0 %2635
        %2639 = vset.pattern.permute.xlu0 5
        %2640 = vperm.xlu0 %2639, %v2586
        %v2641 = vpop.permute.xlu0 %2640
        %2644 = vset.pattern.permute.xlu0 5
        %2645 = vperm.xlu0 %2644, %v2587
        %v2646 = vpop.permute.xlu0 %2645
        %2649 = vset.pattern.permute.xlu0 5
        %2650 = vperm.xlu0 %2649, %v2588
        %v2651 = vpop.permute.xlu0 %2650
        %2654 = vset.pattern.permute.xlu0 5
        %2655 = vperm.xlu0 %2654, %v2589
        %v2656 = vpop.permute.xlu0 %2655
        %2659 = vset.pattern.permute.xlu0 5
        %2660 = vperm.xlu0 %2659, %v2590
        %v2661 = vpop.permute.xlu0 %2660
        %2664 = vset.pattern.permute.xlu0 5
        %2665 = vperm.xlu0 %2664, %v2591
        %v2666 = vpop.permute.xlu0 %2665
        %2669 = vset.pattern.permute.xlu0 5
        %2670 = vperm.xlu0 %2669, %v2592
        %v2671 = vpop.permute.xlu0 %2670
        %v2673 = vadd.f32 %v2596, %v2576
        %v2674 = vadd.f32 %v2601, %v2576
        %v2675 = vadd.f32 %v2606, %v2576
        %v2676 = vadd.f32 %v2611, %v2576
        %v2677 = vadd.f32 %v2616, %v2576
        %v2678 = vadd.f32 %v2621, %v2576
        %v2679 = vadd.f32 %v2626, %v2576
        %v2680 = vadd.f32 %v2631, %v2576
        %v2681 = vadd.f32 %v2636, %v2576
        %v2682 = vadd.f32 %v2641, %v2576
        %v2683 = vadd.f32 %v2646, %v2576
        %v2684 = vadd.f32 %v2651, %v2576
        %v2685 = vadd.f32 %v2656, %v2576
        %v2686 = vadd.f32 %v2661, %v2576
        %v2687 = vadd.f32 %v2666, %v2576
        %v2688 = vadd.f32 %v2671, %v2576
        %v2689 = vmul.f32 %v2673, 0.2
        %v2690 = vmul.f32 %v2674, 0.2
        %v2691 = vmul.f32 %v2675, 0.2
        %v2692 = vmul.f32 %v2676, 0.2
        %v2693 = vmul.f32 %v2677, 0.2
        %v2694 = vmul.f32 %v2678, 0.2
        %v2695 = vmul.f32 %v2679, 0.2
        %v2696 = vmul.f32 %v2680, 0.2
        %v2697 = vmul.f32 %v2681, 0.2
        %v2698 = vmul.f32 %v2682, 0.2
        %v2699 = vmul.f32 %v2683, 0.2
        %v2700 = vmul.f32 %v2684, 0.2
        %v2701 = vmul.f32 %v2685, 0.2
        %v2702 = vmul.f32 %v2686, 0.2
        %v2703 = vmul.f32 %v2687, 0.2
        %v2704 = vmul.f32 %v2688, 0.2
        %v2705 = vmax.f32 %v2673, %v2689
        %v2706 = vmax.f32 %v2674, %v2690
        %v2707 = vmax.f32 %v2675, %v2691
        %v2708 = vmax.f32 %v2676, %v2692
        %v2709 = vmax.f32 %v2677, %v2693
        %v2710 = vmax.f32 %v2678, %v2694
        %v2711 = vmax.f32 %v2679, %v2695
        %v2712 = vmax.f32 %v2680, %v2696
        %v2713 = vmax.f32 %v2681, %v2697
        %v2714 = vmax.f32 %v2682, %v2698
        %v2715 = vmax.f32 %v2683, %v2699
        %v2716 = vmax.f32 %v2684, %v2700
        %v2717 = vmax.f32 %v2685, %v2701
        %v2718 = vmax.f32 %v2686, %v2702
        %v2719 = vmax.f32 %v2687, %v2703
        %v2720 = vmax.f32 %v2688, %v2704
        %v2721 = vld [vmem:[#allocation18] sm:$0xff]
        %v2722 = vld [vmem:[#allocation18 + $0x8] sm:$0xff]
        %v2723 = vld [vmem:[#allocation18 + $0x10] sm:$0xff]
        %v2724 = vld [vmem:[#allocation18 + $0x18] sm:$0xff]
        %v2725 = vunpack.c.0.s8 %v2721
        %v2726 = vunpack.c.1.s8 %v2721
        %v2727 = vunpack.c.2.s8 %v2721
        %v2728 = vunpack.c.3.s8 %v2721
        %v2729 = vunpack.c.0.s8 %v2722
        %v2730 = vunpack.c.1.s8 %v2722
        %v2731 = vunpack.c.2.s8 %v2722
        %v2732 = vunpack.c.3.s8 %v2722
        %v2733 = vunpack.c.0.s8 %v2723
        %v2734 = vunpack.c.1.s8 %v2723
        %v2735 = vunpack.c.2.s8 %v2723
        %v2736 = vunpack.c.3.s8 %v2723
        %v2737 = vunpack.c.0.s8 %v2724
        %v2738 = vunpack.c.1.s8 %v2724
        %v2739 = vunpack.c.2.s8 %v2724
        %v2740 = vunpack.c.3.s8 %v2724
        %v2741 = vcvt.s32.f32 %v2725
        %v2742 = vcvt.s32.f32 %v2726
        %v2743 = vcvt.s32.f32 %v2727
        %v2744 = vcvt.s32.f32 %v2728
        %v2745 = vcvt.s32.f32 %v2729
        %v2746 = vcvt.s32.f32 %v2730
        %v2747 = vcvt.s32.f32 %v2731
        %v2748 = vcvt.s32.f32 %v2732
        %v2749 = vcvt.s32.f32 %v2733
        %v2750 = vcvt.s32.f32 %v2734
        %v2751 = vcvt.s32.f32 %v2735
        %v2752 = vcvt.s32.f32 %v2736
        %v2753 = vcvt.s32.f32 %v2737
        %v2754 = vcvt.s32.f32 %v2738
        %v2755 = vcvt.s32.f32 %v2739
        %v2756 = vcvt.s32.f32 %v2740
        %v2757 = vsub.f32 %v2741, 1.0
        %v2758 = vsub.f32 %v2742, 1.0
        %v2759 = vsub.f32 %v2743, 1.0
        %v2760 = vsub.f32 %v2744, 1.0
        %v2761 = vsub.f32 %v2745, 1.0
        %v2762 = vsub.f32 %v2746, 1.0
        %v2763 = vsub.f32 %v2747, 1.0
        %v2764 = vsub.f32 %v2748, 1.0
        %v2765 = vsub.f32 %v2749, 1.0
        %v2766 = vsub.f32 %v2750, 1.0
        %v2767 = vsub.f32 %v2751, 1.0
        %v2768 = vsub.f32 %v2752, 1.0
        %v2769 = vsub.f32 %v2753, 1.0
        %v2770 = vsub.f32 %v2754, 1.0
        %v2771 = vsub.f32 %v2755, 1.0
        %v2772 = vsub.f32 %v2756, 1.0
        %v2773 = vmul.f32 %v2757, 1e+30
        %v2774 = vmul.f32 %v2758, 1e+30
        %v2775 = vmul.f32 %v2759, 1e+30
        %v2776 = vmul.f32 %v2760, 1e+30
        %v2777 = vmul.f32 %v2761, 1e+30
        %v2778 = vmul.f32 %v2762, 1e+30
        %v2779 = vmul.f32 %v2763, 1e+30
        %v2780 = vmul.f32 %v2764, 1e+30
        %v2781 = vmul.f32 %v2765, 1e+30
        %v2782 = vmul.f32 %v2766, 1e+30
        %v2783 = vmul.f32 %v2767, 1e+30
        %v2784 = vmul.f32 %v2768, 1e+30
        %v2785 = vmul.f32 %v2769, 1e+30
        %v2786 = vmul.f32 %v2770, 1e+30
        %v2787 = vmul.f32 %v2771, 1e+30
        %v2788 = vmul.f32 %v2772, 1e+30
        %v2789 = vadd.f32 %v2705, %v2773
        %v2790 = vadd.f32 %v2706, %v2774
        %v2791 = vadd.f32 %v2707, %v2775
        %v2792 = vadd.f32 %v2708, %v2776
        %v2793 = vadd.f32 %v2709, %v2777
        %v2794 = vadd.f32 %v2710, %v2778
        %v2795 = vadd.f32 %v2711, %v2779
        %v2796 = vadd.f32 %v2712, %v2780
        %v2797 = vadd.f32 %v2713, %v2781
        %v2798 = vadd.f32 %v2714, %v2782
        %v2799 = vadd.f32 %v2715, %v2783
        %v2800 = vadd.f32 %v2716, %v2784
        %v2801 = vadd.f32 %v2717, %v2785
        %v2802 = vadd.f32 %v2718, %v2786
        %v2803 = vadd.f32 %v2719, %v2787
        %v2804 = vadd.f32 %v2720, %v2788
        %2805 = vmax.xlane.f32.xlu0 %v2789
        %v2806 = vpop.xlane.xlu0 %2805
        %2807 = vmax.xlane.f32.xlu0 %v2790
        %v2808 = vpop.xlane.xlu0 %2807
        %2809 = vmax.xlane.f32.xlu0 %v2791
        %v2810 = vpop.xlane.xlu0 %2809
        %2811 = vmax.xlane.f32.xlu0 %v2792
        %v2812 = vpop.xlane.xlu0 %2811
        %2813 = vmax.xlane.f32.xlu0 %v2793
        %v2814 = vpop.xlane.xlu0 %2813
        %2815 = vmax.xlane.f32.xlu0 %v2794
        %v2816 = vpop.xlane.xlu0 %2815
        %2817 = vmax.xlane.f32.xlu0 %v2795
        %v2818 = vpop.xlane.xlu0 %2817
        %2819 = vmax.xlane.f32.xlu0 %v2796
        %v2820 = vpop.xlane.xlu0 %2819
        %2821 = vmax.xlane.f32.xlu0 %v2797
        %v2822 = vpop.xlane.xlu0 %2821
        %2823 = vmax.xlane.f32.xlu0 %v2798
        %v2824 = vpop.xlane.xlu0 %2823
        %2825 = vmax.xlane.f32.xlu0 %v2799
        %v2826 = vpop.xlane.xlu0 %2825
        %2827 = vmax.xlane.f32.xlu0 %v2800
        %v2828 = vpop.xlane.xlu0 %2827
        %2829 = vmax.xlane.f32.xlu0 %v2801
        %v2830 = vpop.xlane.xlu0 %2829
        %2831 = vmax.xlane.f32.xlu0 %v2802
        %v2832 = vpop.xlane.xlu0 %2831
        %2833 = vmax.xlane.f32.xlu0 %v2803
        %v2834 = vpop.xlane.xlu0 %2833
        %2835 = vmax.xlane.f32.xlu0 %v2804
        %v2836 = vpop.xlane.xlu0 %2835
        %v2837 = vsub.f32 %v2789, %v2806
        %v2838 = vsub.f32 %v2790, %v2808
        %v2839 = vsub.f32 %v2791, %v2810
        %v2840 = vsub.f32 %v2792, %v2812
        %v2841 = vsub.f32 %v2793, %v2814
        %v2842 = vsub.f32 %v2794, %v2816
        %v2843 = vsub.f32 %v2795, %v2818
        %v2844 = vsub.f32 %v2796, %v2820
        %v2845 = vsub.f32 %v2797, %v2822
        %v2846 = vsub.f32 %v2798, %v2824
        %v2847 = vsub.f32 %v2799, %v2826
        %v2848 = vsub.f32 %v2800, %v2828
        %v2849 = vsub.f32 %v2801, %v2830
        %v2850 = vsub.f32 %v2802, %v2832
        %v2851 = vsub.f32 %v2803, %v2834
        %v2852 = vsub.f32 %v2804, %v2836
        %v2853 = vmul.f32 %v2837, 1.442695
        %v2854 = vpow.pop %v2853
        %v2855 = vmul.f32 %v2838, 1.442695
        %v2856 = vpow.pop %v2855
        %v2857 = vmul.f32 %v2839, 1.442695
        %v2858 = vpow.pop %v2857
        %v2859 = vmul.f32 %v2840, 1.442695
        %v2860 = vpow.pop %v2859
        %v2861 = vmul.f32 %v2841, 1.442695
        %v2862 = vpow.pop %v2861
        %v2863 = vmul.f32 %v2842, 1.442695
        %v2864 = vpow.pop %v2863
        %v2865 = vmul.f32 %v2843, 1.442695
        %v2866 = vpow.pop %v2865
        %v2867 = vmul.f32 %v2844, 1.442695
        %v2868 = vpow.pop %v2867
        %v2869 = vmul.f32 %v2845, 1.442695
        %v2870 = vpow.pop %v2869
        %v2871 = vmul.f32 %v2846, 1.442695
        %v2872 = vpow.pop %v2871
        %v2873 = vmul.f32 %v2847, 1.442695
        %v2874 = vpow.pop %v2873
        %v2875 = vmul.f32 %v2848, 1.442695
        %v2876 = vpow.pop %v2875
        %v2877 = vmul.f32 %v2849, 1.442695
        %v2878 = vpow.pop %v2877
        %v2879 = vmul.f32 %v2850, 1.442695
        %v2880 = vpow.pop %v2879
        %v2881 = vmul.f32 %v2851, 1.442695
        %v2882 = vpow.pop %v2881
        %v2883 = vmul.f32 %v2852, 1.442695
        %v2884 = vpow.pop %v2883
        %v2885 = vmul.f32 %v2854, %v2741
        %v2886 = vmul.f32 %v2856, %v2742
        %v2887 = vmul.f32 %v2858, %v2743
        %v2888 = vmul.f32 %v2860, %v2744
        %v2889 = vmul.f32 %v2862, %v2745
        %v2890 = vmul.f32 %v2864, %v2746
        %v2891 = vmul.f32 %v2866, %v2747
        %v2892 = vmul.f32 %v2868, %v2748
        %v2893 = vmul.f32 %v2870, %v2749
        %v2894 = vmul.f32 %v2872, %v2750
        %v2895 = vmul.f32 %v2874, %v2751
        %v2896 = vmul.f32 %v2876, %v2752
        %v2897 = vmul.f32 %v2878, %v2753
        %v2898 = vmul.f32 %v2880, %v2754
        %v2899 = vmul.f32 %v2882, %v2755
        %v2900 = vmul.f32 %v2884, %v2756
        %2901 = vadd.xlane.f32.xlu0 %v2885
        %v2902 = vpop.xlane.xlu0 %2901
        %2903 = vadd.xlane.f32.xlu0 %v2886
        %v2904 = vpop.xlane.xlu0 %2903
        %2905 = vadd.xlane.f32.xlu0 %v2887
        %v2906 = vpop.xlane.xlu0 %2905
        %2907 = vadd.xlane.f32.xlu0 %v2888
        %v2908 = vpop.xlane.xlu0 %2907
        %2909 = vadd.xlane.f32.xlu0 %v2889
        %v2910 = vpop.xlane.xlu0 %2909
        %2911 = vadd.xlane.f32.xlu0 %v2890
        %v2912 = vpop.xlane.xlu0 %2911
        %2913 = vadd.xlane.f32.xlu0 %v2891
        %v2914 = vpop.xlane.xlu0 %2913
        %2915 = vadd.xlane.f32.xlu0 %v2892
        %v2916 = vpop.xlane.xlu0 %2915
        %2917 = vadd.xlane.f32.xlu0 %v2893
        %v2918 = vpop.xlane.xlu0 %2917
        %2919 = vadd.xlane.f32.xlu0 %v2894
        %v2920 = vpop.xlane.xlu0 %2919
        %2921 = vadd.xlane.f32.xlu0 %v2895
        %v2922 = vpop.xlane.xlu0 %2921
        %2923 = vadd.xlane.f32.xlu0 %v2896
        %v2924 = vpop.xlane.xlu0 %2923
        %2925 = vadd.xlane.f32.xlu0 %v2897
        %v2926 = vpop.xlane.xlu0 %2925
        %2927 = vadd.xlane.f32.xlu0 %v2898
        %v2928 = vpop.xlane.xlu0 %2927
        %2929 = vadd.xlane.f32.xlu0 %v2899
        %v2930 = vpop.xlane.xlu0 %2929
        %2931 = vadd.xlane.f32.xlu0 %v2900
        %v2932 = vpop.xlane.xlu0 %2931
        %v2933 = vmax.f32 %v2902, 1e-30
        %v2934 = vmax.f32 %v2904, 1e-30
        %v2935 = vmax.f32 %v2906, 1e-30
        %v2936 = vmax.f32 %v2908, 1e-30
        %v2937 = vmax.f32 %v2910, 1e-30
        %v2938 = vmax.f32 %v2912, 1e-30
        %v2939 = vmax.f32 %v2914, 1e-30
        %v2940 = vmax.f32 %v2916, 1e-30
        %v2941 = vmax.f32 %v2918, 1e-30
        %v2942 = vmax.f32 %v2920, 1e-30
        %v2943 = vmax.f32 %v2922, 1e-30
        %v2944 = vmax.f32 %v2924, 1e-30
        %v2945 = vmax.f32 %v2926, 1e-30
        %v2946 = vmax.f32 %v2928, 1e-30
        %v2947 = vmax.f32 %v2930, 1e-30
        %v2948 = vmax.f32 %v2932, 1e-30
        %v2949 = vrcp.pop %v2933
        %v2950 = vmul.f32 %v2885, %v2949
        %v2951 = vrcp.pop %v2934
        %v2952 = vmul.f32 %v2886, %v2951
        %v2953 = vrcp.pop %v2935
        %v2954 = vmul.f32 %v2887, %v2953
        %v2955 = vrcp.pop %v2936
        %v2956 = vmul.f32 %v2888, %v2955
        %v2957 = vrcp.pop %v2937
        %v2958 = vmul.f32 %v2889, %v2957
        %v2959 = vrcp.pop %v2938
        %v2960 = vmul.f32 %v2890, %v2959
        %v2961 = vrcp.pop %v2939
        %v2962 = vmul.f32 %v2891, %v2961
        %v2963 = vrcp.pop %v2940
        %v2964 = vmul.f32 %v2892, %v2963
        %v2965 = vrcp.pop %v2941
        %v2966 = vmul.f32 %v2893, %v2965
        %v2967 = vrcp.pop %v2942
        %v2968 = vmul.f32 %v2894, %v2967
        %v2969 = vrcp.pop %v2943
        %v2970 = vmul.f32 %v2895, %v2969
        %v2971 = vrcp.pop %v2944
        %v2972 = vmul.f32 %v2896, %v2971
        %v2973 = vrcp.pop %v2945
        %v2974 = vmul.f32 %v2897, %v2973
        %v2975 = vrcp.pop %v2946
        %v2976 = vmul.f32 %v2898, %v2975
        %v2977 = vrcp.pop %v2947
        %v2978 = vmul.f32 %v2899, %v2977
        %v2979 = vrcp.pop %v2948
        %v2980 = vmul.f32 %v2900, %v2979
        %v2981 = vpack.c.bf16 %v2952, %v2950
        %v2982 = vpack.c.bf16 %v2956, %v2954
        %v2983 = vpack.c.bf16 %v2960, %v2958
        %v2984 = vpack.c.bf16 %v2964, %v2962
        %v2985 = vpack.c.bf16 %v2968, %v2966
        %v2986 = vpack.c.bf16 %v2972, %v2970
        %v2987 = vpack.c.bf16 %v2976, %v2974
        %v2988 = vpack.c.bf16 %v2980, %v2978
        %v2989 = vld [vmem:[#allocation3 + $0x40] sm:$0xff]
        %v2990 = vld [vmem:[#allocation3 + $0x48] sm:$0xff]
        %v2991 = vld [vmem:[#allocation3 + $0x50] sm:$0xff]
        %v2992 = vld [vmem:[#allocation3 + $0x58] sm:$0xff]
        %v2993 = vld [vmem:[#allocation3 + $0x60] sm:$0xff]
        %v2994 = vld [vmem:[#allocation3 + $0x68] sm:$0xff]
        %v2995 = vld [vmem:[#allocation3 + $0x70] sm:$0xff]
        %v2996 = vld [vmem:[#allocation3 + $0x78] sm:$0xff]
        %2997 = vmatprep.subr.bf16.mxu0 0
        %2998 = vmatpush1.bf16.msra.mxu0 %v2989
        %2999 = vmatprep.subr.bf16.mxu0 0
        %3000 = vmatpush1.bf16.msra.mxu0 %v2990
        %3001 = vmatprep.subr.bf16.mxu0 0
        %3002 = vmatpush1.bf16.msra.mxu0 %v2991
        %3003 = vmatprep.subr.bf16.mxu0 0
        %3004 = vmatpush1.bf16.msra.mxu0 %v2992
        %3005 = vmatprep.subr.bf16.mxu0 0
        %3006 = vmatpush1.bf16.msra.mxu0 %v2993
        %3007 = vmatprep.subr.bf16.mxu0 0
        %3008 = vmatpush1.bf16.msra.mxu0 %v2994
        %3009 = vmatprep.subr.bf16.mxu0 0
        %3010 = vmatpush1.bf16.msra.mxu0 %v2995
        %3011 = vmatprep.subr.bf16.mxu0 0
        %3012 = vmatpush1.bf16.msra.mxu0 %v2996
        %3013 = vmatprep.subr.bf16.mxu0 0
        %3014 = vmatpush1.bf16.msra.mxu0 0
        %3015 = vmatprep.subr.bf16.mxu0 0
        %3016 = vmatpush1.bf16.msra.mxu0 0
        %3017 = vmatprep.subr.bf16.mxu0 0
        %3018 = vmatpush1.bf16.msra.mxu0 0
        %3019 = vmatprep.subr.bf16.mxu0 0
        %3020 = vmatpush1.bf16.msra.mxu0 0
        %3021 = vmatprep.subr.bf16.mxu0 0
        %3022 = vmatpush1.bf16.msra.mxu0 0
        %3023 = vmatprep.subr.bf16.mxu0 0
        %3024 = vmatpush1.bf16.msra.mxu0 0
        %3025 = vmatprep.subr.bf16.mxu0 0
        %3026 = vmatpush1.bf16.msra.mxu0 0
        %3027 = vmatprep.subr.bf16.mxu0 0
        %3028 = vmatpush1.bf16.msra.mxu0 0
        %3029 = vmatprep.mubr.bf16.mxu0 0
        %3030 = vmatmul.mubr.bf16.gmra.mrb[0].mxu0 %v2981
        %v3031 = vpop.f32.mrb[0].mxu0
        %v3032 = vadd.f32 0.0, %v3031
        %v3033 = vpop.f32.mrb[0].mxu0
        %v3034 = vpop.f32.mrb[0].mxu0
        %v3035 = vadd.f32 0.0, %v3034
        %v3036 = vpop.f32.mrb[0].mxu0
        %3037 = vmatprep.mubr.bf16.mxu0 0
        %3038 = vmatmul.mubr.bf16.gmra.mrb[0].mxu0 %v2982
        %v3039 = vpop.f32.mrb[0].mxu0
        %v3040 = vadd.f32 0.0, %v3039
        %v3041 = vpop.f32.mrb[0].mxu0
        %v3042 = vpop.f32.mrb[0].mxu0
        %v3043 = vadd.f32 0.0, %v3042
        %v3044 = vpop.f32.mrb[0].mxu0
        %3045 = vmatprep.mubr.bf16.mxu0 0
        %3046 = vmatmul.mubr.bf16.gmra.mrb[0].mxu0 %v2983
        %v3047 = vpop.f32.mrb[0].mxu0
        %v3048 = vadd.f32 0.0, %v3047
        %v3049 = vpop.f32.mrb[0].mxu0
        %v3050 = vpop.f32.mrb[0].mxu0
        %v3051 = vadd.f32 0.0, %v3050
        %v3052 = vpop.f32.mrb[0].mxu0
        %3053 = vmatprep.mubr.bf16.mxu0 0
        %3054 = vmatmul.mubr.bf16.gmra.mrb[0].mxu0 %v2984
        %v3055 = vpop.f32.mrb[0].mxu0
        %v3056 = vadd.f32 0.0, %v3055
        %v3057 = vpop.f32.mrb[0].mxu0
        %v3058 = vpop.f32.mrb[0].mxu0
        %v3059 = vadd.f32 0.0, %v3058
        %v3060 = vpop.f32.mrb[0].mxu0
        %3061 = vmatprep.mubr.bf16.mxu0 0
        %3062 = vmatmul.mubr.bf16.gmra.mrb[0].mxu0 %v2985
        %v3063 = vpop.f32.mrb[0].mxu0
        %v3064 = vadd.f32 0.0, %v3063
        %v3065 = vpop.f32.mrb[0].mxu0
        %v3066 = vpop.f32.mrb[0].mxu0
        %v3067 = vadd.f32 0.0, %v3066
        %v3068 = vpop.f32.mrb[0].mxu0
        %3069 = vmatprep.mubr.bf16.mxu0 0
        %3070 = vmatmul.mubr.bf16.gmra.mrb[0].mxu0 %v2986
        %v3071 = vpop.f32.mrb[0].mxu0
        %v3072 = vadd.f32 0.0, %v3071
        %v3073 = vpop.f32.mrb[0].mxu0
        %v3074 = vpop.f32.mrb[0].mxu0
        %v3075 = vadd.f32 0.0, %v3074
        %v3076 = vpop.f32.mrb[0].mxu0
        %3077 = vmatprep.mubr.bf16.mxu0 0
        %3078 = vmatmul.mubr.bf16.gmra.mrb[0].mxu0 %v2987
        %v3079 = vpop.f32.mrb[0].mxu0
        %v3080 = vadd.f32 0.0, %v3079
        %v3081 = vpop.f32.mrb[0].mxu0
        %v3082 = vpop.f32.mrb[0].mxu0
        %v3083 = vadd.f32 0.0, %v3082
        %v3084 = vpop.f32.mrb[0].mxu0
        %3085 = vmatprep.mubr.bf16.mxu0 0
        %3086 = vmatmul.mubr.bf16.gmra.mrb[0].mxu0 %v2988
        %v3087 = vpop.f32.mrb[0].mxu0
        %v3088 = vadd.f32 0.0, %v3087
        %v3089 = vpop.f32.mrb[0].mxu0
        %v3090 = vpop.f32.mrb[0].mxu0
        %v3091 = vadd.f32 0.0, %v3090
        %v3092 = vpop.f32.mrb[0].mxu0
        %3093 = vdwg.mxu0
        %v3094 = vmax.f32 %v3032, 0.0
        %v3095 = vmax.f32 %v3035, 0.0
        %v3096 = vmax.f32 %v3040, 0.0
        %v3097 = vmax.f32 %v3043, 0.0
        %v3098 = vmax.f32 %v3048, 0.0
        %v3099 = vmax.f32 %v3051, 0.0
        %v3100 = vmax.f32 %v3056, 0.0
        %v3101 = vmax.f32 %v3059, 0.0
        %v3102 = vmax.f32 %v3064, 0.0
        %v3103 = vmax.f32 %v3067, 0.0
        %v3104 = vmax.f32 %v3072, 0.0
        %v3105 = vmax.f32 %v3075, 0.0
        %v3106 = vmax.f32 %v3080, 0.0
        %v3107 = vmax.f32 %v3083, 0.0
        %v3108 = vmax.f32 %v3088, 0.0
        %v3109 = vmax.f32 %v3091, 0.0
        %s3110 = scalar_lea.vmem [#allocation6], 256
        %3111 = vst [vmem:[%s3110] sm:$0xff] %v3094
        %3112 = vst [vmem:[%s3110 + $0x8] sm:$0xff] %v3095
        %3113 = vst [vmem:[%s3110 + $0x10] sm:$0xff] %v3096
        %3114 = vst [vmem:[%s3110 + $0x18] sm:$0xff] %v3097
        %3115 = vst [vmem:[%s3110 + $0x20] sm:$0xff] %v3098
        %3116 = vst [vmem:[%s3110 + $0x28] sm:$0xff] %v3099
        %3117 = vst [vmem:[%s3110 + $0x30] sm:$0xff] %v3100
        %3118 = vst [vmem:[%s3110 + $0x38] sm:$0xff] %v3101
        %3119 = vst [vmem:[%s3110 + $0x40] sm:$0xff] %v3102
        %3120 = vst [vmem:[%s3110 + $0x48] sm:$0xff] %v3103
        %3121 = vst [vmem:[%s3110 + $0x50] sm:$0xff] %v3104
        %3122 = vst [vmem:[%s3110 + $0x58] sm:$0xff] %v3105
        %3123 = vst [vmem:[%s3110 + $0x60] sm:$0xff] %v3106
        %3124 = vst [vmem:[%s3110 + $0x68] sm:$0xff] %v3107
        %3125 = vst [vmem:[%s3110 + $0x70] sm:$0xff] %v3108
        %3126 = vst [vmem:[%s3110 + $0x78] sm:$0xff] %v3109
        %v3127 = vld [vmem:[%s512] sm:$0xf]
        %v3128 = vld [vmem:[%s512 + $0x4] sm:$0xf]
        %v3129 = vld [vmem:[%s512 + $0x8] sm:$0xf]
        %v3130 = vld [vmem:[%s512 + $0xc] sm:$0xf]
        %v3131 = vld [vmem:[%s512 + $0x10] sm:$0xf]
        %v3132 = vld [vmem:[%s512 + $0x14] sm:$0xf]
        %v3133 = vld [vmem:[%s512 + $0x18] sm:$0xf]
        %v3134 = vld [vmem:[%s512 + $0x1c] sm:$0xf]
        %v3135 = vld [vmem:[%s512 + $0x20] sm:$0xf]
        %v3136 = vld [vmem:[%s512 + $0x24] sm:$0xf]
        %v3137 = vld [vmem:[%s512 + $0x28] sm:$0xf]
        %v3138 = vld [vmem:[%s512 + $0x2c] sm:$0xf]
        %v3139 = vld [vmem:[%s512 + $0x30] sm:$0xf]
        %v3140 = vld [vmem:[%s512 + $0x34] sm:$0xf]
        %v3141 = vld [vmem:[%s512 + $0x38] sm:$0xf]
        %v3142 = vld [vmem:[%s512 + $0x3c] sm:$0xf]
        %v3143 = vld [vmem:[%s570] sm:$0x1]
        %v3144 = vld [vmem:[%s574] sm:$0x1]
        %v3145 = vlaneseq
        %v3146 = vshrl.u32 %v3145, 7
        %v3147 = vadd.s32 %v3146, 8
        %v3148 = vadd.s32 %v3146, 16
        %v3149 = vadd.s32 %v3146, 24
        %v3150 = vadd.s32 %v3146, 32
        %v3151 = vadd.s32 %v3146, 40
        %v3152 = vadd.s32 %v3146, 48
        %v3153 = vadd.s32 %v3146, 56
        %v3154 = vadd.s32 %v3146, 64
        %v3155 = vadd.s32 %v3146, 72
        %v3156 = vadd.s32 %v3146, 80
        %v3157 = vadd.s32 %v3146, 88
        %v3158 = vadd.s32 %v3146, 96
        %v3159 = vadd.s32 %v3146, 104
        %v3160 = vadd.s32 %v3146, 112
        %v3161 = vadd.s32 %v3146, 120
        %vm3162 = vcmp.lt.s32.totalorder %v3146, 12
        %vm3163 = vcmp.lt.s32.totalorder %v3147, 12
        %vm3164 = vcmp.lt.s32.totalorder %v3148, 12
        %vm3165 = vcmp.lt.s32.totalorder %v3149, 12
        %vm3166 = vcmp.lt.s32.totalorder %v3150, 12
        %vm3167 = vcmp.lt.s32.totalorder %v3151, 12
        %vm3168 = vcmp.lt.s32.totalorder %v3152, 12
        %vm3169 = vcmp.lt.s32.totalorder %v3153, 12
        %vm3170 = vcmp.lt.s32.totalorder %v3154, 12
        %vm3171 = vcmp.lt.s32.totalorder %v3155, 12
        %vm3172 = vcmp.lt.s32.totalorder %v3156, 12
        %vm3173 = vcmp.lt.s32.totalorder %v3157, 12
        %vm3174 = vcmp.lt.s32.totalorder %v3158, 12
        %vm3175 = vcmp.lt.s32.totalorder %v3159, 12
        %vm3176 = vcmp.lt.s32.totalorder %v3160, 12
        %vm3177 = vcmp.lt.s32.totalorder %v3161, 12
        %v3178 = vsel %vm3162, 1, 0
        %v3179 = vsel %vm3163, 1, 0
        %v3180 = vsel %vm3164, 1, 0
        %v3181 = vsel %vm3165, 1, 0
        %v3182 = vsel %vm3166, 1, 0
        %v3183 = vsel %vm3167, 1, 0
        %v3184 = vsel %vm3168, 1, 0
        %v3185 = vsel %vm3169, 1, 0
        %v3186 = vsel %vm3170, 1, 0
        %v3187 = vsel %vm3171, 1, 0
        %v3188 = vsel %vm3172, 1, 0
        %v3189 = vsel %vm3173, 1, 0
        %v3190 = vsel %vm3174, 1, 0
        %v3191 = vsel %vm3175, 1, 0
        %v3192 = vsel %vm3176, 1, 0
        %v3193 = vsel %vm3177, 1, 0
        %v3194 = vcvt.s32.f32 %v3178
        %v3195 = vcvt.s32.f32 %v3179
        %v3196 = vcvt.s32.f32 %v3180
        %v3197 = vcvt.s32.f32 %v3181
        %v3198 = vcvt.s32.f32 %v3182
        %v3199 = vcvt.s32.f32 %v3183
        %v3200 = vcvt.s32.f32 %v3184
        %v3201 = vcvt.s32.f32 %v3185
        %v3202 = vcvt.s32.f32 %v3186
        %v3203 = vcvt.s32.f32 %v3187
        %v3204 = vcvt.s32.f32 %v3188
        %v3205 = vcvt.s32.f32 %v3189
        %v3206 = vcvt.s32.f32 %v3190
        %v3207 = vcvt.s32.f32 %v3191
        %v3208 = vcvt.s32.f32 %v3192
        %v3209 = vcvt.s32.f32 %v3193
        %v3210 = vld [vmem:[%s2559] sm:$0xff]
        %v3211 = vld [vmem:[%s2559 + $0x8] sm:$0xff]
        %v3212 = vld [vmem:[%s2559 + $0x10] sm:$0xff]
        %v3213 = vld [vmem:[%s2559 + $0x18] sm:$0xff]
        %v3214 = vld [vmem:[%s2559 + $0x20] sm:$0xff]
        %v3215 = vld [vmem:[%s2559 + $0x28] sm:$0xff]
        %v3216 = vld [vmem:[%s2559 + $0x30] sm:$0xff]
        %v3217 = vld [vmem:[%s2559 + $0x38] sm:$0xff]
        %v3218 = vld [vmem:[%s2559 + $0x40] sm:$0xff]
        %v3219 = vld [vmem:[%s2559 + $0x48] sm:$0xff]
        %v3220 = vld [vmem:[%s2559 + $0x50] sm:$0xff]
        %v3221 = vld [vmem:[%s2559 + $0x58] sm:$0xff]
        %v3222 = vld [vmem:[%s2559 + $0x60] sm:$0xff]
        %v3223 = vld [vmem:[%s2559 + $0x68] sm:$0xff]
        %v3224 = vld [vmem:[%s2559 + $0x70] sm:$0xff]
        %v3225 = vld [vmem:[%s2559 + $0x78] sm:$0xff]
        %v3226 = vpack.c.bf16 %v3211, %v3210
        %v3227 = vpack.c.bf16 %v3213, %v3212
        %v3228 = vpack.c.bf16 %v3215, %v3214
        %v3229 = vpack.c.bf16 %v3217, %v3216
        %v3230 = vpack.c.bf16 %v3219, %v3218
        %v3231 = vpack.c.bf16 %v3221, %v3220
        %v3232 = vpack.c.bf16 %v3223, %v3222
        %v3233 = vpack.c.bf16 %v3225, %v3224
        %v3234 = vlaneseq
        %v3235 = vshrl.u32 %v3234, 7
        %v3236 = vsub.s32 0, %v3235
        %v3237 = vrot.slane %v3143, %v3236
        %v3254 = vunpack.c.l.b16 %v3127
        %v3255 = vunpack.c.l.b16 %v3128
        %v3256 = vunpack.c.l.b16 %v3129
        %v3257 = vunpack.c.l.b16 %v3130
        %v3258 = vunpack.c.l.b16 %v3131
        %v3259 = vunpack.c.l.b16 %v3132
        %v3260 = vunpack.c.l.b16 %v3133
        %v3261 = vunpack.c.l.b16 %v3134
        %v3262 = vunpack.c.l.b16 %v3135
        %v3263 = vunpack.c.l.b16 %v3136
        %v3264 = vunpack.c.l.b16 %v3137
        %v3265 = vunpack.c.l.b16 %v3138
        %v3266 = vunpack.c.l.b16 %v3139
        %v3267 = vunpack.c.l.b16 %v3140
        %v3268 = vunpack.c.l.b16 %v3141
        %v3269 = vunpack.c.l.b16 %v3142
        %v3270 = vpack.c.b16 %v3255, %v3254
        %v3271 = vpack.c.b16 %v3257, %v3256
        %v3272 = vpack.c.b16 %v3259, %v3258
        %v3273 = vpack.c.b16 %v3261, %v3260
        %v3274 = vpack.c.b16 %v3263, %v3262
        %v3275 = vpack.c.b16 %v3265, %v3264
        %v3276 = vpack.c.b16 %v3267, %v3266
        %v3277 = vpack.c.b16 %v3269, %v3268
        %3286 = vmatprep.subr.bf16.mxu0 0
        %3287 = vmatpush1.bf16.msra.mxu0 %v3270
        %3288 = vmatprep.subr.bf16.mxu0 0
        %3289 = vmatpush1.bf16.msra.mxu0 %v3271
        %3290 = vmatprep.subr.bf16.mxu0 0
        %3291 = vmatpush1.bf16.msra.mxu0 %v3272
        %3292 = vmatprep.subr.bf16.mxu0 0
        %3293 = vmatpush1.bf16.msra.mxu0 %v3273
        %3294 = vmatprep.subr.bf16.mxu0 0
        %3295 = vmatpush1.bf16.msra.mxu0 %v3274
        %3296 = vmatprep.subr.bf16.mxu0 0
        %3297 = vmatpush1.bf16.msra.mxu0 %v3275
        %3298 = vmatprep.subr.bf16.mxu0 0
        %3299 = vmatpush1.bf16.msra.mxu0 %v3276
        %3300 = vmatprep.subr.bf16.mxu0 0
        %3301 = vmatpush1.bf16.msra.mxu0 %v3277
        %3302 = vmatprep.subr.bf16.mxu0 0
        %3303 = vmatpush1.bf16.msra.mxu0 0
        %3304 = vmatprep.subr.bf16.mxu0 0
        %3305 = vmatpush1.bf16.msra.mxu0 0
        %3306 = vmatprep.subr.bf16.mxu0 0
        %3307 = vmatpush1.bf16.msra.mxu0 0
        %3308 = vmatprep.subr.bf16.mxu0 0
        %3309 = vmatpush1.bf16.msra.mxu0 0
        %3310 = vmatprep.subr.bf16.mxu0 0
        %3311 = vmatpush1.bf16.msra.mxu0 0
        %3312 = vmatprep.subr.bf16.mxu0 0
        %3313 = vmatpush1.bf16.msra.mxu0 0
        %3314 = vmatprep.subr.bf16.mxu0 0
        %3315 = vmatpush1.bf16.msra.mxu0 0
        %3316 = vmatprep.subr.bf16.mxu0 0
        %3317 = vmatpush1.bf16.msra.mxu0 0
        %3318 = vmatprep.mubr.bf16.mxu0 0
        %3319 = vmatmul.mubr.bf16.gmra.mrb[0].mxu0 %v3226
        %v3320 = vpop.f32.mrb[0].mxu0
        %v3321 = vadd.f32 %v3237, %v3320
        %v3322 = vpop.f32.mrb[0].mxu0
        %v3323 = vpop.f32.mrb[0].mxu0
        %v3324 = vadd.f32 %v3237, %v3323
        %v3325 = vpop.f32.mrb[0].mxu0
        %3326 = vmatprep.mubr.bf16.mxu0 0
        %3327 = vmatmul.mubr.bf16.gmra.mrb[0].mxu0 %v3227
        %v3328 = vpop.f32.mrb[0].mxu0
        %v3329 = vadd.f32 %v3237, %v3328
        %v3330 = vpop.f32.mrb[0].mxu0
        %v3331 = vpop.f32.mrb[0].mxu0
        %v3332 = vadd.f32 %v3237, %v3331
        %v3333 = vpop.f32.mrb[0].mxu0
        %3334 = vmatprep.mubr.bf16.mxu0 0
        %3335 = vmatmul.mubr.bf16.gmra.mrb[0].mxu0 %v3228
        %v3336 = vpop.f32.mrb[0].mxu0
        %v3337 = vadd.f32 %v3237, %v3336
        %v3338 = vpop.f32.mrb[0].mxu0
        %v3339 = vpop.f32.mrb[0].mxu0
        %v3340 = vadd.f32 %v3237, %v3339
        %v3341 = vpop.f32.mrb[0].mxu0
        %3342 = vmatprep.mubr.bf16.mxu0 0
        %3343 = vmatmul.mubr.bf16.gmra.mrb[0].mxu0 %v3229
        %v3344 = vpop.f32.mrb[0].mxu0
        %v3345 = vadd.f32 %v3237, %v3344
        %v3346 = vpop.f32.mrb[0].mxu0
        %v3347 = vpop.f32.mrb[0].mxu0
        %v3348 = vadd.f32 %v3237, %v3347
        %v3349 = vpop.f32.mrb[0].mxu0
        %3350 = vmatprep.mubr.bf16.mxu0 0
        %3351 = vmatmul.mubr.bf16.gmra.mrb[0].mxu0 %v3230
        %v3352 = vpop.f32.mrb[0].mxu0
        %v3353 = vadd.f32 %v3237, %v3352
        %v3354 = vpop.f32.mrb[0].mxu0
        %v3355 = vpop.f32.mrb[0].mxu0
        %v3356 = vadd.f32 %v3237, %v3355
        %v3357 = vpop.f32.mrb[0].mxu0
        %3358 = vmatprep.mubr.bf16.mxu0 0
        %3359 = vmatmul.mubr.bf16.gmra.mrb[0].mxu0 %v3231
        %v3360 = vpop.f32.mrb[0].mxu0
        %v3361 = vadd.f32 %v3237, %v3360
        %v3362 = vpop.f32.mrb[0].mxu0
        %v3363 = vpop.f32.mrb[0].mxu0
        %v3364 = vadd.f32 %v3237, %v3363
        %v3365 = vpop.f32.mrb[0].mxu0
        %3366 = vmatprep.mubr.bf16.mxu0 0
        %3367 = vmatmul.mubr.bf16.gmra.mrb[0].mxu0 %v3232
        %v3368 = vpop.f32.mrb[0].mxu0
        %v3369 = vadd.f32 %v3237, %v3368
        %v3370 = vpop.f32.mrb[0].mxu0
        %v3371 = vpop.f32.mrb[0].mxu0
        %v3372 = vadd.f32 %v3237, %v3371
        %v3373 = vpop.f32.mrb[0].mxu0
        %3374 = vmatprep.mubr.bf16.mxu0 0
        %3375 = vmatmul.mubr.bf16.gmra.mrb[0].mxu0 %v3233
        %v3376 = vpop.f32.mrb[0].mxu0
        %v3377 = vadd.f32 %v3237, %v3376
        %v3378 = vpop.f32.mrb[0].mxu0
        %v3379 = vpop.f32.mrb[0].mxu0
        %v3380 = vadd.f32 %v3237, %v3379
        %v3381 = vpop.f32.mrb[0].mxu0
        %3382 = vdwg.mxu0
        %v3383 = vtanh.pop %v3321
        %v3384 = vtanh.pop %v3324
        %v3385 = vtanh.pop %v3329
        %v3386 = vtanh.pop %v3332
        %v3387 = vtanh.pop %v3337
        %v3388 = vtanh.pop %v3340
        %v3389 = vtanh.pop %v3345
        %v3390 = vtanh.pop %v3348
        %v3391 = vtanh.pop %v3353
        %v3392 = vtanh.pop %v3356
        %v3393 = vtanh.pop %v3361
        %v3394 = vtanh.pop %v3364
        %v3395 = vtanh.pop %v3369
        %v3396 = vtanh.pop %v3372
        %v3397 = vtanh.pop %v3377
        %v3398 = vtanh.pop %v3380
        %v3399 = vmul.f32 %v3194, %v3383
        %v3400 = vmul.f32 %v3195, %v3384
        %v3401 = vmul.f32 %v3196, %v3385
        %v3402 = vmul.f32 %v3197, %v3386
        %v3403 = vmul.f32 %v3198, %v3387
        %v3404 = vmul.f32 %v3199, %v3388
        %v3405 = vmul.f32 %v3200, %v3389
        %v3406 = vmul.f32 %v3201, %v3390
        %v3407 = vmul.f32 %v3202, %v3391
        %v3408 = vmul.f32 %v3203, %v3392
        %v3409 = vmul.f32 %v3204, %v3393
        %v3410 = vmul.f32 %v3205, %v3394
        %v3411 = vmul.f32 %v3206, %v3395
        %v3412 = vmul.f32 %v3207, %v3396
        %v3413 = vmul.f32 %v3208, %v3397
        %v3414 = vmul.f32 %v3209, %v3398
        %v3415 = vadd.f32 %v3399, %v3400
        %v3416 = vadd.f32 %v3415, %v3401
        %v3417 = vadd.f32 %v3416, %v3402
        %v3418 = vadd.f32 %v3417, %v3403
        %v3419 = vadd.f32 %v3418, %v3404
        %v3420 = vadd.f32 %v3419, %v3405
        %v3421 = vadd.f32 %v3420, %v3406
        %v3422 = vadd.f32 %v3421, %v3407
        %v3423 = vadd.f32 %v3422, %v3408
        %v3424 = vadd.f32 %v3423, %v3409
        %v3425 = vadd.f32 %v3424, %v3410
        %v3426 = vadd.f32 %v3425, %v3411
        %v3427 = vadd.f32 %v3426, %v3412
        %v3428 = vadd.f32 %v3427, %v3413
        %v3429 = vadd.f32 %v3428, %v3414
        %v3430 = vrot.slane %v3429, 4
        %v3431 = vadd.f32 %v3429, %v3430
        %v3432 = vrot.slane %v3431, 2
        %v3433 = vadd.f32 %v3431, %v3432
        %v3434 = vrot.slane %v3433, 1
        %v3435 = vadd.f32 %v3433, %v3434
        %v3436 = vmul.f32 %v3435, 0.083333336
        %v3437 = vmul.f32 %v3144, %v3436
        %vm3438 = vcmask 1040384
        %v3439 = vsel %vm3438, %v3437, 0.0
        %3440 = vadd.xlane.f32.xlu0 %v3439
        %v3441 = vpop.xlane.xlu0 %3440
        %v3442 = vsub.f32 %v3441, %v3441
        %v3443 = vmul.f32 %v3442, 1.442695
        %v3444 = vpow.pop %v3443
        %v3445 = vrcp.pop %v3444
        %v3446 = vmul.f32 %v3444, %v3445
        %v3447 = vlaneseq
        %v3448 = vshrl.u32 %v3447, 7
        %v3449 = vsub.s32 0, %v3448
        %v3450 = vrot.slane %v3446, %v3449
        %v3451 = vmul.f32 %v3450, %v3210
        %v3452 = vmul.f32 %v3450, %v3211
        %v3453 = vmul.f32 %v3450, %v3212
        %v3454 = vmul.f32 %v3450, %v3213
        %v3455 = vmul.f32 %v3450, %v3214
        %v3456 = vmul.f32 %v3450, %v3215
        %v3457 = vmul.f32 %v3450, %v3216
        %v3458 = vmul.f32 %v3450, %v3217
        %v3459 = vmul.f32 %v3450, %v3218
        %v3460 = vmul.f32 %v3450, %v3219
        %v3461 = vmul.f32 %v3450, %v3220
        %v3462 = vmul.f32 %v3450, %v3221
        %v3463 = vmul.f32 %v3450, %v3222
        %v3464 = vmul.f32 %v3450, %v3223
        %v3465 = vmul.f32 %v3450, %v3224
        %v3466 = vmul.f32 %v3450, %v3225
        %v3467 = vmax.f32 %v3451, 0.0
        %v3468 = vmax.f32 %v3452, 0.0
        %v3469 = vmax.f32 %v3453, 0.0
        %v3470 = vmax.f32 %v3454, 0.0
        %v3471 = vmax.f32 %v3455, 0.0
        %v3472 = vmax.f32 %v3456, 0.0
        %v3473 = vmax.f32 %v3457, 0.0
        %v3474 = vmax.f32 %v3458, 0.0
        %v3475 = vmax.f32 %v3459, 0.0
        %v3476 = vmax.f32 %v3460, 0.0
        %v3477 = vmax.f32 %v3461, 0.0
        %v3478 = vmax.f32 %v3462, 0.0
        %v3479 = vmax.f32 %v3463, 0.0
        %v3480 = vmax.f32 %v3464, 0.0
        %v3481 = vmax.f32 %v3465, 0.0
        %v3482 = vmax.f32 %v3466, 0.0
        %p3483 = scmp.lt.s32.totalorder %s33, 1
        // Predicated region
        $region97: #{tpu_custom_call.1} parent=59 // pred_check
          %p3484 = pneg %p3483
        $region98: #{tpu_custom_call.1} parent=59 // pred_check_branch
          %3486 = sbr.rel (%p3484) target = $region100
        $region99: #{tpu_custom_call.1} parent=59 // pred_region
          %v3487 = vpack.c.bf16 %v3468, %v3467
          %v3488 = vpack.c.bf16 %v3470, %v3469
          %v3489 = vpack.c.bf16 %v3472, %v3471
          %v3490 = vpack.c.bf16 %v3474, %v3473
          %v3491 = vpack.c.bf16 %v3476, %v3475
          %v3492 = vpack.c.bf16 %v3478, %v3477
          %v3493 = vpack.c.bf16 %v3480, %v3479
          %v3494 = vpack.c.bf16 %v3482, %v3481
          %3495 = vst [vmem:[#allocation2] sm:$0xff] %v3487
          %3496 = vst [vmem:[#allocation2 + $0x8] sm:$0xff] %v3488
          %3497 = vst [vmem:[#allocation2 + $0x10] sm:$0xff] %v3489
          %3498 = vst [vmem:[#allocation2 + $0x18] sm:$0xff] %v3490
          %3499 = vst [vmem:[#allocation2 + $0x20] sm:$0xff] %v3491
          %3500 = vst [vmem:[#allocation2 + $0x28] sm:$0xff] %v3492
          %3501 = vst [vmem:[#allocation2 + $0x30] sm:$0xff] %v3493
          %3502 = vst [vmem:[#allocation2 + $0x38] sm:$0xff] %v3494
        $region100: #{tpu_custom_call.1} parent=59 // pred_fallthru
          _
        %p3503 = scmp.eq.s32.totalorder %s33, 1
        // Predicated region
        $region101: #{tpu_custom_call.1} parent=59 // pred_check
          %p3504 = pneg %p3503
        $region102: #{tpu_custom_call.1} parent=59 // pred_check_branch
          %3506 = sbr.rel (%p3504) target = $region104
        $region103: #{tpu_custom_call.1} parent=59 // pred_region
          %3507 = vst [vmem:[#allocation21] sm:$0xff] %v3467
          %3508 = vst [vmem:[#allocation21 + $0x8] sm:$0xff] %v3468
          %3509 = vst [vmem:[#allocation21 + $0x10] sm:$0xff] %v3469
          %3510 = vst [vmem:[#allocation21 + $0x18] sm:$0xff] %v3470
          %3511 = vst [vmem:[#allocation21 + $0x20] sm:$0xff] %v3471
          %3512 = vst [vmem:[#allocation21 + $0x28] sm:$0xff] %v3472
          %3513 = vst [vmem:[#allocation21 + $0x30] sm:$0xff] %v3473
          %3514 = vst [vmem:[#allocation21 + $0x38] sm:$0xff] %v3474
          %3515 = vst [vmem:[#allocation21 + $0x40] sm:$0xff] %v3475
          %3516 = vst [vmem:[#allocation21 + $0x48] sm:$0xff] %v3476
          %3517 = vst [vmem:[#allocation21 + $0x50] sm:$0xff] %v3477
          %3518 = vst [vmem:[#allocation21 + $0x58] sm:$0xff] %v3478
          %3519 = vst [vmem:[#allocation21 + $0x60] sm:$0xff] %v3479
          %3520 = vst [vmem:[#allocation21 + $0x68] sm:$0xff] %v3480
          %3521 = vst [vmem:[#allocation21 + $0x70] sm:$0xff] %v3481
          %3522 = vst [vmem:[#allocation21 + $0x78] sm:$0xff] %v3482
        $region104: #{tpu_custom_call.1} parent=59 // pred_fallthru
          _
        %vm3523 = vcmp.lt.s32.totalorder %v3146, 16
        %vm3524 = vcmp.lt.s32.totalorder %v3147, 16
        %vm3525 = vcmp.lt.s32.totalorder %v3148, 16
        %vm3526 = vcmp.lt.s32.totalorder %v3149, 16
        %vm3527 = vcmp.lt.s32.totalorder %v3150, 16
        %vm3528 = vcmp.lt.s32.totalorder %v3151, 16
        %vm3529 = vcmp.lt.s32.totalorder %v3152, 16
        %vm3530 = vcmp.lt.s32.totalorder %v3153, 16
        %vm3531 = vcmp.lt.s32.totalorder %v3154, 16
        %vm3532 = vcmp.lt.s32.totalorder %v3155, 16
        %vm3533 = vcmp.lt.s32.totalorder %v3156, 16
        %vm3534 = vcmp.lt.s32.totalorder %v3157, 16
        %vm3535 = vcmp.lt.s32.totalorder %v3158, 16
        %vm3536 = vcmp.lt.s32.totalorder %v3159, 16
        %vm3537 = vcmp.lt.s32.totalorder %v3160, 16
        %vm3538 = vcmp.lt.s32.totalorder %v3161, 16
        %v3539 = vsel %vm3523, 1, 0
        %v3540 = vsel %vm3524, 1, 0
        %v3541 = vsel %vm3525, 1, 0
        %v3542 = vsel %vm3526, 1, 0
        %v3543 = vsel %vm3527, 1, 0
        %v3544 = vsel %vm3528, 1, 0
        %v3545 = vsel %vm3529, 1, 0
        %v3546 = vsel %vm3530, 1, 0
        %v3547 = vsel %vm3531, 1, 0
        %v3548 = vsel %vm3532, 1, 0
        %v3549 = vsel %vm3533, 1, 0
        %v3550 = vsel %vm3534, 1, 0
        %v3551 = vsel %vm3535, 1, 0
        %v3552 = vsel %vm3536, 1, 0
        %v3553 = vsel %vm3537, 1, 0
        %v3554 = vsel %vm3538, 1, 0
        %v3555 = vcvt.s32.f32 %v3539
        %v3556 = vcvt.s32.f32 %v3540
        %v3557 = vcvt.s32.f32 %v3541
        %v3558 = vcvt.s32.f32 %v3542
        %v3559 = vcvt.s32.f32 %v3543
        %v3560 = vcvt.s32.f32 %v3544
        %v3561 = vcvt.s32.f32 %v3545
        %v3562 = vcvt.s32.f32 %v3546
        %v3563 = vcvt.s32.f32 %v3547
        %v3564 = vcvt.s32.f32 %v3548
        %v3565 = vcvt.s32.f32 %v3549
        %v3566 = vcvt.s32.f32 %v3550
        %v3567 = vcvt.s32.f32 %v3551
        %v3568 = vcvt.s32.f32 %v3552
        %v3569 = vcvt.s32.f32 %v3553
        %v3570 = vcvt.s32.f32 %v3554
        %v3571 = vld [vmem:[#allocation6] sm:$0xff]
        %v3572 = vld [vmem:[#allocation6 + $0x8] sm:$0xff]
        %v3573 = vld [vmem:[#allocation6 + $0x10] sm:$0xff]
        %v3574 = vld [vmem:[#allocation6 + $0x18] sm:$0xff]
        %v3575 = vld [vmem:[#allocation6 + $0x20] sm:$0xff]
        %v3576 = vld [vmem:[#allocation6 + $0x28] sm:$0xff]
        %v3577 = vld [vmem:[#allocation6 + $0x30] sm:$0xff]
        %v3578 = vld [vmem:[#allocation6 + $0x38] sm:$0xff]
        %v3579 = vld [vmem:[#allocation6 + $0x40] sm:$0xff]
        %v3580 = vld [vmem:[#allocation6 + $0x48] sm:$0xff]
        %v3581 = vld [vmem:[#allocation6 + $0x50] sm:$0xff]
        %v3582 = vld [vmem:[#allocation6 + $0x58] sm:$0xff]
        %v3583 = vld [vmem:[#allocation6 + $0x60] sm:$0xff]
        %v3584 = vld [vmem:[#allocation6 + $0x68] sm:$0xff]
        %v3585 = vld [vmem:[#allocation6 + $0x70] sm:$0xff]
        %v3586 = vld [vmem:[#allocation6 + $0x78] sm:$0xff]
        %v3587 = vpack.c.bf16 %v3572, %v3571
        %v3588 = vpack.c.bf16 %v3574, %v3573
        %v3589 = vpack.c.bf16 %v3576, %v3575
        %v3590 = vpack.c.bf16 %v3578, %v3577
        %v3591 = vpack.c.bf16 %v3580, %v3579
        %v3592 = vpack.c.bf16 %v3582, %v3581
        %v3593 = vpack.c.bf16 %v3584, %v3583
        %v3594 = vpack.c.bf16 %v3586, %v3585
        %3595 = vmatprep.subr.bf16.mxu0 0
        %3596 = vmatpush1.bf16.msra.mxu0 %v3270
        %3597 = vmatprep.subr.bf16.mxu0 0
        %3598 = vmatpush1.bf16.msra.mxu0 %v3271
        %3599 = vmatprep.subr.bf16.mxu0 0
        %3600 = vmatpush1.bf16.msra.mxu0 %v3272
        %3601 = vmatprep.subr.bf16.mxu0 0
        %3602 = vmatpush1.bf16.msra.mxu0 %v3273
        %3603 = vmatprep.subr.bf16.mxu0 0
        %3604 = vmatpush1.bf16.msra.mxu0 %v3274
        %3605 = vmatprep.subr.bf16.mxu0 0
        %3606 = vmatpush1.bf16.msra.mxu0 %v3275
        %3607 = vmatprep.subr.bf16.mxu0 0
        %3608 = vmatpush1.bf16.msra.mxu0 %v3276
        %3609 = vmatprep.subr.bf16.mxu0 0
        %3610 = vmatpush1.bf16.msra.mxu0 %v3277
        %3611 = vmatprep.subr.bf16.mxu0 0
        %3612 = vmatpush1.bf16.msra.mxu0 0
        %3613 = vmatprep.subr.bf16.mxu0 0
        %3614 = vmatpush1.bf16.msra.mxu0 0
        %3615 = vmatprep.subr.bf16.mxu0 0
        %3616 = vmatpush1.bf16.msra.mxu0 0
        %3617 = vmatprep.subr.bf16.mxu0 0
        %3618 = vmatpush1.bf16.msra.mxu0 0
        %3619 = vmatprep.subr.bf16.mxu0 0
        %3620 = vmatpush1.bf16.msra.mxu0 0
        %3621 = vmatprep.subr.bf16.mxu0 0
        %3622 = vmatpush1.bf16.msra.mxu0 0
        %3623 = vmatprep.subr.bf16.mxu0 0
        %3624 = vmatpush1.bf16.msra.mxu0 0
        %3625 = vmatprep.subr.bf16.mxu0 0
        %3626 = vmatpush1.bf16.msra.mxu0 0
        %3627 = vmatprep.mubr.bf16.mxu0 0
        %3628 = vmatmul.mubr.bf16.gmra.mrb[0].mxu0 %v3587
        %v3629 = vpop.f32.mrb[0].mxu0
        %v3630 = vadd.f32 %v3237, %v3629
        %v3631 = vpop.f32.mrb[0].mxu0
        %v3632 = vpop.f32.mrb[0].mxu0
        %v3633 = vadd.f32 %v3237, %v3632
        %v3634 = vpop.f32.mrb[0].mxu0
        %3635 = vmatprep.mubr.bf16.mxu0 0
        %3636 = vmatmul.mubr.bf16.gmra.mrb[0].mxu0 %v3588
        %v3637 = vpop.f32.mrb[0].mxu0
        %v3638 = vadd.f32 %v3237, %v3637
        %v3639 = vpop.f32.mrb[0].mxu0
        %v3640 = vpop.f32.mrb[0].mxu0
        %v3641 = vadd.f32 %v3237, %v3640
        %v3642 = vpop.f32.mrb[0].mxu0
        %3643 = vmatprep.mubr.bf16.mxu0 0
        %3644 = vmatmul.mubr.bf16.gmra.mrb[0].mxu0 %v3589
        %v3645 = vpop.f32.mrb[0].mxu0
        %v3646 = vadd.f32 %v3237, %v3645
        %v3647 = vpop.f32.mrb[0].mxu0
        %v3648 = vpop.f32.mrb[0].mxu0
        %v3649 = vadd.f32 %v3237, %v3648
        %v3650 = vpop.f32.mrb[0].mxu0
        %3651 = vmatprep.mubr.bf16.mxu0 0
        %3652 = vmatmul.mubr.bf16.gmra.mrb[0].mxu0 %v3590
        %v3653 = vpop.f32.mrb[0].mxu0
        %v3654 = vadd.f32 %v3237, %v3653
        %v3655 = vpop.f32.mrb[0].mxu0
        %v3656 = vpop.f32.mrb[0].mxu0
        %v3657 = vadd.f32 %v3237, %v3656
        %v3658 = vpop.f32.mrb[0].mxu0
        %3659 = vmatprep.mubr.bf16.mxu0 0
        %3660 = vmatmul.mubr.bf16.gmra.mrb[0].mxu0 %v3591
        %v3661 = vpop.f32.mrb[0].mxu0
        %v3662 = vadd.f32 %v3237, %v3661
        %v3663 = vpop.f32.mrb[0].mxu0
        %v3664 = vpop.f32.mrb[0].mxu0
        %v3665 = vadd.f32 %v3237, %v3664
        %v3666 = vpop.f32.mrb[0].mxu0
        %3667 = vmatprep.mubr.bf16.mxu0 0
        %3668 = vmatmul.mubr.bf16.gmra.mrb[0].mxu0 %v3592
        %v3669 = vpop.f32.mrb[0].mxu0
        %v3670 = vadd.f32 %v3237, %v3669
        %v3671 = vpop.f32.mrb[0].mxu0
        %v3672 = vpop.f32.mrb[0].mxu0
        %v3673 = vadd.f32 %v3237, %v3672
        %v3674 = vpop.f32.mrb[0].mxu0
        %3675 = vmatprep.mubr.bf16.mxu0 0
        %3676 = vmatmul.mubr.bf16.gmra.mrb[0].mxu0 %v3593
        %v3677 = vpop.f32.mrb[0].mxu0
        %v3678 = vadd.f32 %v3237, %v3677
        %v3679 = vpop.f32.mrb[0].mxu0
        %v3680 = vpop.f32.mrb[0].mxu0
        %v3681 = vadd.f32 %v3237, %v3680
        %v3682 = vpop.f32.mrb[0].mxu0
        %3683 = vmatprep.mubr.bf16.mxu0 0
        %3684 = vmatmul.mubr.bf16.gmra.mrb[0].mxu0 %v3594
        %v3685 = vpop.f32.mrb[0].mxu0
        %v3686 = vadd.f32 %v3237, %v3685
        %v3687 = vpop.f32.mrb[0].mxu0
        %v3688 = vpop.f32.mrb[0].mxu0
        %v3689 = vadd.f32 %v3237, %v3688
        %v3690 = vpop.f32.mrb[0].mxu0
        %3691 = vdwg.mxu0
        %v3692 = vtanh.pop %v3630
        %v3693 = vtanh.pop %v3633
        %v3694 = vtanh.pop %v3638
        %v3695 = vtanh.pop %v3641
        %v3696 = vtanh.pop %v3646
        %v3697 = vtanh.pop %v3649
        %v3698 = vtanh.pop %v3654
        %v3699 = vtanh.pop %v3657
        %v3700 = vtanh.pop %v3662
        %v3701 = vtanh.pop %v3665
        %v3702 = vtanh.pop %v3670
        %v3703 = vtanh.pop %v3673
        %v3704 = vtanh.pop %v3678
        %v3705 = vtanh.pop %v3681
        %v3706 = vtanh.pop %v3686
        %v3707 = vtanh.pop %v3689
        %v3708 = vmul.f32 %v3555, %v3692
        %v3709 = vmul.f32 %v3556, %v3693
        %v3710 = vmul.f32 %v3557, %v3694
        %v3711 = vmul.f32 %v3558, %v3695
        %v3712 = vmul.f32 %v3559, %v3696
        %v3713 = vmul.f32 %v3560, %v3697
        %v3714 = vmul.f32 %v3561, %v3698
        %v3715 = vmul.f32 %v3562, %v3699
        %v3716 = vmul.f32 %v3563, %v3700
        %v3717 = vmul.f32 %v3564, %v3701
        %v3718 = vmul.f32 %v3565, %v3702
        %v3719 = vmul.f32 %v3566, %v3703
        %v3720 = vmul.f32 %v3567, %v3704
        %v3721 = vmul.f32 %v3568, %v3705
        %v3722 = vmul.f32 %v3569, %v3706
        %v3723 = vmul.f32 %v3570, %v3707
        %v3724 = vadd.f32 %v3708, %v3709
        %v3725 = vadd.f32 %v3724, %v3710
        %v3726 = vadd.f32 %v3725, %v3711
        %v3727 = vadd.f32 %v3726, %v3712
        %v3728 = vadd.f32 %v3727, %v3713
        %v3729 = vadd.f32 %v3728, %v3714
        %v3730 = vadd.f32 %v3729, %v3715
        %v3731 = vadd.f32 %v3730, %v3716
        %v3732 = vadd.f32 %v3731, %v3717
        %v3733 = vadd.f32 %v3732, %v3718
        %v3734 = vadd.f32 %v3733, %v3719
        %v3735 = vadd.f32 %v3734, %v3720
        %v3736 = vadd.f32 %v3735, %v3721
        %v3737 = vadd.f32 %v3736, %v3722
        %v3738 = vadd.f32 %v3737, %v3723
        %v3739 = vrot.slane %v3738, 4
        %v3740 = vadd.f32 %v3738, %v3739
        %v3741 = vrot.slane %v3740, 2
        %v3742 = vadd.f32 %v3740, %v3741
        %v3743 = vrot.slane %v3742, 1
        %v3744 = vadd.f32 %v3742, %v3743
        %v3745 = vmul.f32 %v3744, 0.0625
        %v3746 = vmul.f32 %v3144, %v3745
        %v3747 = vsel %vm3438, %v3746, 0.0
        %3748 = vadd.xlane.f32.xlu0 %v3747
        %v3749 = vpop.xlane.xlu0 %3748
        %v3750 = vld [vmem:[%s3110] sm:$0xff]
        %v3751 = vld [vmem:[%s3110 + $0x8] sm:$0xff]
        %v3752 = vld [vmem:[%s3110 + $0x10] sm:$0xff]
        %v3753 = vld [vmem:[%s3110 + $0x18] sm:$0xff]
        %v3754 = vld [vmem:[%s3110 + $0x20] sm:$0xff]
        %v3755 = vld [vmem:[%s3110 + $0x28] sm:$0xff]
        %v3756 = vld [vmem:[%s3110 + $0x30] sm:$0xff]
        %v3757 = vld [vmem:[%s3110 + $0x38] sm:$0xff]
        %v3758 = vld [vmem:[%s3110 + $0x40] sm:$0xff]
        %v3759 = vld [vmem:[%s3110 + $0x48] sm:$0xff]
        %v3760 = vld [vmem:[%s3110 + $0x50] sm:$0xff]
        %v3761 = vld [vmem:[%s3110 + $0x58] sm:$0xff]
        %v3762 = vld [vmem:[%s3110 + $0x60] sm:$0xff]
        %v3763 = vld [vmem:[%s3110 + $0x68] sm:$0xff]
        %v3764 = vld [vmem:[%s3110 + $0x70] sm:$0xff]
        %v3765 = vld [vmem:[%s3110 + $0x78] sm:$0xff]
        %v3766 = vpack.c.bf16 %v3751, %v3750
        %v3767 = vpack.c.bf16 %v3753, %v3752
        %v3768 = vpack.c.bf16 %v3755, %v3754
        %v3769 = vpack.c.bf16 %v3757, %v3756
        %v3770 = vpack.c.bf16 %v3759, %v3758
        %v3771 = vpack.c.bf16 %v3761, %v3760
        %v3772 = vpack.c.bf16 %v3763, %v3762
        %v3773 = vpack.c.bf16 %v3765, %v3764
        %3774 = vmatprep.subr.bf16.mxu0 0
        %3775 = vmatpush1.bf16.msra.mxu0 %v3270
        %3776 = vmatprep.subr.bf16.mxu0 0
        %3777 = vmatpush1.bf16.msra.mxu0 %v3271
        %3778 = vmatprep.subr.bf16.mxu0 0
        %3779 = vmatpush1.bf16.msra.mxu0 %v3272
        %3780 = vmatprep.subr.bf16.mxu0 0
        %3781 = vmatpush1.bf16.msra.mxu0 %v3273
        %3782 = vmatprep.subr.bf16.mxu0 0
        %3783 = vmatpush1.bf16.msra.mxu0 %v3274
        %3784 = vmatprep.subr.bf16.mxu0 0
        %3785 = vmatpush1.bf16.msra.mxu0 %v3275
        %3786 = vmatprep.subr.bf16.mxu0 0
        %3787 = vmatpush1.bf16.msra.mxu0 %v3276
        %3788 = vmatprep.subr.bf16.mxu0 0
        %3789 = vmatpush1.bf16.msra.mxu0 %v3277
        %3790 = vmatprep.subr.bf16.mxu0 0
        %3791 = vmatpush1.bf16.msra.mxu0 0
        %3792 = vmatprep.subr.bf16.mxu0 0
        %3793 = vmatpush1.bf16.msra.mxu0 0
        %3794 = vmatprep.subr.bf16.mxu0 0
        %3795 = vmatpush1.bf16.msra.mxu0 0
        %3796 = vmatprep.subr.bf16.mxu0 0
        %3797 = vmatpush1.bf16.msra.mxu0 0
        %3798 = vmatprep.subr.bf16.mxu0 0
        %3799 = vmatpush1.bf16.msra.mxu0 0
        %3800 = vmatprep.subr.bf16.mxu0 0
        %3801 = vmatpush1.bf16.msra.mxu0 0
        %3802 = vmatprep.subr.bf16.mxu0 0
        %3803 = vmatpush1.bf16.msra.mxu0 0
        %3804 = vmatprep.subr.bf16.mxu0 0
        %3805 = vmatpush1.bf16.msra.mxu0 0
        %3806 = vmatprep.mubr.bf16.mxu0 0
        %3807 = vmatmul.mubr.bf16.gmra.mrb[0].mxu0 %v3766
        %v3808 = vpop.f32.mrb[0].mxu0
        %v3809 = vadd.f32 %v3237, %v3808
        %v3810 = vpop.f32.mrb[0].mxu0
        %v3811 = vpop.f32.mrb[0].mxu0
        %v3812 = vadd.f32 %v3237, %v3811
        %v3813 = vpop.f32.mrb[0].mxu0
        %3814 = vmatprep.mubr.bf16.mxu0 0
        %3815 = vmatmul.mubr.bf16.gmra.mrb[0].mxu0 %v3767
        %v3816 = vpop.f32.mrb[0].mxu0
        %v3817 = vadd.f32 %v3237, %v3816
        %v3818 = vpop.f32.mrb[0].mxu0
        %v3819 = vpop.f32.mrb[0].mxu0
        %v3820 = vadd.f32 %v3237, %v3819
        %v3821 = vpop.f32.mrb[0].mxu0
        %3822 = vmatprep.mubr.bf16.mxu0 0
        %3823 = vmatmul.mubr.bf16.gmra.mrb[0].mxu0 %v3768
        %v3824 = vpop.f32.mrb[0].mxu0
        %v3825 = vadd.f32 %v3237, %v3824
        %v3826 = vpop.f32.mrb[0].mxu0
        %v3827 = vpop.f32.mrb[0].mxu0
        %v3828 = vadd.f32 %v3237, %v3827
        %v3829 = vpop.f32.mrb[0].mxu0
        %3830 = vmatprep.mubr.bf16.mxu0 0
        %3831 = vmatmul.mubr.bf16.gmra.mrb[0].mxu0 %v3769
        %v3832 = vpop.f32.mrb[0].mxu0
        %v3833 = vadd.f32 %v3237, %v3832
        %v3834 = vpop.f32.mrb[0].mxu0
        %v3835 = vpop.f32.mrb[0].mxu0
        %v3836 = vadd.f32 %v3237, %v3835
        %v3837 = vpop.f32.mrb[0].mxu0
        %3838 = vmatprep.mubr.bf16.mxu0 0
        %3839 = vmatmul.mubr.bf16.gmra.mrb[0].mxu0 %v3770
        %v3840 = vpop.f32.mrb[0].mxu0
        %v3841 = vadd.f32 %v3237, %v3840
        %v3842 = vpop.f32.mrb[0].mxu0
        %v3843 = vpop.f32.mrb[0].mxu0
        %v3844 = vadd.f32 %v3237, %v3843
        %v3845 = vpop.f32.mrb[0].mxu0
        %3846 = vmatprep.mubr.bf16.mxu0 0
        %3847 = vmatmul.mubr.bf16.gmra.mrb[0].mxu0 %v3771
        %v3848 = vpop.f32.mrb[0].mxu0
        %v3849 = vadd.f32 %v3237, %v3848
        %v3850 = vpop.f32.mrb[0].mxu0
        %v3851 = vpop.f32.mrb[0].mxu0
        %v3852 = vadd.f32 %v3237, %v3851
        %v3853 = vpop.f32.mrb[0].mxu0
        %3854 = vmatprep.mubr.bf16.mxu0 0
        %3855 = vmatmul.mubr.bf16.gmra.mrb[0].mxu0 %v3772
        %v3856 = vpop.f32.mrb[0].mxu0
        %v3857 = vadd.f32 %v3237, %v3856
        %v3858 = vpop.f32.mrb[0].mxu0
        %v3859 = vpop.f32.mrb[0].mxu0
        %v3860 = vadd.f32 %v3237, %v3859
        %v3861 = vpop.f32.mrb[0].mxu0
        %3862 = vmatprep.mubr.bf16.mxu0 0
        %3863 = vmatmul.mubr.bf16.gmra.mrb[0].mxu0 %v3773
        %v3864 = vpop.f32.mrb[0].mxu0
        %v3865 = vadd.f32 %v3237, %v3864
        %v3866 = vpop.f32.mrb[0].mxu0
        %v3867 = vpop.f32.mrb[0].mxu0
        %v3868 = vadd.f32 %v3237, %v3867
        %v3869 = vpop.f32.mrb[0].mxu0
        %3870 = vdwg.mxu0
        %v3871 = vtanh.pop %v3809
        %v3872 = vtanh.pop %v3812
        %v3873 = vtanh.pop %v3817
        %v3874 = vtanh.pop %v3820
        %v3875 = vtanh.pop %v3825
        %v3876 = vtanh.pop %v3828
        %v3877 = vtanh.pop %v3833
        %v3878 = vtanh.pop %v3836
        %v3879 = vtanh.pop %v3841
        %v3880 = vtanh.pop %v3844
        %v3881 = vtanh.pop %v3849
        %v3882 = vtanh.pop %v3852
        %v3883 = vtanh.pop %v3857
        %v3884 = vtanh.pop %v3860
        %v3885 = vtanh.pop %v3865
        %v3886 = vtanh.pop %v3868
        %v3887 = vmul.f32 %v3555, %v3871
        %v3888 = vmul.f32 %v3556, %v3872
        %v3889 = vmul.f32 %v3557, %v3873
        %v3890 = vmul.f32 %v3558, %v3874
        %v3891 = vmul.f32 %v3559, %v3875
        %v3892 = vmul.f32 %v3560, %v3876
        %v3893 = vmul.f32 %v3561, %v3877
        %v3894 = vmul.f32 %v3562, %v3878
        %v3895 = vmul.f32 %v3563, %v3879
        %v3896 = vmul.f32 %v3564, %v3880
        %v3897 = vmul.f32 %v3565, %v3881
        %v3898 = vmul.f32 %v3566, %v3882
        %v3899 = vmul.f32 %v3567, %v3883
        %v3900 = vmul.f32 %v3568, %v3884
        %v3901 = vmul.f32 %v3569, %v3885
        %v3902 = vmul.f32 %v3570, %v3886
        %v3903 = vadd.f32 %v3887, %v3888
        %v3904 = vadd.f32 %v3903, %v3889
        %v3905 = vadd.f32 %v3904, %v3890
        %v3906 = vadd.f32 %v3905, %v3891
        %v3907 = vadd.f32 %v3906, %v3892
        %v3908 = vadd.f32 %v3907, %v3893
        %v3909 = vadd.f32 %v3908, %v3894
        %v3910 = vadd.f32 %v3909, %v3895
        %v3911 = vadd.f32 %v3910, %v3896
        %v3912 = vadd.f32 %v3911, %v3897
        %v3913 = vadd.f32 %v3912, %v3898
        %v3914 = vadd.f32 %v3913, %v3899
        %v3915 = vadd.f32 %v3914, %v3900
        %v3916 = vadd.f32 %v3915, %v3901
        %v3917 = vadd.f32 %v3916, %v3902
        %v3918 = vrot.slane %v3917, 4
        %v3919 = vadd.f32 %v3917, %v3918
        %v3920 = vrot.slane %v3919, 2
        %v3921 = vadd.f32 %v3919, %v3920
        %v3922 = vrot.slane %v3921, 1
        %v3923 = vadd.f32 %v3921, %v3922
        %v3924 = vmul.f32 %v3923, 0.0625
        %v3925 = vmul.f32 %v3144, %v3924
        %v3926 = vsel %vm3438, %v3925, 0.0
        %3927 = vadd.xlane.f32.xlu0 %v3926
        %v3928 = vpop.xlane.xlu0 %3927
        %v3929 = vmax.f32 %v3749, %v3928
        %v3930 = vsub.f32 %v3749, %v3929
        %v3931 = vmul.f32 %v3930, 1.442695
        %v3932 = vpow.pop %v3931
        %v3933 = vsub.f32 %v3928, %v3929
        %v3934 = vmul.f32 %v3933, 1.442695
        %v3935 = vpow.pop %v3934
        %v3936 = vadd.f32 %v3932, %v3935
        %v3937 = vrcp.pop %v3936
        %v3938 = vmul.f32 %v3932, %v3937
        %v3939 = vlaneseq
        %v3940 = vshrl.u32 %v3939, 7
        %v3941 = vsub.s32 0, %v3940
        %v3942 = vrot.slane %v3938, %v3941
        %v3943 = vmul.f32 %v3942, %v3571
        %v3944 = vmul.f32 %v3942, %v3572
        %v3945 = vmul.f32 %v3942, %v3573
        %v3946 = vmul.f32 %v3942, %v3574
        %v3947 = vmul.f32 %v3942, %v3575
        %v3948 = vmul.f32 %v3942, %v3576
        %v3949 = vmul.f32 %v3942, %v3577
        %v3950 = vmul.f32 %v3942, %v3578
        %v3951 = vmul.f32 %v3942, %v3579
        %v3952 = vmul.f32 %v3942, %v3580
        %v3953 = vmul.f32 %v3942, %v3581
        %v3954 = vmul.f32 %v3942, %v3582
        %v3955 = vmul.f32 %v3942, %v3583
        %v3956 = vmul.f32 %v3942, %v3584
        %v3957 = vmul.f32 %v3942, %v3585
        %v3958 = vmul.f32 %v3942, %v3586
        %v3959 = vmul.f32 %v3935, %v3937
        %v3960 = vlaneseq
        %v3961 = vshrl.u32 %v3960, 7
        %v3962 = vsub.s32 0, %v3961
        %v3963 = vrot.slane %v3959, %v3962
        %v3964 = vmul.f32 %v3963, %v3750
        %v3965 = vmul.f32 %v3963, %v3751
        %v3966 = vmul.f32 %v3963, %v3752
        %v3967 = vmul.f32 %v3963, %v3753
        %v3968 = vmul.f32 %v3963, %v3754
        %v3969 = vmul.f32 %v3963, %v3755
        %v3970 = vmul.f32 %v3963, %v3756
        %v3971 = vmul.f32 %v3963, %v3757
        %v3972 = vmul.f32 %v3963, %v3758
        %v3973 = vmul.f32 %v3963, %v3759
        %v3974 = vmul.f32 %v3963, %v3760
        %v3975 = vmul.f32 %v3963, %v3761
        %v3976 = vmul.f32 %v3963, %v3762
        %v3977 = vmul.f32 %v3963, %v3763
        %v3978 = vmul.f32 %v3963, %v3764
        %v3979 = vmul.f32 %v3963, %v3765
        %v3980 = vadd.f32 %v3943, %v3964
        %v3981 = vadd.f32 %v3944, %v3965
        %v3982 = vadd.f32 %v3945, %v3966
        %v3983 = vadd.f32 %v3946, %v3967
        %v3984 = vadd.f32 %v3947, %v3968
        %v3985 = vadd.f32 %v3948, %v3969
        %v3986 = vadd.f32 %v3949, %v3970
        %v3987 = vadd.f32 %v3950, %v3971
        %v3988 = vadd.f32 %v3951, %v3972
        %v3989 = vadd.f32 %v3952, %v3973
        %v3990 = vadd.f32 %v3953, %v3974
        %v3991 = vadd.f32 %v3954, %v3975
        %v3992 = vadd.f32 %v3955, %v3976
        %v3993 = vadd.f32 %v3956, %v3977
        %v3994 = vadd.f32 %v3957, %v3978
        %v3995 = vadd.f32 %v3958, %v3979
        %v3996 = vmax.f32 %v3980, 0.0
        %v3997 = vmax.f32 %v3981, 0.0
        %v3998 = vmax.f32 %v3982, 0.0
        %v3999 = vmax.f32 %v3983, 0.0
        %v4000 = vmax.f32 %v3984, 0.0
        %v4001 = vmax.f32 %v3985, 0.0
        %v4002 = vmax.f32 %v3986, 0.0
        %v4003 = vmax.f32 %v3987, 0.0
        %v4004 = vmax.f32 %v3988, 0.0
        %v4005 = vmax.f32 %v3989, 0.0
        %v4006 = vmax.f32 %v3990, 0.0
        %v4007 = vmax.f32 %v3991, 0.0
        %v4008 = vmax.f32 %v3992, 0.0
        %v4009 = vmax.f32 %v3993, 0.0
        %v4010 = vmax.f32 %v3994, 0.0
        %v4011 = vmax.f32 %v3995, 0.0
        // Predicated region
        $region105: #{tpu_custom_call.1} parent=59 // pred_check
          %p4012 = pneg %p3483
        $region106: #{tpu_custom_call.1} parent=59 // pred_check_branch
          %4014 = sbr.rel (%p4012) target = $region108
        $region107: #{tpu_custom_call.1} parent=59 // pred_region
          %v4015 = vpack.c.bf16 %v3997, %v3996
          %v4016 = vpack.c.bf16 %v3999, %v3998
          %v4017 = vpack.c.bf16 %v4001, %v4000
          %v4018 = vpack.c.bf16 %v4003, %v4002
          %v4019 = vpack.c.bf16 %v4005, %v4004
          %v4020 = vpack.c.bf16 %v4007, %v4006
          %v4021 = vpack.c.bf16 %v4009, %v4008
          %v4022 = vpack.c.bf16 %v4011, %v4010
          %4023 = vst [vmem:[#allocation2 + $0x40] sm:$0xff] %v4015
          %4024 = vst [vmem:[#allocation2 + $0x48] sm:$0xff] %v4016
          %4025 = vst [vmem:[#allocation2 + $0x50] sm:$0xff] %v4017
          %4026 = vst [vmem:[#allocation2 + $0x58] sm:$0xff] %v4018
          %4027 = vst [vmem:[#allocation2 + $0x60] sm:$0xff] %v4019
          %4028 = vst [vmem:[#allocation2 + $0x68] sm:$0xff] %v4020
          %4029 = vst [vmem:[#allocation2 + $0x70] sm:$0xff] %v4021
          %4030 = vst [vmem:[#allocation2 + $0x78] sm:$0xff] %v4022
        $region108: #{tpu_custom_call.1} parent=59 // pred_fallthru
          _
        // Predicated region
        $region109: #{tpu_custom_call.1} parent=59 // pred_check
          %p4031 = pneg %p3503
        $region110: #{tpu_custom_call.1} parent=59 // pred_check_branch
          %4033 = sbr.rel (%p4031) target = $region112
        $region111: #{tpu_custom_call.1} parent=59 // pred_region
          %4034 = vst [vmem:[#allocation21 + $0x80] sm:$0xff] %v3996
          %4035 = vst [vmem:[#allocation21 + $0x88] sm:$0xff] %v3997
          %4036 = vst [vmem:[#allocation21 + $0x90] sm:$0xff] %v3998
          %4037 = vst [vmem:[#allocation21 + $0x98] sm:$0xff] %v3999
          %4038 = vst [vmem:[#allocation21 + $0xa0] sm:$0xff] %v4000
          %4039 = vst [vmem:[#allocation21 + $0xa8] sm:$0xff] %v4001
          %4040 = vst [vmem:[#allocation21 + $0xb0] sm:$0xff] %v4002
          %4041 = vst [vmem:[#allocation21 + $0xb8] sm:$0xff] %v4003
          %4042 = vst [vmem:[#allocation21 + $0xc0] sm:$0xff] %v4004
          %4043 = vst [vmem:[#allocation21 + $0xc8] sm:$0xff] %v4005
          %4044 = vst [vmem:[#allocation21 + $0xd0] sm:$0xff] %v4006
          %4045 = vst [vmem:[#allocation21 + $0xd8] sm:$0xff] %v4007
          %4046 = vst [vmem:[#allocation21 + $0xe0] sm:$0xff] %v4008
          %4047 = vst [vmem:[#allocation21 + $0xe8] sm:$0xff] %v4009
          %4048 = vst [vmem:[#allocation21 + $0xf0] sm:$0xff] %v4010
          %4049 = vst [vmem:[#allocation21 + $0xf8] sm:$0xff] %v4011
        $region112: #{tpu_custom_call.1} parent=59 // pred_fallthru
          _
        // Predicated region
        $region113: #{tpu_custom_call.1} parent=59 // pred_check
          %p4050 = pneg %p286
        $region114: #{tpu_custom_call.1} parent=59 // pred_check_branch
          %4052 = sbr.rel (%p4050) target = $region116
        $region115: #{tpu_custom_call.1} parent=59 // pred_region
          %s4054 = ssub.s32 4096, 4096
          %4055 = vsyncadd [#allocation9], %s4054
          %s4056 = sshll.u32 [#allocation21], 4
          %s4057 = int_to_ptr.vmem [resolvable:$true] %s4056
          %4062 = dma.vmem_to_hbm [thread:$0]  %s4057, 4096, %s10, [#allocation9], 128, 128, 8
        $region116: #{tpu_custom_call.1} parent=59 // pred_fallthru
          _
        // Predicated region
        $region117: #{tpu_custom_call.1} parent=59 // pred_check
          %p4063 = pneg %p286
        $region118: #{tpu_custom_call.1} parent=59 // pred_check_branch
          %4065 = sbr.rel (%p4063) target = $region120
        $region119: #{tpu_custom_call.1} parent=59 // pred_region
          %4066 = dma.done [#allocation9], 4096
        $region120: #{tpu_custom_call.1} parent=59 // pred_fallthru
          _
      $region60: #{tpu_custom_call.1} parent=5 // pred_fallthru
        _
      %p4067 = scmp.le.s32.totalorder 2, %s28
      // Predicated region
      $region121: #{tpu_custom_call.1} parent=5 // pred_check
        %p4068 = pneg %p4067
      $region122: #{tpu_custom_call.1} parent=5 // pred_check_branch
        %4070 = sbr.rel (%p4068) target = $region124
      $region123: #{tpu_custom_call.1} parent=5 // pred_region
        %s4071 = ssub.s32 %s28, 2
      $region124: #{tpu_custom_call.1} parent=5 // pred_fallthru
        _
    $region6: #{tpu_custom_call.1} parent=1 // loop_footer
      %s32 = sadd.s32 1, %s28
    $region7: #{tpu_custom_call.1} parent=1 // loop_footer_branch
      %27 = sbr.rel target = $region3
    $region8: #{tpu_custom_call.1} parent=1 // loop_exit
      _
    %4072 = vsyncpa [#allocation8], 1
    %s4073 = scalar_lea.sflag [#allocation8], 1
    %4074 = vsyncpa %s4073, 1
    %4075 = vsyncpa [#allocation11], 1
    %s4076 = scalar_lea.sflag [#allocation11], 1
    %4077 = vsyncpa %s4076, 1
    %4078 = vsyncpa [#allocation14], 1
    %s4079 = scalar_lea.sflag [#allocation14], 1
    %4080 = vsyncpa %s4079, 1
    %4081 = vsyncpa [#allocation17], 1
    %4082 = vsyncpa [#allocation20], 1
    %s4083 = scalar_lea.sflag [#allocation20], 1
    %4084 = vsyncpa %s4083, 1
    %4085 = vsyncpa [#allocation9], 1
    %s4086 = scalar_lea.sflag [#allocation9], 1
    %4087 = vsyncpa %s4086, 1

</llo_original>
